<compile_context>
chip_gen: v5e
topology: v5e:2x2
jax: 0.10.0
libtpu: 0.0.40
codegen_flags: <defaults>
</compile_context>

<pallas_src>
import functools
import math

import numpy as np
import jax
import jax.numpy as jnp
from jax.experimental import pallas as pl
from jax.experimental.pallas import tpu as pltpu

# ---------------- static problem geometry ----------------
CP = 32                      # all channel counts (3..32) padded to 32
H = W = 16
HP, WP = H + 2, W + 2        # 1-pixel zero halo
IMG = 384                    # flat padded per-image spatial stride (>= HP*WP, multiple of 128)
KK = 9                       # 3x3 taps
EPS = 1e-5

# flat-index shift of tap (dh, dw) inside one padded image: (dh-1)*WP + (dw-1)
TAP_SHIFTS = tuple((dh - 1) * WP + (dw - 1) for dh in range(3) for dw in range(3))


# --------------------------------------------------------------------------
# Fused kernel: one grid step per conv layer; activations stay in VMEM scratch.
# --------------------------------------------------------------------------
def _fused_net_kernel(x_ref, w_ref, g_ref, b_ref, mask_ref, o_ref, act_ref, *,
                      n_layers, bn_start, n_batch, lanes, inv_count):
    # Layouts (all float32):
    #   x_ref    : (CP, lanes)        channel-major, flat halo-padded spatial on lanes
    #   w_ref    : (1, 9, CP, CP)     this layer's weights, [tap, Cout, Cin]
    #   g_ref/b_ref : (2, CP, 1)      BatchNorm gamma / beta (zero-padded channels)
    #   mask_ref : (1, lanes)         1.0 at interior (non-halo) pixels
    #   o_ref    : (CP, N*H*W)        interior-only, lane-dense output (written at last step)
    #   act_ref  : (CP, lanes)        VMEM-resident running activation (scratch)
    l = pl.program_id(0)

    # step 0: load the input slab into the resident activation buffer
    @pl.when(l == 0)
    def _():
        act_ref[...] = x_ref[...]

    # Sequential_2 / Sequential_3 apply ReLU *before* their conv
    @pl.when(l >= bn_start)
    def _():
        act_ref[...] = jnp.maximum(act_ref[...], 0.0)

    a = act_ref[...]
    # hoisted broadcast, reused by every epilogue below (no per-use re-broadcast)
    mask_b = jnp.broadcast_to(mask_ref[...], (CP, lanes))

    # 3x3 conv = 9 per-tap (CP,CP)@(CP,lanes) MXU matmuls with f32 accumulation.
    # Taps come from XLU lane rolls of the halo-padded slab; boundary taps read
    # the zero halo, and wrapped lanes only ever land on masked outputs.
    acc = None
    for t, s in enumerate(TAP_SHIFTS):
        shifted = a if s == 0 else pltpu.roll(a, shift=(-s) % lanes, axis=1)
        part = jnp.dot(w_ref[0, t], shifted, preferred_element_type=jnp.float32)
        acc = part if acc is None else acc + part

    # plain conv layers: re-zero halo / dead lanes so the next conv reads zeros
    @pl.when(l < bn_start)
    def _():
        act_ref[...] = acc * mask_b

    # BN layers: training-mode biased stats over the N*H*W interior positions
    def _bn_epilogue(bi):
        xm = acc * mask_b
        mean = jnp.sum(xm, axis=1, keepdims=True) * inv_count
        diff = (acc - mean) * mask_b
        var = jnp.sum(diff * diff, axis=1, keepdims=True) * inv_count
        inv_std = jax.lax.rsqrt(var + EPS)
        act_ref[...] = (diff * inv_std * g_ref[bi] + b_ref[bi]) * mask_b

    for bi in range(n_layers - bn_start):
        @pl.when(l == bn_start + bi)
        def _(bi=bi):
            _bn_epilogue(bi)

    # last step: crop interior pixels into the lane-dense (CP, N*H*W) output
    @pl.when(l == n_layers - 1)
    def _():
        for img in range(n_batch):
            for h in range(H):
                src = img * IMG + (h + 1) * WP + 1
                dst = (img * H + h) * W
                o_ref[:, dst:dst + W] = act_ref[:, src:src + W]


# --------------------------------------------------------------------------
# Host-side packing (numpy, runs ONCE per parameter set)
# --------------------------------------------------------------------------
def _pack_weights(weights):
    """9x PyTorch OIHW (Cout, Cin, 3, 3) -> (L, 9, CP, CP): [l, kh*3+kw, co, ci]."""
    wall = np.zeros((len(weights), KK, CP, CP), np.float32)
    for l, w in enumerate(weights):
        w = np.asarray(w, np.float32)
        co, ci = w.shape[0], w.shape[1]
        wall[l, :, :co, :ci] = np.transpose(w, (2, 3, 0, 1)).reshape(KK, co, ci)
    return jnp.asarray(wall)


def _pack_bn(params):
    out = np.zeros((len(params), CP, 1), np.float32)
    for i, p in enumerate(params):
        out[i, :p.shape[0], 0] = np.asarray(p, np.float32)
    return jnp.asarray(out)


def _interior_mask(n):
    m = np.zeros((1, n * IMG), np.float32)
    for img in range(n):
        for hp in range(1, 1 + H):
            base = img * IMG + hp * WP + 1
            m[0, base:base + W] = 1.0
    return jnp.asarray(m)


def _pack_input(x):
    """(N, Cin, H, W) -> (CP, N*IMG): channel-padded, halo-padded, flat spatial (traced)."""
    n, cin = x.shape[0], x.shape[1]
    xp = jnp.pad(x, ((0, 0), (0, CP - cin), (1, 1), (1, 1)))       # (N, CP, HP, WP)
    xp = xp.transpose(1, 0, 2, 3).reshape(CP, n, HP * WP)
    xp = jnp.pad(xp, ((0, 0), (0, 0), (0, IMG - HP * WP)))
    return xp.reshape(CP, n * IMG)


# --------------------------------------------------------------------------
# Build the forward function: pack params once, return a jitted forward(x).
# --------------------------------------------------------------------------
def make_net_forward(conv_weights, bn_gammas, bn_betas):
    w_all = _pack_weights(conv_weights)          # (L, 9, CP, CP)
    g_all = _pack_bn(bn_gammas)                  # (2, CP, 1)
    b_all = _pack_bn(bn_betas)                   # (2, CP, 1)
    n_layers = len(conv_weights)
    bn_start = n_layers - 2                      # Sequential_2 / Sequential_3
    c_out = int(conv_weights[-1].shape[0])

    @jax.jit
    def forward(x):
        n = x.shape[0]
        lanes = n * IMG
        mask = _interior_mask(n)                 # trace-time constant
        x_slab = _pack_input(x)

        kernel = functools.partial(
            _fused_net_kernel,
            n_layers=n_layers, bn_start=bn_start, n_batch=n,
            lanes=lanes, inv_count=1.0 / float(n * H * W))

        out_slab = pl.pallas_call(
            kernel,
            out_shape=jax.ShapeDtypeStruct((CP, n * H * W), jnp.float32),
            grid_spec=pltpu.PrefetchScalarGridSpec(
                num_scalar_prefetch=0,
                grid=(n_layers,),                # layer axis: weight blocks stream/double-buffer
                in_specs=[
                    pl.BlockSpec((CP, lanes), lambda l: (0, 0)),            # x (resident)
                    pl.BlockSpec((1, KK, CP, CP), lambda l: (l, 0, 0, 0)),  # per-layer weights
                    pl.BlockSpec((2, CP, 1), lambda l: (0, 0, 0)),          # gamma
                    pl.BlockSpec((2, CP, 1), lambda l: (0, 0, 0)),          # beta
                    pl.BlockSpec((1, lanes), lambda l: (0, 0)),             # interior mask
                ],
                out_specs=pl.BlockSpec((CP, n * H * W), lambda l: (0, 0)),
                scratch_shapes=[pltpu.VMEM((CP, lanes), jnp.float32)],      # resident activations
            ),
            compiler_params=pltpu.CompilerParams(
                dimension_semantics=("arbitrary",)),
        )(x_slab, w_all, g_all, b_all, mask)

        # (CP, N*H*W) -> (N, c_out, H, W)   (fused into the same jit)
        return out_slab.reshape(CP, n, H, W)[:c_out].transpose(1, 0, 2, 3)

    return forward


# --------------------------------------------------------------------------
# Pure-JAX reference (for numerical validation)
# --------------------------------------------------------------------------
def reference_forward(x, conv_weights, bn_gammas, bn_betas):
    n_layers = len(conv_weights)
    relu_layers = {n_layers - 2, n_layers - 1}
    bn_index = {n_layers - 2: 0, n_layers - 1: 1}
    y = x
    for l, w in enumerate(conv_weights):
        if l in relu_layers:
            y = jnp.maximum(y, 0.0)
        y = jax.lax.conv_general_dilated(
            y, w, window_strides=(1, 1), padding=((1, 1), (1, 1)),
            dimension_numbers=("NCHW", "OIHW", "NCHW"),
            precision=jax.lax.Precision.HIGHEST)
        if l in bn_index:
            g = bn_gammas[bn_index[l]].reshape(1, -1, 1, 1)
            b = bn_betas[bn_index[l]].reshape(1, -1, 1, 1)
            mean = jnp.mean(y, axis=(0, 2, 3), keepdims=True)
            var = jnp.mean((y - mean) ** 2, axis=(0, 2, 3), keepdims=True)
            y = (y - mean) * jax.lax.rsqrt(var + EPS) * g + b
    return y


if __name__ == "__main__":
    key = jax.random.PRNGKey(0)
    n_batch = 2

    key, xkey = jax.random.split(key)
    x = jax.random.normal(xkey, (n_batch, 3, H, W), jnp.float32)

    # The 9 convs that actually execute in forward().  (Sequential_1 registers
    # 'conv' three times under the same name, so only the last 28->28 runs.)
    chan_pairs = [(3, 32), (32, 31), (31, 30), (30, 29), (29, 29),
                  (29, 28), (28, 28), (28, 28), (28, 28)]
    conv_weights = []
    for cin, cout in chan_pairs:
        key, sub = jax.random.split(key)
        bound = 1.0 / math.sqrt(cin * 9)    # PyTorch default kaiming-uniform bound
        conv_weights.append(jax.random.uniform(
            sub, (cout, cin, 3, 3), jnp.float32, minval=-bound, maxval=bound))

    # BatchNorm2d(28) default init: gamma=1, beta=0 (training-mode batch stats).
    bn_gammas = [jnp.ones((28,), jnp.float32) for _ in range(2)]
    bn_betas = [jnp.zeros((28,), jnp.float32) for _ in range(2)]

    forward = make_net_forward(conv_weights, bn_gammas, bn_betas)
    y = jax.block_until_ready(forward(x))
    assert y.shape == (n_batch, 28, H, W) and y.dtype == jnp.float32

    y_ref = reference_forward(x, conv_weights, bn_gammas, bn_betas)
    max_err = float(jnp.max(jnp.abs(y - y_ref)))
    # all-f32 path: tightened from 2e-3 per review, with margin for MXU f32 rounding
    assert max_err < 5e-4, f"mismatch vs pure-JAX reference: max abs err = {max_err}"
    print("KERNEL_OK")
</pallas_src>

<mosaic_0001>
module attributes {stable_mosaic.version = 11 : i64} {
  func.func @_fused_net_kernel(%arg0: i32, %arg1: memref<32x768xf32, #tpu.memory_space<vmem>>, %arg2: memref<1x9x32x32xf32, #tpu.memory_space<vmem>>, %arg3: memref<2x32x1xf32, #tpu.memory_space<vmem>>, %arg4: memref<2x32x1xf32, #tpu.memory_space<vmem>>, %arg5: memref<1x768xf32, #tpu.memory_space<vmem>>, %arg6: memref<32x512xf32, #tpu.memory_space<vmem>>, %arg7: memref<32x768xf32, #tpu.memory_space<vmem>>) attributes {dimension_semantics = [#tpu.dimension_semantics<arbitrary>], iteration_bounds = array<i64: 9>, scalar_prefetch = 0 : i64, scratch_operands = 1 : i64, tpu.core_type = #tpu.core_type<tc>, window_params = [{pipeline_mode = #tpu.pipeline_mode<synchronous>, transform_indices = @transform_0, window_bounds = array<i64: 32, 768>}, {transform_indices = @transform_1, window_bounds = array<i64: 1, 9, 32, 32>}, {pipeline_mode = #tpu.pipeline_mode<synchronous>, transform_indices = @transform_2, window_bounds = array<i64: 2, 32, 1>}, {pipeline_mode = #tpu.pipeline_mode<synchronous>, transform_indices = @transform_3, window_bounds = array<i64: 2, 32, 1>}, {pipeline_mode = #tpu.pipeline_mode<synchronous>, transform_indices = @transform_4, window_bounds = array<i64: 1, 768>}, {pipeline_mode = #tpu.pipeline_mode<synchronous>, transform_indices = @transform_5, window_bounds = array<i64: 32, 512>}]} {
    %c0_i32 = arith.constant 0 : i32
    %0 = arith.cmpi eq, %arg0, %c0_i32 : i32
    %1 = arith.extui %0 : i1 to i32
    %c0_i32_0 = arith.constant 0 : i32
    %2 = arith.cmpi ne, %1, %c0_i32_0 : i32
    scf.if %2 {
      %c0_48 = arith.constant 0 : index
      %c0_49 = arith.constant 0 : index
      %65 = vector.load %arg1[%c0_48, %c0_49] : memref<32x768xf32, #tpu.memory_space<vmem>>, vector<32x768xf32>
      %c0_50 = arith.constant 0 : index
      %c0_51 = arith.constant 0 : index
      %66 = vector.load %arg7[%c0_50, %c0_51] : memref<32x768xf32, #tpu.memory_space<vmem>>, vector<32x768xf32>
      tpu.vector_store %arg7[%c0_50, %c0_51], %65 {strides = array<i32>} : memref<32x768xf32, #tpu.memory_space<vmem>>, vector<32x768xf32>,
    } else {
    }
    %c7_i32 = arith.constant 7 : i32
    %3 = arith.cmpi sge, %arg0, %c7_i32 : i32
    %4 = arith.extui %3 : i1 to i32
    %c0_i32_1 = arith.constant 0 : i32
    %5 = arith.cmpi ne, %4, %c0_i32_1 : i32
    scf.if %5 {
      %c0_48 = arith.constant 0 : index
      %c0_49 = arith.constant 0 : index
      %65 = vector.load %arg7[%c0_48, %c0_49] : memref<32x768xf32, #tpu.memory_space<vmem>>, vector<32x768xf32>
      %cst_50 = arith.constant 0.000000e+00 : f32
      %66 = vector.broadcast %cst_50 : f32 to vector<32x768xf32>
      %67 = arith.maximumf %65, %66 : vector<32x768xf32>
      %c0_51 = arith.constant 0 : index
      %c0_52 = arith.constant 0 : index
      %68 = vector.load %arg7[%c0_51, %c0_52] : memref<32x768xf32, #tpu.memory_space<vmem>>, vector<32x768xf32>
      tpu.vector_store %arg7[%c0_51, %c0_52], %67 {strides = array<i32>} : memref<32x768xf32, #tpu.memory_space<vmem>>, vector<32x768xf32>,
    } else {
    }
    %c0 = arith.constant 0 : index
    %c0_2 = arith.constant 0 : index
    %6 = vector.load %arg7[%c0, %c0_2] : memref<32x768xf32, #tpu.memory_space<vmem>>, vector<32x768xf32>
    %c0_3 = arith.constant 0 : index
    %c0_4 = arith.constant 0 : index
    %7 = vector.load %arg5[%c0_3, %c0_4] : memref<1x768xf32, #tpu.memory_space<vmem>>, vector<1x768xf32>
    %8 = vector.shape_cast %7 : vector<1x768xf32> to vector<1x768xf32>
    %9 = vector.broadcast %8 : vector<1x768xf32> to vector<32x768xf32>
    %c19_i32 = arith.constant 19 : i32
    %10 = tpu.dynamic_rotate %6 by %c19_i32 dim 1 : vector<32x768xf32>, i32 -> vector<32x768xf32>
    %c0_5 = arith.constant 0 : index
    %c0_6 = arith.constant 0 : index
    %c0_7 = arith.constant 0 : index
    %c0_8 = arith.constant 0 : index
    %11 = vector.load %arg2[%c0_5, %c0_6, %c0_7, %c0_8] : memref<1x9x32x32xf32, #tpu.memory_space<vmem>>, vector<1x1x32x32xf32>
    %12 = vector.shape_cast %11 : vector<1x1x32x32xf32> to vector<32x32xf32>
    %cst = arith.constant dense<0.000000e+00> : vector<32x768xf32>
    %13 = tpu.matmul %12, %10, %cst {dimension_numbers = #tpu.dot_dimension_numbers<[1], [0], [0], [1], [0, 0, 1, 1], [], []>} : vector<32x32xf32>, vector<32x768xf32>, vector<32x768xf32> -> vector<32x768xf32>
    %c18_i32 = arith.constant 18 : i32
    %14 = tpu.dynamic_rotate %6 by %c18_i32 dim 1 : vector<32x768xf32>, i32 -> vector<32x768xf32>
    %c0_9 = arith.constant 0 : index
    %c1 = arith.constant 1 : index
    %c0_10 = arith.constant 0 : index
    %c0_11 = arith.constant 0 : index
    %15 = vector.load %arg2[%c0_9, %c1, %c0_10, %c0_11] : memref<1x9x32x32xf32, #tpu.memory_space<vmem>>, vector<1x1x32x32xf32>
    %16 = vector.shape_cast %15 : vector<1x1x32x32xf32> to vector<32x32xf32>
    %cst_12 = arith.constant dense<0.000000e+00> : vector<32x768xf32>
    %17 = tpu.matmul %16, %14, %cst_12 {dimension_numbers = #tpu.dot_dimension_numbers<[1], [0], [0], [1], [0, 0, 1, 1], [], []>} : vector<32x32xf32>, vector<32x768xf32>, vector<32x768xf32> -> vector<32x768xf32>
    %18 = arith.addf %13, %17 : vector<32x768xf32>
    %c17_i32 = arith.constant 17 : i32
    %19 = tpu.dynamic_rotate %6 by %c17_i32 dim 1 : vector<32x768xf32>, i32 -> vector<32x768xf32>
    %c0_13 = arith.constant 0 : index
    %c2 = arith.constant 2 : index
    %c0_14 = arith.constant 0 : index
    %c0_15 = arith.constant 0 : index
    %20 = vector.load %arg2[%c0_13, %c2, %c0_14, %c0_15] : memref<1x9x32x32xf32, #tpu.memory_space<vmem>>, vector<1x1x32x32xf32>
    %21 = vector.shape_cast %20 : vector<1x1x32x32xf32> to vector<32x32xf32>
    %cst_16 = arith.constant dense<0.000000e+00> : vector<32x768xf32>
    %22 = tpu.matmul %21, %19, %cst_16 {dimension_numbers = #tpu.dot_dimension_numbers<[1], [0], [0], [1], [0, 0, 1, 1], [], []>} : vector<32x32xf32>, vector<32x768xf32>, vector<32x768xf32> -> vector<32x768xf32>
    %23 = arith.addf %18, %22 : vector<32x768xf32>
    %c1_i32 = arith.constant 1 : i32
    %24 = tpu.dynamic_rotate %6 by %c1_i32 dim 1 : vector<32x768xf32>, i32 -> vector<32x768xf32>
    %c0_17 = arith.constant 0 : index
    %c3 = arith.constant 3 : index
    %c0_18 = arith.constant 0 : index
    %c0_19 = arith.constant 0 : index
    %25 = vector.load %arg2[%c0_17, %c3, %c0_18, %c0_19] : memref<1x9x32x32xf32, #tpu.memory_space<vmem>>, vector<1x1x32x32xf32>
    %26 = vector.shape_cast %25 : vector<1x1x32x32xf32> to vector<32x32xf32>
    %cst_20 = arith.constant dense<0.000000e+00> : vector<32x768xf32>
    %27 = tpu.matmul %26, %24, %cst_20 {dimension_numbers = #tpu.dot_dimension_numbers<[1], [0], [0], [1], [0, 0, 1, 1], [], []>} : vector<32x32xf32>, vector<32x768xf32>, vector<32x768xf32> -> vector<32x768xf32>
    %28 = arith.addf %23, %27 : vector<32x768xf32>
    %c0_21 = arith.constant 0 : index
    %c4 = arith.constant 4 : index
    %c0_22 = arith.constant 0 : index
    %c0_23 = arith.constant 0 : index
    %29 = vector.load %arg2[%c0_21, %c4, %c0_22, %c0_23] : memref<1x9x32x32xf32, #tpu.memory_space<vmem>>, vector<1x1x32x32xf32>
    %30 = vector.shape_cast %29 : vector<1x1x32x32xf32> to vector<32x32xf32>
    %cst_24 = arith.constant dense<0.000000e+00> : vector<32x768xf32>
    %31 = tpu.matmul %30, %6, %cst_24 {dimension_numbers = #tpu.dot_dimension_numbers<[1], [0], [0], [1], [0, 0, 1, 1], [], []>} : vector<32x32xf32>, vector<32x768xf32>, vector<32x768xf32> -> vector<32x768xf32>
    %32 = arith.addf %28, %31 : vector<32x768xf32>
    %c767_i32 = arith.constant 767 : i32
    %33 = tpu.dynamic_rotate %6 by %c767_i32 dim 1 : vector<32x768xf32>, i32 -> vector<32x768xf32>
    %c0_25 = arith.constant 0 : index
    %c5 = arith.constant 5 : index
    %c0_26 = arith.constant 0 : index
    %c0_27 = arith.constant 0 : index
    %34 = vector.load %arg2[%c0_25, %c5, %c0_26, %c0_27] : memref<1x9x32x32xf32, #tpu.memory_space<vmem>>, vector<1x1x32x32xf32>
    %35 = vector.shape_cast %34 : vector<1x1x32x32xf32> to vector<32x32xf32>
    %cst_28 = arith.constant dense<0.000000e+00> : vector<32x768xf32>
    %36 = tpu.matmul %35, %33, %cst_28 {dimension_numbers = #tpu.dot_dimension_numbers<[1], [0], [0], [1], [0, 0, 1, 1], [], []>} : vector<32x32xf32>, vector<32x768xf32>, vector<32x768xf32> -> vector<32x768xf32>
    %37 = arith.addf %32, %36 : vector<32x768xf32>
    %c751_i32 = arith.constant 751 : i32
    %38 = tpu.dynamic_rotate %6 by %c751_i32 dim 1 : vector<32x768xf32>, i32 -> vector<32x768xf32>
    %c0_29 = arith.constant 0 : index
    %c6 = arith.constant 6 : index
    %c0_30 = arith.constant 0 : index
    %c0_31 = arith.constant 0 : index
    %39 = vector.load %arg2[%c0_29, %c6, %c0_30, %c0_31] : memref<1x9x32x32xf32, #tpu.memory_space<vmem>>, vector<1x1x32x32xf32>
    %40 = vector.shape_cast %39 : vector<1x1x32x32xf32> to vector<32x32xf32>
    %cst_32 = arith.constant dense<0.000000e+00> : vector<32x768xf32>
    %41 = tpu.matmul %40, %38, %cst_32 {dimension_numbers = #tpu.dot_dimension_numbers<[1], [0], [0], [1], [0, 0, 1, 1], [], []>} : vector<32x32xf32>, vector<32x768xf32>, vector<32x768xf32> -> vector<32x768xf32>
    %42 = arith.addf %37, %41 : vector<32x768xf32>
    %c750_i32 = arith.constant 750 : i32
    %43 = tpu.dynamic_rotate %6 by %c750_i32 dim 1 : vector<32x768xf32>, i32 -> vector<32x768xf32>
    %c0_33 = arith.constant 0 : index
    %c7 = arith.constant 7 : index
    %c0_34 = arith.constant 0 : index
    %c0_35 = arith.constant 0 : index
    %44 = vector.load %arg2[%c0_33, %c7, %c0_34, %c0_35] : memref<1x9x32x32xf32, #tpu.memory_space<vmem>>, vector<1x1x32x32xf32>
    %45 = vector.shape_cast %44 : vector<1x1x32x32xf32> to vector<32x32xf32>
    %cst_36 = arith.constant dense<0.000000e+00> : vector<32x768xf32>
    %46 = tpu.matmul %45, %43, %cst_36 {dimension_numbers = #tpu.dot_dimension_numbers<[1], [0], [0], [1], [0, 0, 1, 1], [], []>} : vector<32x32xf32>, vector<32x768xf32>, vector<32x768xf32> -> vector<32x768xf32>
    %47 = arith.addf %42, %46 : vector<32x768xf32>
    %c749_i32 = arith.constant 749 : i32
    %48 = tpu.dynamic_rotate %6 by %c749_i32 dim 1 : vector<32x768xf32>, i32 -> vector<32x768xf32>
    %c0_37 = arith.constant 0 : index
    %c8 = arith.constant 8 : index
    %c0_38 = arith.constant 0 : index
    %c0_39 = arith.constant 0 : index
    %49 = vector.load %arg2[%c0_37, %c8, %c0_38, %c0_39] : memref<1x9x32x32xf32, #tpu.memory_space<vmem>>, vector<1x1x32x32xf32>
    %50 = vector.shape_cast %49 : vector<1x1x32x32xf32> to vector<32x32xf32>
    %cst_40 = arith.constant dense<0.000000e+00> : vector<32x768xf32>
    %51 = tpu.matmul %50, %48, %cst_40 {dimension_numbers = #tpu.dot_dimension_numbers<[1], [0], [0], [1], [0, 0, 1, 1], [], []>} : vector<32x32xf32>, vector<32x768xf32>, vector<32x768xf32> -> vector<32x768xf32>
    %52 = arith.addf %47, %51 : vector<32x768xf32>
    %c7_i32_41 = arith.constant 7 : i32
    %53 = arith.cmpi slt, %arg0, %c7_i32_41 : i32
    %54 = arith.extui %53 : i1 to i32
    %c0_i32_42 = arith.constant 0 : i32
    %55 = arith.cmpi ne, %54, %c0_i32_42 : i32
    scf.if %55 {
      %65 = arith.mulf %52, %9 : vector<32x768xf32>
      %c0_48 = arith.constant 0 : index
      %c0_49 = arith.constant 0 : index
      %66 = vector.load %arg7[%c0_48, %c0_49] : memref<32x768xf32, #tpu.memory_space<vmem>>, vector<32x768xf32>
      tpu.vector_store %arg7[%c0_48, %c0_49], %65 {strides = array<i32>} : memref<32x768xf32, #tpu.memory_space<vmem>>, vector<32x768xf32>,
    } else {
    }
    %c7_i32_43 = arith.constant 7 : i32
    %56 = arith.cmpi eq, %arg0, %c7_i32_43 : i32
    %57 = arith.extui %56 : i1 to i32
    %c0_i32_44 = arith.constant 0 : i32
    %58 = arith.cmpi ne, %57, %c0_i32_44 : i32
    scf.if %58 {
      %65 = arith.mulf %52, %9 : vector<32x768xf32>
      %cst_48 = arith.constant dense<0.000000e+00> : vector<32xf32>
      %66 = vector.multi_reduction <add>, %65, %cst_48 [1] : vector<32x768xf32> to vector<32xf32>
      %67 = vector.shape_cast %66 : vector<32xf32> to vector<32x1xf32>
      %cst_49 = arith.constant 0.001953125 : f32
      %68 = vector.broadcast %cst_49 : f32 to vector<32x1xf32>
      %69 = arith.mulf %67, %68 : vector<32x1xf32>
      %70 = vector.broadcast %69 : vector<32x1xf32> to vector<32x768xf32>
      %71 = arith.subf %52, %70 : vector<32x768xf32>
      %72 = arith.mulf %71, %9 : vector<32x768xf32>
      %73 = arith.mulf %72, %72 : vector<32x768xf32>
      %cst_50 = arith.constant dense<0.000000e+00> : vector<32xf32>
      %74 = vector.multi_reduction <add>, %73, %cst_50 [1] : vector<32x768xf32> to vector<32xf32>
      %75 = vector.shape_cast %74 : vector<32xf32> to vector<32x1xf32>
      %cst_51 = arith.constant 0.001953125 : f32
      %76 = vector.broadcast %cst_51 : f32 to vector<32x1xf32>
      %77 = arith.mulf %75, %76 : vector<32x1xf32>
      %cst_52 = arith.constant 9.99999974E-6 : f32
      %78 = vector.broadcast %cst_52 : f32 to vector<32x1xf32>
      %79 = arith.addf %77, %78 : vector<32x1xf32>
      %80 = math.rsqrt %79 : vector<32x1xf32>
      %81 = vector.broadcast %80 : vector<32x1xf32> to vector<32x768xf32>
      %82 = arith.mulf %72, %81 : vector<32x768xf32>
      %c0_53 = arith.constant 0 : index
      %c0_54 = arith.constant 0 : index
      %c0_55 = arith.constant 0 : index
      %83 = vector.load %arg3[%c0_53, %c0_54, %c0_55] : memref<2x32x1xf32, #tpu.memory_space<vmem>>, vector<1x32x1xf32>
      %84 = vector.shape_cast %83 : vector<1x32x1xf32> to vector<32x1xf32>
      %85 = vector.broadcast %84 : vector<32x1xf32> to vector<32x768xf32>
      %86 = arith.mulf %82, %85 : vector<32x768xf32>
      %c0_56 = arith.constant 0 : index
      %c0_57 = arith.constant 0 : index
      %c0_58 = arith.constant 0 : index
      %87 = vector.load %arg4[%c0_56, %c0_57, %c0_58] : memref<2x32x1xf32, #tpu.memory_space<vmem>>, vector<1x32x1xf32>
      %88 = vector.shape_cast %87 : vector<1x32x1xf32> to vector<32x1xf32>
      %89 = vector.broadcast %88 : vector<32x1xf32> to vector<32x768xf32>
      %90 = arith.addf %86, %89 : vector<32x768xf32>
      %91 = arith.mulf %90, %9 : vector<32x768xf32>
      %c0_59 = arith.constant 0 : index
      %c0_60 = arith.constant 0 : index
      %92 = vector.load %arg7[%c0_59, %c0_60] : memref<32x768xf32, #tpu.memory_space<vmem>>, vector<32x768xf32>
      tpu.vector_store %arg7[%c0_59, %c0_60], %91 {strides = array<i32>} : memref<32x768xf32, #tpu.memory_space<vmem>>, vector<32x768xf32>,
    } else {
    }
    %c8_i32 = arith.constant 8 : i32
    %59 = arith.cmpi eq, %arg0, %c8_i32 : i32
    %60 = arith.extui %59 : i1 to i32
    %c0_i32_45 = arith.constant 0 : i32
    %61 = arith.cmpi ne, %60, %c0_i32_45 : i32
    scf.if %61 {
      %65 = arith.mulf %52, %9 : vector<32x768xf32>
      %cst_48 = arith.constant dense<0.000000e+00> : vector<32xf32>
      %66 = vector.multi_reduction <add>, %65, %cst_48 [1] : vector<32x768xf32> to vector<32xf32>
      %67 = vector.shape_cast %66 : vector<32xf32> to vector<32x1xf32>
      %cst_49 = arith.constant 0.001953125 : f32
      %68 = vector.broadcast %cst_49 : f32 to vector<32x1xf32>
      %69 = arith.mulf %67, %68 : vector<32x1xf32>
      %70 = vector.broadcast %69 : vector<32x1xf32> to vector<32x768xf32>
      %71 = arith.subf %52, %70 : vector<32x768xf32>
      %72 = arith.mulf %71, %9 : vector<32x768xf32>
      %73 = arith.mulf %72, %72 : vector<32x768xf32>
      %cst_50 = arith.constant dense<0.000000e+00> : vector<32xf32>
      %74 = vector.multi_reduction <add>, %73, %cst_50 [1] : vector<32x768xf32> to vector<32xf32>
      %75 = vector.shape_cast %74 : vector<32xf32> to vector<32x1xf32>
      %cst_51 = arith.constant 0.001953125 : f32
      %76 = vector.broadcast %cst_51 : f32 to vector<32x1xf32>
      %77 = arith.mulf %75, %76 : vector<32x1xf32>
      %cst_52 = arith.constant 9.99999974E-6 : f32
      %78 = vector.broadcast %cst_52 : f32 to vector<32x1xf32>
      %79 = arith.addf %77, %78 : vector<32x1xf32>
      %80 = math.rsqrt %79 : vector<32x1xf32>
      %81 = vector.broadcast %80 : vector<32x1xf32> to vector<32x768xf32>
      %82 = arith.mulf %72, %81 : vector<32x768xf32>
      %c1_53 = arith.constant 1 : index
      %c0_54 = arith.constant 0 : index
      %c0_55 = arith.constant 0 : index
      %83 = vector.load %arg3[%c1_53, %c0_54, %c0_55] : memref<2x32x1xf32, #tpu.memory_space<vmem>>, vector<1x32x1xf32>
      %84 = vector.shape_cast %83 : vector<1x32x1xf32> to vector<32x1xf32>
      %85 = vector.broadcast %84 : vector<32x1xf32> to vector<32x768xf32>
      %86 = arith.mulf %82, %85 : vector<32x768xf32>
      %c1_56 = arith.constant 1 : index
      %c0_57 = arith.constant 0 : index
      %c0_58 = arith.constant 0 : index
      %87 = vector.load %arg4[%c1_56, %c0_57, %c0_58] : memref<2x32x1xf32, #tpu.memory_space<vmem>>, vector<1x32x1xf32>
      %88 = vector.shape_cast %87 : vector<1x32x1xf32> to vector<32x1xf32>
      %89 = vector.broadcast %88 : vector<32x1xf32> to vector<32x768xf32>
      %90 = arith.addf %86, %89 : vector<32x768xf32>
      %91 = arith.mulf %90, %9 : vector<32x768xf32>
      %c0_59 = arith.constant 0 : index
      %c0_60 = arith.constant 0 : index
      %92 = vector.load %arg7[%c0_59, %c0_60] : memref<32x768xf32, #tpu.memory_space<vmem>>, vector<32x768xf32>
      tpu.vector_store %arg7[%c0_59, %c0_60], %91 {strides = array<i32>} : memref<32x768xf32, #tpu.memory_space<vmem>>, vector<32x768xf32>,
    } else {
    }
    %c8_i32_46 = arith.constant 8 : i32
    %62 = arith.cmpi eq, %arg0, %c8_i32_46 : i32
    %63 = arith.extui %62 : i1 to i32
    %c0_i32_47 = arith.constant 0 : i32
    %64 = arith.cmpi ne, %63, %c0_i32_47 : i32
    scf.if %64 {
      %c0_48 = arith.constant 0 : index
      %c19 = arith.constant 19 : index
      %65 = vector.load %arg7[%c0_48, %c19] : memref<32x768xf32, #tpu.memory_space<vmem>>, vector<32x16xf32>
      %c0_49 = arith.constant 0 : index
      %c0_50 = arith.constant 0 : index
      %66 = vector.load %arg6[%c0_49, %c0_50] : memref<32x512xf32, #tpu.memory_space<vmem>>, vector<32x16xf32>
      tpu.vector_store %arg6[%c0_49, %c0_50], %65 {strides = array<i32>} : memref<32x512xf32, #tpu.memory_space<vmem>>, vector<32x16xf32>,
      %c0_51 = arith.constant 0 : index
      %c37 = arith.constant 37 : index
      %67 = vector.load %arg7[%c0_51, %c37] : memref<32x768xf32, #tpu.memory_space<vmem>>, vector<32x16xf32>
      %c0_52 = arith.constant 0 : index
      %c16 = arith.constant 16 : index
      %68 = vector.load %arg6[%c0_52, %c16] : memref<32x512xf32, #tpu.memory_space<vmem>>, vector<32x16xf32>
      tpu.vector_store %arg6[%c0_52, %c16], %67 {strides = array<i32>} : memref<32x512xf32, #tpu.memory_space<vmem>>, vector<32x16xf32>,
      %c0_53 = arith.constant 0 : index
      %c55 = arith.constant 55 : index
      %69 = vector.load %arg7[%c0_53, %c55] : memref<32x768xf32, #tpu.memory_space<vmem>>, vector<32x16xf32>
      %c0_54 = arith.constant 0 : index
      %c32 = arith.constant 32 : index
      %70 = vector.load %arg6[%c0_54, %c32] : memref<32x512xf32, #tpu.memory_space<vmem>>, vector<32x16xf32>
      tpu.vector_store %arg6[%c0_54, %c32], %69 {strides = array<i32>} : memref<32x512xf32, #tpu.memory_space<vmem>>, vector<32x16xf32>,
      %c0_55 = arith.constant 0 : index
      %c73 = arith.constant 73 : index
      %71 = vector.load %arg7[%c0_55, %c73] : memref<32x768xf32, #tpu.memory_space<vmem>>, vector<32x16xf32>
      %c0_56 = arith.constant 0 : index
      %c48 = arith.constant 48 : index
      %72 = vector.load %arg6[%c0_56, %c48] : memref<32x512xf32, #tpu.memory_space<vmem>>, vector<32x16xf32>
      tpu.vector_store %arg6[%c0_56, %c48], %71 {strides = array<i32>} : memref<32x512xf32, #tpu.memory_space<vmem>>, vector<32x16xf32>,
      %c0_57 = arith.constant 0 : index
      %c91 = arith.constant 91 : index
      %73 = vector.load %arg7[%c0_57, %c91] : memref<32x768xf32, #tpu.memory_space<vmem>>, vector<32x16xf32>
      %c0_58 = arith.constant 0 : index
      %c64 = arith.constant 64 : index
      %74 = vector.load %arg6[%c0_58, %c64] : memref<32x512xf32, #tpu.memory_space<vmem>>, vector<32x16xf32>
      tpu.vector_store %arg6[%c0_58, %c64], %73 {strides = array<i32>} : memref<32x512xf32, #tpu.memory_space<vmem>>, vector<32x16xf32>,
      %c0_59 = arith.constant 0 : index
      %c109 = arith.constant 109 : index
      %75 = vector.load %arg7[%c0_59, %c109] : memref<32x768xf32, #tpu.memory_space<vmem>>, vector<32x16xf32>
      %c0_60 = arith.constant 0 : index
      %c80 = arith.constant 80 : index
      %76 = vector.load %arg6[%c0_60, %c80] : memref<32x512xf32, #tpu.memory_space<vmem>>, vector<32x16xf32>
      tpu.vector_store %arg6[%c0_60, %c80], %75 {strides = array<i32>} : memref<32x512xf32, #tpu.memory_space<vmem>>, vector<32x16xf32>,
      %c0_61 = arith.constant 0 : index
      %c127 = arith.constant 127 : index
      %77 = vector.load %arg7[%c0_61, %c127] : memref<32x768xf32, #tpu.memory_space<vmem>>, vector<32x16xf32>
      %c0_62 = arith.constant 0 : index
      %c96 = arith.constant 96 : index
      %78 = vector.load %arg6[%c0_62, %c96] : memref<32x512xf32, #tpu.memory_space<vmem>>, vector<32x16xf32>
      tpu.vector_store %arg6[%c0_62, %c96], %77 {strides = array<i32>} : memref<32x512xf32, #tpu.memory_space<vmem>>, vector<32x16xf32>,
      %c0_63 = arith.constant 0 : index
      %c145 = arith.constant 145 : index
      %79 = vector.load %arg7[%c0_63, %c145] : memref<32x768xf32, #tpu.memory_space<vmem>>, vector<32x16xf32>
      %c0_64 = arith.constant 0 : index
      %c112 = arith.constant 112 : index
      %80 = vector.load %arg6[%c0_64, %c112] : memref<32x512xf32, #tpu.memory_space<vmem>>, vector<32x16xf32>
      tpu.vector_store %arg6[%c0_64, %c112], %79 {strides = array<i32>} : memref<32x512xf32, #tpu.memory_space<vmem>>, vector<32x16xf32>,
      %c0_65 = arith.constant 0 : index
      %c163 = arith.constant 163 : index
      %81 = vector.load %arg7[%c0_65, %c163] : memref<32x768xf32, #tpu.memory_space<vmem>>, vector<32x16xf32>
      %c0_66 = arith.constant 0 : index
      %c128 = arith.constant 128 : index
      %82 = vector.load %arg6[%c0_66, %c128] : memref<32x512xf32, #tpu.memory_space<vmem>>, vector<32x16xf32>
      tpu.vector_store %arg6[%c0_66, %c128], %81 {strides = array<i32>} : memref<32x512xf32, #tpu.memory_space<vmem>>, vector<32x16xf32>,
      %c0_67 = arith.constant 0 : index
      %c181 = arith.constant 181 : index
      %83 = vector.load %arg7[%c0_67, %c181] : memref<32x768xf32, #tpu.memory_space<vmem>>, vector<32x16xf32>
      %c0_68 = arith.constant 0 : index
      %c144 = arith.constant 144 : index
      %84 = vector.load %arg6[%c0_68, %c144] : memref<32x512xf32, #tpu.memory_space<vmem>>, vector<32x16xf32>
      tpu.vector_store %arg6[%c0_68, %c144], %83 {strides = array<i32>} : memref<32x512xf32, #tpu.memory_space<vmem>>, vector<32x16xf32>,
      %c0_69 = arith.constant 0 : index
      %c199 = arith.constant 199 : index
      %85 = vector.load %arg7[%c0_69, %c199] : memref<32x768xf32, #tpu.memory_space<vmem>>, vector<32x16xf32>
      %c0_70 = arith.constant 0 : index
      %c160 = arith.constant 160 : index
      %86 = vector.load %arg6[%c0_70, %c160] : memref<32x512xf32, #tpu.memory_space<vmem>>, vector<32x16xf32>
      tpu.vector_store %arg6[%c0_70, %c160], %85 {strides = array<i32>} : memref<32x512xf32, #tpu.memory_space<vmem>>, vector<32x16xf32>,
      %c0_71 = arith.constant 0 : index
      %c217 = arith.constant 217 : index
      %87 = vector.load %arg7[%c0_71, %c217] : memref<32x768xf32, #tpu.memory_space<vmem>>, vector<32x16xf32>
      %c0_72 = arith.constant 0 : index
      %c176 = arith.constant 176 : index
      %88 = vector.load %arg6[%c0_72, %c176] : memref<32x512xf32, #tpu.memory_space<vmem>>, vector<32x16xf32>
      tpu.vector_store %arg6[%c0_72, %c176], %87 {strides = array<i32>} : memref<32x512xf32, #tpu.memory_space<vmem>>, vector<32x16xf32>,
      %c0_73 = arith.constant 0 : index
      %c235 = arith.constant 235 : index
      %89 = vector.load %arg7[%c0_73, %c235] : memref<32x768xf32, #tpu.memory_space<vmem>>, vector<32x16xf32>
      %c0_74 = arith.constant 0 : index
      %c192 = arith.constant 192 : index
      %90 = vector.load %arg6[%c0_74, %c192] : memref<32x512xf32, #tpu.memory_space<vmem>>, vector<32x16xf32>
      tpu.vector_store %arg6[%c0_74, %c192], %89 {strides = array<i32>} : memref<32x512xf32, #tpu.memory_space<vmem>>, vector<32x16xf32>,
      %c0_75 = arith.constant 0 : index
      %c253 = arith.constant 253 : index
      %91 = vector.load %arg7[%c0_75, %c253] : memref<32x768xf32, #tpu.memory_space<vmem>>, vector<32x16xf32>
      %c0_76 = arith.constant 0 : index
      %c208 = arith.constant 208 : index
      %92 = vector.load %arg6[%c0_76, %c208] : memref<32x512xf32, #tpu.memory_space<vmem>>, vector<32x16xf32>
      tpu.vector_store %arg6[%c0_76, %c208], %91 {strides = array<i32>} : memref<32x512xf32, #tpu.memory_space<vmem>>, vector<32x16xf32>,
      %c0_77 = arith.constant 0 : index
      %c271 = arith.constant 271 : index
      %93 = vector.load %arg7[%c0_77, %c271] : memref<32x768xf32, #tpu.memory_space<vmem>>, vector<32x16xf32>
      %c0_78 = arith.constant 0 : index
      %c224 = arith.constant 224 : index
      %94 = vector.load %arg6[%c0_78, %c224] : memref<32x512xf32, #tpu.memory_space<vmem>>, vector<32x16xf32>
      tpu.vector_store %arg6[%c0_78, %c224], %93 {strides = array<i32>} : memref<32x512xf32, #tpu.memory_space<vmem>>, vector<32x16xf32>,
      %c0_79 = arith.constant 0 : index
      %c289 = arith.constant 289 : index
      %95 = vector.load %arg7[%c0_79, %c289] : memref<32x768xf32, #tpu.memory_space<vmem>>, vector<32x16xf32>
      %c0_80 = arith.constant 0 : index
      %c240 = arith.constant 240 : index
      %96 = vector.load %arg6[%c0_80, %c240] : memref<32x512xf32, #tpu.memory_space<vmem>>, vector<32x16xf32>
      tpu.vector_store %arg6[%c0_80, %c240], %95 {strides = array<i32>} : memref<32x512xf32, #tpu.memory_space<vmem>>, vector<32x16xf32>,
      %c0_81 = arith.constant 0 : index
      %c403 = arith.constant 403 : index
      %97 = vector.load %arg7[%c0_81, %c403] : memref<32x768xf32, #tpu.memory_space<vmem>>, vector<32x16xf32>
      %c0_82 = arith.constant 0 : index
      %c256 = arith.constant 256 : index
      %98 = vector.load %arg6[%c0_82, %c256] : memref<32x512xf32, #tpu.memory_space<vmem>>, vector<32x16xf32>
      tpu.vector_store %arg6[%c0_82, %c256], %97 {strides = array<i32>} : memref<32x512xf32, #tpu.memory_space<vmem>>, vector<32x16xf32>,
      %c0_83 = arith.constant 0 : index
      %c421 = arith.constant 421 : index
      %99 = vector.load %arg7[%c0_83, %c421] : memref<32x768xf32, #tpu.memory_space<vmem>>, vector<32x16xf32>
      %c0_84 = arith.constant 0 : index
      %c272 = arith.constant 272 : index
      %100 = vector.load %arg6[%c0_84, %c272] : memref<32x512xf32, #tpu.memory_space<vmem>>, vector<32x16xf32>
      tpu.vector_store %arg6[%c0_84, %c272], %99 {strides = array<i32>} : memref<32x512xf32, #tpu.memory_space<vmem>>, vector<32x16xf32>,
      %c0_85 = arith.constant 0 : index
      %c439 = arith.constant 439 : index
      %101 = vector.load %arg7[%c0_85, %c439] : memref<32x768xf32, #tpu.memory_space<vmem>>, vector<32x16xf32>
      %c0_86 = arith.constant 0 : index
      %c288 = arith.constant 288 : index
      %102 = vector.load %arg6[%c0_86, %c288] : memref<32x512xf32, #tpu.memory_space<vmem>>, vector<32x16xf32>
      tpu.vector_store %arg6[%c0_86, %c288], %101 {strides = array<i32>} : memref<32x512xf32, #tpu.memory_space<vmem>>, vector<32x16xf32>,
      %c0_87 = arith.constant 0 : index
      %c457 = arith.constant 457 : index
      %103 = vector.load %arg7[%c0_87, %c457] : memref<32x768xf32, #tpu.memory_space<vmem>>, vector<32x16xf32>
      %c0_88 = arith.constant 0 : index
      %c304 = arith.constant 304 : index
      %104 = vector.load %arg6[%c0_88, %c304] : memref<32x512xf32, #tpu.memory_space<vmem>>, vector<32x16xf32>
      tpu.vector_store %arg6[%c0_88, %c304], %103 {strides = array<i32>} : memref<32x512xf32, #tpu.memory_space<vmem>>, vector<32x16xf32>,
      %c0_89 = arith.constant 0 : index
      %c475 = arith.constant 475 : index
      %105 = vector.load %arg7[%c0_89, %c475] : memref<32x768xf32, #tpu.memory_space<vmem>>, vector<32x16xf32>
      %c0_90 = arith.constant 0 : index
      %c320 = arith.constant 320 : index
      %106 = vector.load %arg6[%c0_90, %c320] : memref<32x512xf32, #tpu.memory_space<vmem>>, vector<32x16xf32>
      tpu.vector_store %arg6[%c0_90, %c320], %105 {strides = array<i32>} : memref<32x512xf32, #tpu.memory_space<vmem>>, vector<32x16xf32>,
      %c0_91 = arith.constant 0 : index
      %c493 = arith.constant 493 : index
      %107 = vector.load %arg7[%c0_91, %c493] : memref<32x768xf32, #tpu.memory_space<vmem>>, vector<32x16xf32>
      %c0_92 = arith.constant 0 : index
      %c336 = arith.constant 336 : index
      %108 = vector.load %arg6[%c0_92, %c336] : memref<32x512xf32, #tpu.memory_space<vmem>>, vector<32x16xf32>
      tpu.vector_store %arg6[%c0_92, %c336], %107 {strides = array<i32>} : memref<32x512xf32, #tpu.memory_space<vmem>>, vector<32x16xf32>,
      %c0_93 = arith.constant 0 : index
      %c511 = arith.constant 511 : index
      %109 = vector.load %arg7[%c0_93, %c511] : memref<32x768xf32, #tpu.memory_space<vmem>>, vector<32x16xf32>
      %c0_94 = arith.constant 0 : index
      %c352 = arith.constant 352 : index
      %110 = vector.load %arg6[%c0_94, %c352] : memref<32x512xf32, #tpu.memory_space<vmem>>, vector<32x16xf32>
      tpu.vector_store %arg6[%c0_94, %c352], %109 {strides = array<i32>} : memref<32x512xf32, #tpu.memory_space<vmem>>, vector<32x16xf32>,
      %c0_95 = arith.constant 0 : index
      %c529 = arith.constant 529 : index
      %111 = vector.load %arg7[%c0_95, %c529] : memref<32x768xf32, #tpu.memory_space<vmem>>, vector<32x16xf32>
      %c0_96 = arith.constant 0 : index
      %c368 = arith.constant 368 : index
      %112 = vector.load %arg6[%c0_96, %c368] : memref<32x512xf32, #tpu.memory_space<vmem>>, vector<32x16xf32>
      tpu.vector_store %arg6[%c0_96, %c368], %111 {strides = array<i32>} : memref<32x512xf32, #tpu.memory_space<vmem>>, vector<32x16xf32>,
      %c0_97 = arith.constant 0 : index
      %c547 = arith.constant 547 : index
      %113 = vector.load %arg7[%c0_97, %c547] : memref<32x768xf32, #tpu.memory_space<vmem>>, vector<32x16xf32>
      %c0_98 = arith.constant 0 : index
      %c384 = arith.constant 384 : index
      %114 = vector.load %arg6[%c0_98, %c384] : memref<32x512xf32, #tpu.memory_space<vmem>>, vector<32x16xf32>
      tpu.vector_store %arg6[%c0_98, %c384], %113 {strides = array<i32>} : memref<32x512xf32, #tpu.memory_space<vmem>>, vector<32x16xf32>,
      %c0_99 = arith.constant 0 : index
      %c565 = arith.constant 565 : index
      %115 = vector.load %arg7[%c0_99, %c565] : memref<32x768xf32, #tpu.memory_space<vmem>>, vector<32x16xf32>
      %c0_100 = arith.constant 0 : index
      %c400 = arith.constant 400 : index
      %116 = vector.load %arg6[%c0_100, %c400] : memref<32x512xf32, #tpu.memory_space<vmem>>, vector<32x16xf32>
      tpu.vector_store %arg6[%c0_100, %c400], %115 {strides = array<i32>} : memref<32x512xf32, #tpu.memory_space<vmem>>, vector<32x16xf32>,
      %c0_101 = arith.constant 0 : index
      %c583 = arith.constant 583 : index
      %117 = vector.load %arg7[%c0_101, %c583] : memref<32x768xf32, #tpu.memory_space<vmem>>, vector<32x16xf32>
      %c0_102 = arith.constant 0 : index
      %c416 = arith.constant 416 : index
      %118 = vector.load %arg6[%c0_102, %c416] : memref<32x512xf32, #tpu.memory_space<vmem>>, vector<32x16xf32>
      tpu.vector_store %arg6[%c0_102, %c416], %117 {strides = array<i32>} : memref<32x512xf32, #tpu.memory_space<vmem>>, vector<32x16xf32>,
      %c0_103 = arith.constant 0 : index
      %c601 = arith.constant 601 : index
      %119 = vector.load %arg7[%c0_103, %c601] : memref<32x768xf32, #tpu.memory_space<vmem>>, vector<32x16xf32>
      %c0_104 = arith.constant 0 : index
      %c432 = arith.constant 432 : index
      %120 = vector.load %arg6[%c0_104, %c432] : memref<32x512xf32, #tpu.memory_space<vmem>>, vector<32x16xf32>
      tpu.vector_store %arg6[%c0_104, %c432], %119 {strides = array<i32>} : memref<32x512xf32, #tpu.memory_space<vmem>>, vector<32x16xf32>,
      %c0_105 = arith.constant 0 : index
      %c619 = arith.constant 619 : index
      %121 = vector.load %arg7[%c0_105, %c619] : memref<32x768xf32, #tpu.memory_space<vmem>>, vector<32x16xf32>
      %c0_106 = arith.constant 0 : index
      %c448 = arith.constant 448 : index
      %122 = vector.load %arg6[%c0_106, %c448] : memref<32x512xf32, #tpu.memory_space<vmem>>, vector<32x16xf32>
      tpu.vector_store %arg6[%c0_106, %c448], %121 {strides = array<i32>} : memref<32x512xf32, #tpu.memory_space<vmem>>, vector<32x16xf32>,
      %c0_107 = arith.constant 0 : index
      %c637 = arith.constant 637 : index
      %123 = vector.load %arg7[%c0_107, %c637] : memref<32x768xf32, #tpu.memory_space<vmem>>, vector<32x16xf32>
      %c0_108 = arith.constant 0 : index
      %c464 = arith.constant 464 : index
      %124 = vector.load %arg6[%c0_108, %c464] : memref<32x512xf32, #tpu.memory_space<vmem>>, vector<32x16xf32>
      tpu.vector_store %arg6[%c0_108, %c464], %123 {strides = array<i32>} : memref<32x512xf32, #tpu.memory_space<vmem>>, vector<32x16xf32>,
      %c0_109 = arith.constant 0 : index
      %c655 = arith.constant 655 : index
      %125 = vector.load %arg7[%c0_109, %c655] : memref<32x768xf32, #tpu.memory_space<vmem>>, vector<32x16xf32>
      %c0_110 = arith.constant 0 : index
      %c480 = arith.constant 480 : index
      %126 = vector.load %arg6[%c0_110, %c480] : memref<32x512xf32, #tpu.memory_space<vmem>>, vector<32x16xf32>
      tpu.vector_store %arg6[%c0_110, %c480], %125 {strides = array<i32>} : memref<32x512xf32, #tpu.memory_space<vmem>>, vector<32x16xf32>,
      %c0_111 = arith.constant 0 : index
      %c673 = arith.constant 673 : index
      %127 = vector.load %arg7[%c0_111, %c673] : memref<32x768xf32, #tpu.memory_space<vmem>>, vector<32x16xf32>
      %c0_112 = arith.constant 0 : index
      %c496 = arith.constant 496 : index
      %128 = vector.load %arg6[%c0_112, %c496] : memref<32x512xf32, #tpu.memory_space<vmem>>, vector<32x16xf32>
      tpu.vector_store %arg6[%c0_112, %c496], %127 {strides = array<i32>} : memref<32x512xf32, #tpu.memory_space<vmem>>, vector<32x16xf32>,
    } else {
    }
    return
  }
  func.func @transform_0(%arg0: i32) -> (i32, i32) {
    %c0_i32 = arith.constant 0 : i32
    %c0_i32_0 = arith.constant 0 : i32
    %c0_i32_1 = arith.constant 0 : i32
    return %c0_i32, %c0_i32_0 : i32, i32
  }
  func.func @transform_1(%arg0: i32) -> (i32, i32, i32, i32) {
    %c0_i32 = arith.constant 0 : i32
    %c0_i32_0 = arith.constant 0 : i32
    %c0_i32_1 = arith.constant 0 : i32
    %c0_i32_2 = arith.constant 0 : i32
    return %arg0, %c0_i32, %c0_i32_0, %c0_i32_1 : i32, i32, i32, i32
  }
  func.func @transform_2(%arg0: i32) -> (i32, i32, i32) {
    %c0_i32 = arith.constant 0 : i32
    %c0_i32_0 = arith.constant 0 : i32
    %c0_i32_1 = arith.constant 0 : i32
    %c0_i32_2 = arith.constant 0 : i32
    return %c0_i32, %c0_i32_0, %c0_i32_1 : i32, i32, i32
  }
  func.func @transform_3(%arg0: i32) -> (i32, i32, i32) {
    %c0_i32 = arith.constant 0 : i32
    %c0_i32_0 = arith.constant 0 : i32
    %c0_i32_1 = arith.constant 0 : i32
    %c0_i32_2 = arith.constant 0 : i32
    return %c0_i32, %c0_i32_0, %c0_i32_1 : i32, i32, i32
  }
  func.func @transform_4(%arg0: i32) -> (i32, i32) {
    %c0_i32 = arith.constant 0 : i32
    %c0_i32_0 = arith.constant 0 : i32
    %c0_i32_1 = arith.constant 0 : i32
    return %c0_i32, %c0_i32_0 : i32, i32
  }
  func.func @transform_5(%arg0: i32) -> (i32, i32) {
    %c0_i32 = arith.constant 0 : i32
    %c0_i32_0 = arith.constant 0 : i32
    %c0_i32_1 = arith.constant 0 : i32
    return %c0_i32, %c0_i32_0 : i32, i32
  }
}

</mosaic_0001>

<llo_original>
// kernel: forward.1
$region0: #{forward.1}
  #allocation0 [shape = 'u32[]', space=smem, size = 0x4, offset = 0x4, fixed_abs, tag = 'smem constant byte address 0x4 - core index']
  #allocation1 [shape = 'u32[72,128]{1,0:T(1,128)}', space=vmem, size = 0x9000, scoped, tag = 'internal scratch']
  #allocation2 [shape = 'f32[32,768]{1,0:T(8,128)}', space=vmem, size = 0x18000, scoped, tag = 'scratch operand']
  %s0 = inlined_call_operand.vmem [shape: f32[32,768], index: 0, kind: input, shape index: {}]
  %s1 = inlined_call_operand.vmem [shape: f32[9,9,32,32], index: 1, kind: input, shape index: {}]
  %s2 = inlined_call_operand.vmem [shape: f32[2,32,1], index: 2, kind: input, shape index: {}]
  %s3 = inlined_call_operand.vmem [shape: f32[2,32,1], index: 3, kind: input, shape index: {}]
  %s4 = inlined_call_operand.vmem [shape: f32[1,768], index: 4, kind: input, shape index: {}]
  %s5 = inlined_call_operand.vmem [shape: f32[32,512], index: 5, kind: output, shape index: {}]
  %s6 = sld [smem:[#allocation0]]
  $region73: #{forward.1} parent=0
    _
  %s8 = ssub.s32 1, %s6
  %s9 = scalar_select 0, %s8, %s6
  loop: start=0, step=1, limit=11
  $region2: #{forward.1} parent=0 // loop_pre_header
    _
  $region3: #{forward.1} parent=0 // loop_header
    %s11 = sphi 0, %s15
    %p12 = scmp.ge.s32.totalorder %s11, 11
    %s19 = sphi 0, %s19
    %s21 = sphi 0, %s19
    %s22 = sphi 0, %s21
    %s36 = sphi 0, %s22
    %s42 = sphi 0, %s44
    %s45 = sphi 0, %s42
    %s46 = sphi 0, %s45
    %s62 = sphi 0, %s46
    %s66 = sphi 0, %s66
    %s68 = sphi 0, %s66
    %s69 = sphi 0, %s68
    %s83 = sphi 0, %s69
    %s87 = sphi 0, %s87
    %s89 = sphi 0, %s87
    %s90 = sphi 0, %s89
    %s104 = sphi 0, %s90
    %s108 = sphi 0, %s108
    %s110 = sphi 0, %s108
    %s111 = sphi 0, %s110
    %s125 = sphi 0, %s111
    %s129 = sphi 0, %s129
    %s131 = sphi 0, %s129
    %s132 = sphi 0, %s131
    %s146 = sphi 0, %s132
  $region4: #{forward.1} parent=0 // loop_header_branch
    %14 = sbr.rel (%p12) target = $region8
  $region5: #{forward.1} parent=0 // loop_body
    %s16 = ssub.s32 %s11, 1
    %s17 = ssub.s32 %s11, 2
    %s18 = sadd.s32 %s11, 1
    %s20 = sadd.s32 %s19, 1
    %p23 = scmp.eq.s32.totalorder %s11, 8
    %p24 = scmp.ne.s32.totalorder %s19, %s21
    %p25 = scmp.eq.s32.totalorder %s11, 0
    %p26 = por %p24, %p25
    %p27 = scmp.ne.s32.totalorder %s19, %s21
    %p28 = scmp.eq.s32.totalorder %s16, 8
    %p29 = por %p27, %p28
    %p30 = scmp.ne.s32.totalorder %s21, %s22
    %p31 = scmp.eq.s32.totalorder %s16, 0
    %p32 = por %p30, %p31
    %p33 = scmp.ne.s32.totalorder %s21, %s22
    %p34 = scmp.eq.s32.totalorder %s17, 8
    %p35 = por %p33, %p34
    %p37 = scmp.ne.s32.totalorder %s22, %s36
    %p38 = scmp.eq.s32.totalorder %s17, 0
    %p39 = por %p37, %p38
    %s40 = ssub.s32 %s11, %s18
    %p41 = scmp.eq.s32.totalorder %s40, 0
    %s43 = sadd.s32 %s42, 1
    %s44 = scalar_select %p41, %s42, %s43
    %p47 = pneg %p41
    %p48 = scmp.eq.s32.totalorder %s11, 8
    %p49 = por %p47, %p48
    %p50 = scmp.ne.s32.totalorder %s42, %s45
    %p51 = scmp.eq.s32.totalorder %s11, 0
    %p52 = por %p50, %p51
    %p53 = scmp.ne.s32.totalorder %s42, %s45
    %p54 = scmp.eq.s32.totalorder %s16, 8
    %p55 = por %p53, %p54
    %p56 = scmp.ne.s32.totalorder %s45, %s46
    %p57 = scmp.eq.s32.totalorder %s16, 0
    %p58 = por %p56, %p57
    %p59 = scmp.ne.s32.totalorder %s45, %s46
    %p60 = scmp.eq.s32.totalorder %s17, 8
    %p61 = por %p59, %p60
    %p63 = scmp.ne.s32.totalorder %s46, %s62
    %p64 = scmp.eq.s32.totalorder %s17, 0
    %p65 = por %p63, %p64
    %s67 = sadd.s32 %s66, 1
    %p70 = scmp.eq.s32.totalorder %s11, 8
    %p71 = scmp.ne.s32.totalorder %s66, %s68
    %p72 = scmp.eq.s32.totalorder %s11, 0
    %p73 = por %p71, %p72
    %p74 = scmp.ne.s32.totalorder %s66, %s68
    %p75 = scmp.eq.s32.totalorder %s16, 8
    %p76 = por %p74, %p75
    %p77 = scmp.ne.s32.totalorder %s68, %s69
    %p78 = scmp.eq.s32.totalorder %s16, 0
    %p79 = por %p77, %p78
    %p80 = scmp.ne.s32.totalorder %s68, %s69
    %p81 = scmp.eq.s32.totalorder %s17, 8
    %p82 = por %p80, %p81
    %p84 = scmp.ne.s32.totalorder %s69, %s83
    %p85 = scmp.eq.s32.totalorder %s17, 0
    %p86 = por %p84, %p85
    %s88 = sadd.s32 %s87, 1
    %p91 = scmp.eq.s32.totalorder %s11, 8
    %p92 = scmp.ne.s32.totalorder %s87, %s89
    %p93 = scmp.eq.s32.totalorder %s11, 0
    %p94 = por %p92, %p93
    %p95 = scmp.ne.s32.totalorder %s87, %s89
    %p96 = scmp.eq.s32.totalorder %s16, 8
    %p97 = por %p95, %p96
    %p98 = scmp.ne.s32.totalorder %s89, %s90
    %p99 = scmp.eq.s32.totalorder %s16, 0
    %p100 = por %p98, %p99
    %p101 = scmp.ne.s32.totalorder %s89, %s90
    %p102 = scmp.eq.s32.totalorder %s17, 8
    %p103 = por %p101, %p102
    %p105 = scmp.ne.s32.totalorder %s90, %s104
    %p106 = scmp.eq.s32.totalorder %s17, 0
    %p107 = por %p105, %p106
    %s109 = sadd.s32 %s108, 1
    %p112 = scmp.eq.s32.totalorder %s11, 8
    %p113 = scmp.ne.s32.totalorder %s108, %s110
    %p114 = scmp.eq.s32.totalorder %s11, 0
    %p115 = por %p113, %p114
    %p116 = scmp.ne.s32.totalorder %s108, %s110
    %p117 = scmp.eq.s32.totalorder %s16, 8
    %p118 = por %p116, %p117
    %p119 = scmp.ne.s32.totalorder %s110, %s111
    %p120 = scmp.eq.s32.totalorder %s16, 0
    %p121 = por %p119, %p120
    %p122 = scmp.ne.s32.totalorder %s110, %s111
    %p123 = scmp.eq.s32.totalorder %s17, 8
    %p124 = por %p122, %p123
    %p126 = scmp.ne.s32.totalorder %s111, %s125
    %p127 = scmp.eq.s32.totalorder %s17, 0
    %p128 = por %p126, %p127
    %s130 = sadd.s32 %s129, 1
    %p133 = scmp.eq.s32.totalorder %s11, 8
    %p134 = scmp.ne.s32.totalorder %s129, %s131
    %p135 = scmp.eq.s32.totalorder %s11, 0
    %p136 = por %p134, %p135
    %p137 = scmp.ne.s32.totalorder %s129, %s131
    %p138 = scmp.eq.s32.totalorder %s16, 8
    %p139 = por %p137, %p138
    %p140 = scmp.ne.s32.totalorder %s131, %s132
    %p141 = scmp.eq.s32.totalorder %s16, 0
    %p142 = por %p140, %p141
    %p143 = scmp.ne.s32.totalorder %s131, %s132
    %p144 = scmp.eq.s32.totalorder %s17, 8
    %p145 = por %p143, %p144
    %p147 = scmp.ne.s32.totalorder %s132, %s146
    %p148 = scmp.eq.s32.totalorder %s17, 0
    %p149 = por %p147, %p148
    %p150 = scmp.le.s32.totalorder 1, %s11
    %p151 = scmp.lt.s32.totalorder %s11, 10
    %p152 = pnand %p150, %p151
    %p153 = pneg %p152
    // Predicated region
    $region9: #{forward.1} parent=5 // pred_check
      _
    $region10: #{forward.1} parent=5 // pred_check_branch
      %155 = sbr.rel (%p152) target = $region12
    $region11: #{forward.1} parent=5 // pred_region
      %s156 = ssub.s32 %s11, 1
      // Predicated region
      $region13: #{forward.1} parent=11 // pred_check
        %p157 = pneg %p32
      $region14: #{forward.1} parent=11 // pred_check_branch
        %159 = sbr.rel (%p157) target = $region16
      $region15: #{forward.1} parent=11 // pred_region
        _
      $region16: #{forward.1} parent=11 // pred_fallthru
        _
      // Predicated region
      $region17: #{forward.1} parent=11 // pred_check
        %p160 = pneg %p79
      $region18: #{forward.1} parent=11 // pred_check_branch
        %162 = sbr.rel (%p160) target = $region20
      $region19: #{forward.1} parent=11 // pred_region
        _
      $region20: #{forward.1} parent=11 // pred_fallthru
        _
      // Predicated region
      $region21: #{forward.1} parent=11 // pred_check
        %p163 = pneg %p100
      $region22: #{forward.1} parent=11 // pred_check_branch
        %165 = sbr.rel (%p163) target = $region24
      $region23: #{forward.1} parent=11 // pred_region
        _
      $region24: #{forward.1} parent=11 // pred_fallthru
        _
      // Predicated region
      $region25: #{forward.1} parent=11 // pred_check
        %p166 = pneg %p121
      $region26: #{forward.1} parent=11 // pred_check_branch
        %168 = sbr.rel (%p166) target = $region28
      $region27: #{forward.1} parent=11 // pred_region
        _
      $region28: #{forward.1} parent=11 // pred_fallthru
        _
    $region12: #{forward.1} parent=5 // pred_fallthru
      _
    %p169 = scmp.lt.s32.totalorder %s11, 9
    // Predicated region
    $region29: #{forward.1} parent=5 // pred_check
      %p170 = pneg %p169
    $region30: #{forward.1} parent=5 // pred_check_branch
      %172 = sbr.rel (%p170) target = $region32
    $region31: #{forward.1} parent=5 // pred_region
      // Predicated region
      $region33: #{forward.1} parent=31 // pred_check
        %p173 = pneg %p52
      $region34: #{forward.1} parent=31 // pred_check_branch
        %175 = sbr.rel (%p173) target = $region36
      $region35: #{forward.1} parent=31 // pred_region
        %p176 = scmp.lt.s32.totalorder %s11, 8
        %s177 = scalar_select %p176, %s11, 8
        %s178 = smul.addr %s177, 36
        %s179 = smul.addr %s178, 8
        %s180 = scalar_lea.vmem %s1, %s179
      $region36: #{forward.1} parent=31 // pred_fallthru
        _
    $region32: #{forward.1} parent=5 // pred_fallthru
      _
    %p181 = scmp.le.s32.totalorder 1, %s11
    %p182 = scmp.lt.s32.totalorder %s11, 10
    %p183 = pnand %p181, %p182
    %p184 = pneg %p183
    // Predicated region
    $region37: #{forward.1} parent=5 // pred_check
      _
    $region38: #{forward.1} parent=5 // pred_check_branch
      %186 = sbr.rel (%p183) target = $region40
    $region39: #{forward.1} parent=5 // pred_region
      %s187 = ssub.s32 %s11, 1
      %p188 = pneg %p32
      %p189 = pneg %p29
      %p190 = scmp.lt.s32.totalorder %s16, 8
      %s191 = scalar_select %p190, %s16, 8
      %s192 = smul.addr %s191, 36
      %s193 = smul.addr %s192, 8
      %s194 = scalar_lea.vmem %s1, %s193
      %p195 = pneg %p58
      %p196 = pneg %p55
      %p197 = pneg %p79
      %p198 = pneg %p76
      %p199 = pneg %p100
      %p200 = pneg %p97
      %p201 = pneg %p121
      %p202 = pneg %p118
      %p203 = pneg %p142
      %p204 = pneg %p139
      %p205 = scmp.lt.s32.totalorder %s16, 8
      %s206 = scalar_select %p205, %s16, 8
      %s207 = smul.addr %s206, 36
      %s208 = smul.addr %s207, 8
      %s209 = scalar_lea.vmem %s1, %s208
      %p210 = scmp.eq.s32.totalorder %s16, 0
      // Predicated region
      $region41: #{forward.1} parent=39 // pred_check
        %p211 = pneg %p210
      $region42: #{forward.1} parent=39 // pred_check_branch
        %213 = sbr.rel (%p211) target = $region44
      $region43: #{forward.1} parent=39 // pred_region
        %v214 = vld [vmem:[%s0] sm:$0xff]
        %v215 = vld [vmem:[%s0 + $0x8] sm:$0xff]
        %v216 = vld [vmem:[%s0 + $0x10] sm:$0xff]
        %v217 = vld [vmem:[%s0 + $0x18] sm:$0xff]
        %v218 = vld [vmem:[%s0 + $0x20] sm:$0xff]
        %v219 = vld [vmem:[%s0 + $0x28] sm:$0xff]
        %v220 = vld [vmem:[%s0 + $0x30] sm:$0xff]
        %v221 = vld [vmem:[%s0 + $0x38] sm:$0xff]
        %v222 = vld [vmem:[%s0 + $0x40] sm:$0xff]
        %v223 = vld [vmem:[%s0 + $0x48] sm:$0xff]
        %v224 = vld [vmem:[%s0 + $0x50] sm:$0xff]
        %v225 = vld [vmem:[%s0 + $0x58] sm:$0xff]
        %v226 = vld [vmem:[%s0 + $0x60] sm:$0xff]
        %v227 = vld [vmem:[%s0 + $0x68] sm:$0xff]
        %v228 = vld [vmem:[%s0 + $0x70] sm:$0xff]
        %v229 = vld [vmem:[%s0 + $0x78] sm:$0xff]
        %v230 = vld [vmem:[%s0 + $0x80] sm:$0xff]
        %v231 = vld [vmem:[%s0 + $0x88] sm:$0xff]
        %v232 = vld [vmem:[%s0 + $0x90] sm:$0xff]
        %v233 = vld [vmem:[%s0 + $0x98] sm:$0xff]
        %v234 = vld [vmem:[%s0 + $0xa0] sm:$0xff]
        %v235 = vld [vmem:[%s0 + $0xa8] sm:$0xff]
        %v236 = vld [vmem:[%s0 + $0xb0] sm:$0xff]
        %v237 = vld [vmem:[%s0 + $0xb8] sm:$0xff]
        %238 = vst [vmem:[#allocation2] sm:$0xff] %v214
        %239 = vst [vmem:[#allocation2 + $0x8] sm:$0xff] %v215
        %240 = vst [vmem:[#allocation2 + $0x10] sm:$0xff] %v216
        %241 = vst [vmem:[#allocation2 + $0x18] sm:$0xff] %v217
        %242 = vst [vmem:[#allocation2 + $0x20] sm:$0xff] %v218
        %243 = vst [vmem:[#allocation2 + $0x28] sm:$0xff] %v219
        %244 = vst [vmem:[#allocation2 + $0x30] sm:$0xff] %v220
        %245 = vst [vmem:[#allocation2 + $0x38] sm:$0xff] %v221
        %246 = vst [vmem:[#allocation2 + $0x40] sm:$0xff] %v222
        %247 = vst [vmem:[#allocation2 + $0x48] sm:$0xff] %v223
        %248 = vst [vmem:[#allocation2 + $0x50] sm:$0xff] %v224
        %249 = vst [vmem:[#allocation2 + $0x58] sm:$0xff] %v225
        %250 = vst [vmem:[#allocation2 + $0x60] sm:$0xff] %v226
        %251 = vst [vmem:[#allocation2 + $0x68] sm:$0xff] %v227
        %252 = vst [vmem:[#allocation2 + $0x70] sm:$0xff] %v228
        %253 = vst [vmem:[#allocation2 + $0x78] sm:$0xff] %v229
        %254 = vst [vmem:[#allocation2 + $0x80] sm:$0xff] %v230
        %255 = vst [vmem:[#allocation2 + $0x88] sm:$0xff] %v231
        %256 = vst [vmem:[#allocation2 + $0x90] sm:$0xff] %v232
        %257 = vst [vmem:[#allocation2 + $0x98] sm:$0xff] %v233
        %258 = vst [vmem:[#allocation2 + $0xa0] sm:$0xff] %v234
        %259 = vst [vmem:[#allocation2 + $0xa8] sm:$0xff] %v235
        %260 = vst [vmem:[#allocation2 + $0xb0] sm:$0xff] %v236
        %261 = vst [vmem:[#allocation2 + $0xb8] sm:$0xff] %v237
      $region44: #{forward.1} parent=39 // pred_fallthru
        _
      %p262 = scmp.ge.s32.totalorder %s16, 7
      // Predicated region
      $region45: #{forward.1} parent=39 // pred_check
        %p263 = pneg %p262
      $region46: #{forward.1} parent=39 // pred_check_branch
        %265 = sbr.rel (%p263) target = $region48
      $region47: #{forward.1} parent=39 // pred_region
        %v266 = vld [vmem:[#allocation2] sm:$0xff]
        %v267 = vld [vmem:[#allocation2 + $0x8] sm:$0xff]
        %v268 = vld [vmem:[#allocation2 + $0x10] sm:$0xff]
        %v269 = vld [vmem:[#allocation2 + $0x18] sm:$0xff]
        %v270 = vld [vmem:[#allocation2 + $0x20] sm:$0xff]
        %v271 = vld [vmem:[#allocation2 + $0x28] sm:$0xff]
        %v272 = vld [vmem:[#allocation2 + $0x30] sm:$0xff]
        %v273 = vld [vmem:[#allocation2 + $0x38] sm:$0xff]
        %v274 = vld [vmem:[#allocation2 + $0x40] sm:$0xff]
        %v275 = vld [vmem:[#allocation2 + $0x48] sm:$0xff]
        %v276 = vld [vmem:[#allocation2 + $0x50] sm:$0xff]
        %v277 = vld [vmem:[#allocation2 + $0x58] sm:$0xff]
        %v278 = vld [vmem:[#allocation2 + $0x60] sm:$0xff]
        %v279 = vld [vmem:[#allocation2 + $0x68] sm:$0xff]
        %v280 = vld [vmem:[#allocation2 + $0x70] sm:$0xff]
        %v281 = vld [vmem:[#allocation2 + $0x78] sm:$0xff]
        %v282 = vld [vmem:[#allocation2 + $0x80] sm:$0xff]
        %v283 = vld [vmem:[#allocation2 + $0x88] sm:$0xff]
        %v284 = vld [vmem:[#allocation2 + $0x90] sm:$0xff]
        %v285 = vld [vmem:[#allocation2 + $0x98] sm:$0xff]
        %v286 = vld [vmem:[#allocation2 + $0xa0] sm:$0xff]
        %v287 = vld [vmem:[#allocation2 + $0xa8] sm:$0xff]
        %v288 = vld [vmem:[#allocation2 + $0xb0] sm:$0xff]
        %v289 = vld [vmem:[#allocation2 + $0xb8] sm:$0xff]
        %v290 = vmax.f32 %v266, 0.0
        %v291 = vmax.f32 %v267, 0.0
        %v292 = vmax.f32 %v268, 0.0
        %v293 = vmax.f32 %v269, 0.0
        %v294 = vmax.f32 %v270, 0.0
        %v295 = vmax.f32 %v271, 0.0
        %v296 = vmax.f32 %v272, 0.0
        %v297 = vmax.f32 %v273, 0.0
        %v298 = vmax.f32 %v274, 0.0
        %v299 = vmax.f32 %v275, 0.0
        %v300 = vmax.f32 %v276, 0.0
        %v301 = vmax.f32 %v277, 0.0
        %v302 = vmax.f32 %v278, 0.0
        %v303 = vmax.f32 %v279, 0.0
        %v304 = vmax.f32 %v280, 0.0
        %v305 = vmax.f32 %v281, 0.0
        %v306 = vmax.f32 %v282, 0.0
        %v307 = vmax.f32 %v283, 0.0
        %v308 = vmax.f32 %v284, 0.0
        %v309 = vmax.f32 %v285, 0.0
        %v310 = vmax.f32 %v286, 0.0
        %v311 = vmax.f32 %v287, 0.0
        %v312 = vmax.f32 %v288, 0.0
        %v313 = vmax.f32 %v289, 0.0
        %314 = vst [vmem:[#allocation2] sm:$0xff] %v290
        %315 = vst [vmem:[#allocation2 + $0x8] sm:$0xff] %v291
        %316 = vst [vmem:[#allocation2 + $0x10] sm:$0xff] %v292
        %317 = vst [vmem:[#allocation2 + $0x18] sm:$0xff] %v293
        %318 = vst [vmem:[#allocation2 + $0x20] sm:$0xff] %v294
        %319 = vst [vmem:[#allocation2 + $0x28] sm:$0xff] %v295
        %320 = vst [vmem:[#allocation2 + $0x30] sm:$0xff] %v296
        %321 = vst [vmem:[#allocation2 + $0x38] sm:$0xff] %v297
        %322 = vst [vmem:[#allocation2 + $0x40] sm:$0xff] %v298
        %323 = vst [vmem:[#allocation2 + $0x48] sm:$0xff] %v299
        %324 = vst [vmem:[#allocation2 + $0x50] sm:$0xff] %v300
        %325 = vst [vmem:[#allocation2 + $0x58] sm:$0xff] %v301
        %326 = vst [vmem:[#allocation2 + $0x60] sm:$0xff] %v302
        %327 = vst [vmem:[#allocation2 + $0x68] sm:$0xff] %v303
        %328 = vst [vmem:[#allocation2 + $0x70] sm:$0xff] %v304
        %329 = vst [vmem:[#allocation2 + $0x78] sm:$0xff] %v305
        %330 = vst [vmem:[#allocation2 + $0x80] sm:$0xff] %v306
        %331 = vst [vmem:[#allocation2 + $0x88] sm:$0xff] %v307
        %332 = vst [vmem:[#allocation2 + $0x90] sm:$0xff] %v308
        %333 = vst [vmem:[#allocation2 + $0x98] sm:$0xff] %v309
        %334 = vst [vmem:[#allocation2 + $0xa0] sm:$0xff] %v310
        %335 = vst [vmem:[#allocation2 + $0xa8] sm:$0xff] %v311
        %336 = vst [vmem:[#allocation2 + $0xb0] sm:$0xff] %v312
        %337 = vst [vmem:[#allocation2 + $0xb8] sm:$0xff] %v313
      $region48: #{forward.1} parent=39 // pred_fallthru
        _
      %v338 = vld [vmem:[#allocation2] sm:$0xff]
      %v339 = vld [vmem:[#allocation2 + $0x8] sm:$0xff]
      %v340 = vld [vmem:[#allocation2 + $0x10] sm:$0xff]
      %v341 = vld [vmem:[#allocation2 + $0x18] sm:$0xff]
      %v342 = vld [vmem:[#allocation2 + $0x20] sm:$0xff]
      %v343 = vld [vmem:[#allocation2 + $0x28] sm:$0xff]
      %v344 = vld [vmem:[#allocation2 + $0x30] sm:$0xff]
      %v345 = vld [vmem:[#allocation2 + $0x38] sm:$0xff]
      %v346 = vld [vmem:[#allocation2 + $0x40] sm:$0xff]
      %v347 = vld [vmem:[#allocation2 + $0x48] sm:$0xff]
      %v348 = vld [vmem:[#allocation2 + $0x50] sm:$0xff]
      %v349 = vld [vmem:[#allocation2 + $0x58] sm:$0xff]
      %v350 = vld [vmem:[#allocation2 + $0x60] sm:$0xff]
      %v351 = vld [vmem:[#allocation2 + $0x68] sm:$0xff]
      %v352 = vld [vmem:[#allocation2 + $0x70] sm:$0xff]
      %v353 = vld [vmem:[#allocation2 + $0x78] sm:$0xff]
      %v354 = vld [vmem:[#allocation2 + $0x80] sm:$0xff]
      %v355 = vld [vmem:[#allocation2 + $0x88] sm:$0xff]
      %v356 = vld [vmem:[#allocation2 + $0x90] sm:$0xff]
      %v357 = vld [vmem:[#allocation2 + $0x98] sm:$0xff]
      %v358 = vld [vmem:[#allocation2 + $0xa0] sm:$0xff]
      %v359 = vld [vmem:[#allocation2 + $0xa8] sm:$0xff]
      %v360 = vld [vmem:[#allocation2 + $0xb0] sm:$0xff]
      %v361 = vld [vmem:[#allocation2 + $0xb8] sm:$0xff]
      %v362 = vld [vmem:[%s4] sm:$0x3f]
      %v364 = vperm.slane %v362, 0
      %v365 = vperm.slane %v362, 1
      %v366 = vperm.slane %v362, 2
      %v367 = vperm.slane %v362, 3
      %v368 = vperm.slane %v362, 4
      %v369 = vperm.slane %v362, 5
      %376 = vrot.lane.b32.xlu0 %v338, 19
      %v377 = vpop.permute.xlu0 %376
      %378 = vrot.lane.b32.xlu0 %v344, 19
      %v379 = vpop.permute.xlu0 %378
      %380 = vrot.lane.b32.xlu0 %v350, 19
      %v381 = vpop.permute.xlu0 %380
      %382 = vrot.lane.b32.xlu0 %v356, 19
      %v383 = vpop.permute.xlu0 %382
      %384 = vrot.lane.b32.xlu0 %v339, 19
      %v385 = vpop.permute.xlu0 %384
      %386 = vrot.lane.b32.xlu0 %v345, 19
      %v387 = vpop.permute.xlu0 %386
      %388 = vrot.lane.b32.xlu0 %v351, 19
      %v389 = vpop.permute.xlu0 %388
      %390 = vrot.lane.b32.xlu0 %v357, 19
      %v391 = vpop.permute.xlu0 %390
      %392 = vrot.lane.b32.xlu0 %v340, 19
      %v393 = vpop.permute.xlu0 %392
      %394 = vrot.lane.b32.xlu0 %v346, 19
      %v395 = vpop.permute.xlu0 %394
      %396 = vrot.lane.b32.xlu0 %v352, 19
      %v397 = vpop.permute.xlu0 %396
      %398 = vrot.lane.b32.xlu0 %v358, 19
      %v399 = vpop.permute.xlu0 %398
      %400 = vrot.lane.b32.xlu0 %v341, 19
      %v401 = vpop.permute.xlu0 %400
      %402 = vrot.lane.b32.xlu0 %v347, 19
      %v403 = vpop.permute.xlu0 %402
      %404 = vrot.lane.b32.xlu0 %v353, 19
      %v405 = vpop.permute.xlu0 %404
      %406 = vrot.lane.b32.xlu0 %v359, 19
      %v407 = vpop.permute.xlu0 %406
      %408 = vrot.lane.b32.xlu0 %v342, 19
      %v409 = vpop.permute.xlu0 %408
      %410 = vrot.lane.b32.xlu0 %v348, 19
      %v411 = vpop.permute.xlu0 %410
      %412 = vrot.lane.b32.xlu0 %v354, 19
      %v413 = vpop.permute.xlu0 %412
      %414 = vrot.lane.b32.xlu0 %v360, 19
      %v415 = vpop.permute.xlu0 %414
      %416 = vrot.lane.b32.xlu0 %v343, 19
      %v417 = vpop.permute.xlu0 %416
      %418 = vrot.lane.b32.xlu0 %v349, 19
      %v419 = vpop.permute.xlu0 %418
      %420 = vrot.lane.b32.xlu0 %v355, 19
      %v421 = vpop.permute.xlu0 %420
      %422 = vrot.lane.b32.xlu0 %v361, 19
      %v423 = vpop.permute.xlu0 %422
      %v424 = vlaneseq
      %v425 = vand.u32 %v424, 127
      %vm426 = vcmp.lt.s32.totalorder %v425, 19
      %v427 = vsel %vm426, %v409, %v417
      %v428 = vsel %vm426, %v411, %v419
      %v429 = vsel %vm426, %v413, %v421
      %v430 = vsel %vm426, %v415, %v423
      %v431 = vsel %vm426, %v401, %v409
      %v432 = vsel %vm426, %v403, %v411
      %v433 = vsel %vm426, %v405, %v413
      %v434 = vsel %vm426, %v407, %v415
      %v435 = vsel %vm426, %v393, %v401
      %v436 = vsel %vm426, %v395, %v403
      %v437 = vsel %vm426, %v397, %v405
      %v438 = vsel %vm426, %v399, %v407
      %v439 = vsel %vm426, %v385, %v393
      %v440 = vsel %vm426, %v387, %v395
      %v441 = vsel %vm426, %v389, %v397
      %v442 = vsel %vm426, %v391, %v399
      %v443 = vsel %vm426, %v377, %v385
      %v444 = vsel %vm426, %v379, %v387
      %v445 = vsel %vm426, %v381, %v389
      %v446 = vsel %vm426, %v383, %v391
      %v447 = vsel %vm426, %v417, %v377
      %v448 = vsel %vm426, %v419, %v379
      %v449 = vsel %vm426, %v421, %v381
      %v450 = vsel %vm426, %v423, %v383
      %v451 = vld [vmem:[%s209] sm:$0xff]
      %v452 = vld [vmem:[%s209 + $0x8] sm:$0xff]
      %v453 = vld [vmem:[%s209 + $0x10] sm:$0xff]
      %v454 = vld [vmem:[%s209 + $0x18] sm:$0xff]
      %455 = vrot.lane.b32.xlu0 %v338, 18
      %v456 = vpop.permute.xlu0 %455
      %457 = vrot.lane.b32.xlu0 %v344, 18
      %v458 = vpop.permute.xlu0 %457
      %459 = vrot.lane.b32.xlu0 %v350, 18
      %v460 = vpop.permute.xlu0 %459
      %461 = vrot.lane.b32.xlu0 %v356, 18
      %v462 = vpop.permute.xlu0 %461
      %463 = vrot.lane.b32.xlu0 %v339, 18
      %v464 = vpop.permute.xlu0 %463
      %465 = vrot.lane.b32.xlu0 %v345, 18
      %v466 = vpop.permute.xlu0 %465
      %467 = vrot.lane.b32.xlu0 %v351, 18
      %v468 = vpop.permute.xlu0 %467
      %469 = vrot.lane.b32.xlu0 %v357, 18
      %v470 = vpop.permute.xlu0 %469
      %471 = vrot.lane.b32.xlu0 %v340, 18
      %v472 = vpop.permute.xlu0 %471
      %473 = vrot.lane.b32.xlu0 %v346, 18
      %v474 = vpop.permute.xlu0 %473
      %475 = vrot.lane.b32.xlu0 %v352, 18
      %v476 = vpop.permute.xlu0 %475
      %477 = vrot.lane.b32.xlu0 %v358, 18
      %v478 = vpop.permute.xlu0 %477
      %479 = vrot.lane.b32.xlu0 %v341, 18
      %v480 = vpop.permute.xlu0 %479
      %481 = vrot.lane.b32.xlu0 %v347, 18
      %v482 = vpop.permute.xlu0 %481
      %483 = vrot.lane.b32.xlu0 %v353, 18
      %v484 = vpop.permute.xlu0 %483
      %485 = vrot.lane.b32.xlu0 %v359, 18
      %v486 = vpop.permute.xlu0 %485
      %487 = vrot.lane.b32.xlu0 %v342, 18
      %v488 = vpop.permute.xlu0 %487
      %489 = vrot.lane.b32.xlu0 %v348, 18
      %v490 = vpop.permute.xlu0 %489
      %491 = vrot.lane.b32.xlu0 %v354, 18
      %v492 = vpop.permute.xlu0 %491
      %493 = vrot.lane.b32.xlu0 %v360, 18
      %v494 = vpop.permute.xlu0 %493
      %495 = vrot.lane.b32.xlu0 %v343, 18
      %v496 = vpop.permute.xlu0 %495
      %497 = vrot.lane.b32.xlu0 %v349, 18
      %v498 = vpop.permute.xlu0 %497
      %499 = vrot.lane.b32.xlu0 %v355, 18
      %v500 = vpop.permute.xlu0 %499
      %501 = vrot.lane.b32.xlu0 %v361, 18
      %v502 = vpop.permute.xlu0 %501
      %vm503 = vcmp.lt.s32.totalorder %v425, 18
      %v504 = vsel %vm503, %v488, %v496
      %v505 = vsel %vm503, %v490, %v498
      %v506 = vsel %vm503, %v492, %v500
      %v507 = vsel %vm503, %v494, %v502
      %v508 = vsel %vm503, %v480, %v488
      %v509 = vsel %vm503, %v482, %v490
      %v510 = vsel %vm503, %v484, %v492
      %v511 = vsel %vm503, %v486, %v494
      %v512 = vsel %vm503, %v472, %v480
      %v513 = vsel %vm503, %v474, %v482
      %v514 = vsel %vm503, %v476, %v484
      %v515 = vsel %vm503, %v478, %v486
      %v516 = vsel %vm503, %v464, %v472
      %v517 = vsel %vm503, %v466, %v474
      %v518 = vsel %vm503, %v468, %v476
      %v519 = vsel %vm503, %v470, %v478
      %v520 = vsel %vm503, %v456, %v464
      %v521 = vsel %vm503, %v458, %v466
      %v522 = vsel %vm503, %v460, %v468
      %v523 = vsel %vm503, %v462, %v470
      %v524 = vsel %vm503, %v496, %v456
      %v525 = vsel %vm503, %v498, %v458
      %v526 = vsel %vm503, %v500, %v460
      %v527 = vsel %vm503, %v502, %v462
      %s528 = scalar_lea.vmem %s209, 32
      %v529 = vld [vmem:[%s528] sm:$0xff]
      %v530 = vld [vmem:[%s528 + $0x8] sm:$0xff]
      %v531 = vld [vmem:[%s528 + $0x10] sm:$0xff]
      %v532 = vld [vmem:[%s528 + $0x18] sm:$0xff]
      %vm533 = vcmask 261120
      %v535 = vsel %vm533, %v529, 0
      %v538 = vsel %vm533, %v530, 0
      %v541 = vsel %vm533, %v531, 0
      %v544 = vsel %vm533, %v532, 0
      %546 = vmatpush.msra.mxu0 0.0
      %547 = vmatpush.msra.mxu0 0.0
      %548 = vmatpush.msra.mxu0 0.0
      %549 = vmatpush.msra.mxu0 0.0
      %550 = vmatpush.msra.mxu0 0.0
      %551 = vmatpush.msra.mxu0 0.0
      %552 = vmatpush.msra.mxu0 0.0
      %553 = vmatpush.msra.mxu0 0.0
      %554 = vmatpush.msra.mxu0 0.0
      %555 = vmatpush.msra.mxu0 0.0
      %556 = vmatpush.msra.mxu0 0.0
      %557 = vmatpush.msra.mxu0 0.0
      %558 = vmatpush.msra.mxu0 %v527
      %559 = vmatpush.msra.mxu0 %v526
      %560 = vmatpush.msra.mxu0 %v525
      %561 = vmatpush.msra.mxu0 %v524
      %562 = vmatmul.f32.gmra.mxu0 %v535
      %v563 = vpop.f32.mrf.mxu0
      %v564 = vadd.f32 0.0, %v563
      %565 = vmatmul.f32.gmra.mxu0 %v538
      %v566 = vpop.f32.mrf.mxu0
      %v567 = vadd.f32 0.0, %v566
      %568 = vmatmul.f32.gmra.mxu0 %v541
      %v569 = vpop.f32.mrf.mxu0
      %v570 = vadd.f32 0.0, %v569
      %571 = vmatmul.f32.gmra.mxu0 %v544
      %v572 = vpop.f32.mrf.mxu0
      %v573 = vadd.f32 0.0, %v572
      %574 = vdwg.mxu0
      %575 = vmatpush.msra.mxu0 0.0
      %576 = vmatpush.msra.mxu0 0.0
      %577 = vmatpush.msra.mxu0 0.0
      %578 = vmatpush.msra.mxu0 0.0
      %579 = vmatpush.msra.mxu0 0.0
      %580 = vmatpush.msra.mxu0 0.0
      %581 = vmatpush.msra.mxu0 0.0
      %582 = vmatpush.msra.mxu0 0.0
      %583 = vmatpush.msra.mxu0 0.0
      %584 = vmatpush.msra.mxu0 0.0
      %585 = vmatpush.msra.mxu0 0.0
      %586 = vmatpush.msra.mxu0 0.0
      %587 = vmatpush.msra.mxu0 %v523
      %588 = vmatpush.msra.mxu0 %v522
      %589 = vmatpush.msra.mxu0 %v521
      %590 = vmatpush.msra.mxu0 %v520
      %591 = vmatmul.f32.gmra.mxu0 %v535
      %v592 = vpop.f32.mrf.mxu0
      %v593 = vadd.f32 0.0, %v592
      %594 = vmatmul.f32.gmra.mxu0 %v538
      %v595 = vpop.f32.mrf.mxu0
      %v596 = vadd.f32 0.0, %v595
      %597 = vmatmul.f32.gmra.mxu0 %v541
      %v598 = vpop.f32.mrf.mxu0
      %v599 = vadd.f32 0.0, %v598
      %600 = vmatmul.f32.gmra.mxu0 %v544
      %v601 = vpop.f32.mrf.mxu0
      %v602 = vadd.f32 0.0, %v601
      %603 = vdwg.mxu0
      %604 = vmatpush.msra.mxu0 0.0
      %605 = vmatpush.msra.mxu0 0.0
      %606 = vmatpush.msra.mxu0 0.0
      %607 = vmatpush.msra.mxu0 0.0
      %608 = vmatpush.msra.mxu0 0.0
      %609 = vmatpush.msra.mxu0 0.0
      %610 = vmatpush.msra.mxu0 0.0
      %611 = vmatpush.msra.mxu0 0.0
      %612 = vmatpush.msra.mxu0 0.0
      %613 = vmatpush.msra.mxu0 0.0
      %614 = vmatpush.msra.mxu0 0.0
      %615 = vmatpush.msra.mxu0 0.0
      %616 = vmatpush.msra.mxu0 %v519
      %617 = vmatpush.msra.mxu0 %v518
      %618 = vmatpush.msra.mxu0 %v517
      %619 = vmatpush.msra.mxu0 %v516
      %620 = vmatmul.f32.gmra.mxu0 %v535
      %v621 = vpop.f32.mrf.mxu0
      %v622 = vadd.f32 0.0, %v621
      %623 = vmatmul.f32.gmra.mxu0 %v538
      %v624 = vpop.f32.mrf.mxu0
      %v625 = vadd.f32 0.0, %v624
      %626 = vmatmul.f32.gmra.mxu0 %v541
      %v627 = vpop.f32.mrf.mxu0
      %v628 = vadd.f32 0.0, %v627
      %629 = vmatmul.f32.gmra.mxu0 %v544
      %v630 = vpop.f32.mrf.mxu0
      %v631 = vadd.f32 0.0, %v630
      %632 = vdwg.mxu0
      %633 = vmatpush.msra.mxu0 0.0
      %634 = vmatpush.msra.mxu0 0.0
      %635 = vmatpush.msra.mxu0 0.0
      %636 = vmatpush.msra.mxu0 0.0
      %637 = vmatpush.msra.mxu0 0.0
      %638 = vmatpush.msra.mxu0 0.0
      %639 = vmatpush.msra.mxu0 0.0
      %640 = vmatpush.msra.mxu0 0.0
      %641 = vmatpush.msra.mxu0 0.0
      %642 = vmatpush.msra.mxu0 0.0
      %643 = vmatpush.msra.mxu0 0.0
      %644 = vmatpush.msra.mxu0 0.0
      %645 = vmatpush.msra.mxu0 %v515
      %646 = vmatpush.msra.mxu0 %v514
      %647 = vmatpush.msra.mxu0 %v513
      %648 = vmatpush.msra.mxu0 %v512
      %649 = vmatmul.f32.gmra.mxu0 %v535
      %v650 = vpop.f32.mrf.mxu0
      %v651 = vadd.f32 0.0, %v650
      %652 = vmatmul.f32.gmra.mxu0 %v538
      %v653 = vpop.f32.mrf.mxu0
      %v654 = vadd.f32 0.0, %v653
      %655 = vmatmul.f32.gmra.mxu0 %v541
      %v656 = vpop.f32.mrf.mxu0
      %v657 = vadd.f32 0.0, %v656
      %658 = vmatmul.f32.gmra.mxu0 %v544
      %v659 = vpop.f32.mrf.mxu0
      %v660 = vadd.f32 0.0, %v659
      %661 = vdwg.mxu0
      %662 = vmatpush.msra.mxu0 0.0
      %663 = vmatpush.msra.mxu0 0.0
      %664 = vmatpush.msra.mxu0 0.0
      %665 = vmatpush.msra.mxu0 0.0
      %666 = vmatpush.msra.mxu0 0.0
      %667 = vmatpush.msra.mxu0 0.0
      %668 = vmatpush.msra.mxu0 0.0
      %669 = vmatpush.msra.mxu0 0.0
      %670 = vmatpush.msra.mxu0 0.0
      %671 = vmatpush.msra.mxu0 0.0
      %672 = vmatpush.msra.mxu0 0.0
      %673 = vmatpush.msra.mxu0 0.0
      %674 = vmatpush.msra.mxu0 %v511
      %675 = vmatpush.msra.mxu0 %v510
      %676 = vmatpush.msra.mxu0 %v509
      %677 = vmatpush.msra.mxu0 %v508
      %678 = vmatmul.f32.gmra.mxu0 %v535
      %v679 = vpop.f32.mrf.mxu0
      %v680 = vadd.f32 0.0, %v679
      %681 = vmatmul.f32.gmra.mxu0 %v538
      %v682 = vpop.f32.mrf.mxu0
      %v683 = vadd.f32 0.0, %v682
      %684 = vmatmul.f32.gmra.mxu0 %v541
      %v685 = vpop.f32.mrf.mxu0
      %v686 = vadd.f32 0.0, %v685
      %687 = vmatmul.f32.gmra.mxu0 %v544
      %v688 = vpop.f32.mrf.mxu0
      %v689 = vadd.f32 0.0, %v688
      %690 = vdwg.mxu0
      %691 = vmatpush.msra.mxu0 0.0
      %692 = vmatpush.msra.mxu0 0.0
      %693 = vmatpush.msra.mxu0 0.0
      %694 = vmatpush.msra.mxu0 0.0
      %695 = vmatpush.msra.mxu0 0.0
      %696 = vmatpush.msra.mxu0 0.0
      %697 = vmatpush.msra.mxu0 0.0
      %698 = vmatpush.msra.mxu0 0.0
      %699 = vmatpush.msra.mxu0 0.0
      %700 = vmatpush.msra.mxu0 0.0
      %701 = vmatpush.msra.mxu0 0.0
      %702 = vmatpush.msra.mxu0 0.0
      %703 = vmatpush.msra.mxu0 %v507
      %704 = vmatpush.msra.mxu0 %v506
      %705 = vmatpush.msra.mxu0 %v505
      %706 = vmatpush.msra.mxu0 %v504
      %707 = vmatmul.f32.gmra.mxu0 %v535
      %v708 = vpop.f32.mrf.mxu0
      %v709 = vadd.f32 0.0, %v708
      %710 = vmatmul.f32.gmra.mxu0 %v538
      %v711 = vpop.f32.mrf.mxu0
      %v712 = vadd.f32 0.0, %v711
      %713 = vmatmul.f32.gmra.mxu0 %v541
      %v714 = vpop.f32.mrf.mxu0
      %v715 = vadd.f32 0.0, %v714
      %716 = vmatmul.f32.gmra.mxu0 %v544
      %v717 = vpop.f32.mrf.mxu0
      %v718 = vadd.f32 0.0, %v717
      %719 = vdwg.mxu0
      %v721 = vsel %vm533, %v451, 0
      %v724 = vsel %vm533, %v452, 0
      %v727 = vsel %vm533, %v453, 0
      %v730 = vsel %vm533, %v454, 0
      %732 = vmatpush.msra.mxu0 0.0
      %733 = vmatpush.msra.mxu0 0.0
      %734 = vmatpush.msra.mxu0 0.0
      %735 = vmatpush.msra.mxu0 0.0
      %736 = vmatpush.msra.mxu0 0.0
      %737 = vmatpush.msra.mxu0 0.0
      %738 = vmatpush.msra.mxu0 0.0
      %739 = vmatpush.msra.mxu0 0.0
      %740 = vmatpush.msra.mxu0 0.0
      %741 = vmatpush.msra.mxu0 0.0
      %742 = vmatpush.msra.mxu0 0.0
      %743 = vmatpush.msra.mxu0 0.0
      %744 = vmatpush.msra.mxu0 %v450
      %745 = vmatpush.msra.mxu0 %v449
      %746 = vmatpush.msra.mxu0 %v448
      %747 = vmatpush.msra.mxu0 %v447
      %748 = vmatmul.f32.gmra.mxu0 %v721
      %v749 = vpop.f32.mrf.mxu0
      %v750 = vadd.f32 %v564, %v749
      %751 = vmatmul.f32.gmra.mxu0 %v724
      %v752 = vpop.f32.mrf.mxu0
      %v753 = vadd.f32 %v567, %v752
      %754 = vmatmul.f32.gmra.mxu0 %v727
      %v755 = vpop.f32.mrf.mxu0
      %v756 = vadd.f32 %v570, %v755
      %757 = vmatmul.f32.gmra.mxu0 %v730
      %v758 = vpop.f32.mrf.mxu0
      %v759 = vadd.f32 %v573, %v758
      %760 = vdwg.mxu0
      %761 = vmatpush.msra.mxu0 0.0
      %762 = vmatpush.msra.mxu0 0.0
      %763 = vmatpush.msra.mxu0 0.0
      %764 = vmatpush.msra.mxu0 0.0
      %765 = vmatpush.msra.mxu0 0.0
      %766 = vmatpush.msra.mxu0 0.0
      %767 = vmatpush.msra.mxu0 0.0
      %768 = vmatpush.msra.mxu0 0.0
      %769 = vmatpush.msra.mxu0 0.0
      %770 = vmatpush.msra.mxu0 0.0
      %771 = vmatpush.msra.mxu0 0.0
      %772 = vmatpush.msra.mxu0 0.0
      %773 = vmatpush.msra.mxu0 %v446
      %774 = vmatpush.msra.mxu0 %v445
      %775 = vmatpush.msra.mxu0 %v444
      %776 = vmatpush.msra.mxu0 %v443
      %777 = vmatmul.f32.gmra.mxu0 %v721
      %v778 = vpop.f32.mrf.mxu0
      %v779 = vadd.f32 %v593, %v778
      %780 = vmatmul.f32.gmra.mxu0 %v724
      %v781 = vpop.f32.mrf.mxu0
      %v782 = vadd.f32 %v596, %v781
      %783 = vmatmul.f32.gmra.mxu0 %v727
      %v784 = vpop.f32.mrf.mxu0
      %v785 = vadd.f32 %v599, %v784
      %786 = vmatmul.f32.gmra.mxu0 %v730
      %v787 = vpop.f32.mrf.mxu0
      %v788 = vadd.f32 %v602, %v787
      %789 = vdwg.mxu0
      %790 = vmatpush.msra.mxu0 0.0
      %791 = vmatpush.msra.mxu0 0.0
      %792 = vmatpush.msra.mxu0 0.0
      %793 = vmatpush.msra.mxu0 0.0
      %794 = vmatpush.msra.mxu0 0.0
      %795 = vmatpush.msra.mxu0 0.0
      %796 = vmatpush.msra.mxu0 0.0
      %797 = vmatpush.msra.mxu0 0.0
      %798 = vmatpush.msra.mxu0 0.0
      %799 = vmatpush.msra.mxu0 0.0
      %800 = vmatpush.msra.mxu0 0.0
      %801 = vmatpush.msra.mxu0 0.0
      %802 = vmatpush.msra.mxu0 %v442
      %803 = vmatpush.msra.mxu0 %v441
      %804 = vmatpush.msra.mxu0 %v440
      %805 = vmatpush.msra.mxu0 %v439
      %806 = vmatmul.f32.gmra.mxu0 %v721
      %v807 = vpop.f32.mrf.mxu0
      %v808 = vadd.f32 %v622, %v807
      %809 = vmatmul.f32.gmra.mxu0 %v724
      %v810 = vpop.f32.mrf.mxu0
      %v811 = vadd.f32 %v625, %v810
      %812 = vmatmul.f32.gmra.mxu0 %v727
      %v813 = vpop.f32.mrf.mxu0
      %v814 = vadd.f32 %v628, %v813
      %815 = vmatmul.f32.gmra.mxu0 %v730
      %v816 = vpop.f32.mrf.mxu0
      %v817 = vadd.f32 %v631, %v816
      %818 = vdwg.mxu0
      %819 = vmatpush.msra.mxu0 0.0
      %820 = vmatpush.msra.mxu0 0.0
      %821 = vmatpush.msra.mxu0 0.0
      %822 = vmatpush.msra.mxu0 0.0
      %823 = vmatpush.msra.mxu0 0.0
      %824 = vmatpush.msra.mxu0 0.0
      %825 = vmatpush.msra.mxu0 0.0
      %826 = vmatpush.msra.mxu0 0.0
      %827 = vmatpush.msra.mxu0 0.0
      %828 = vmatpush.msra.mxu0 0.0
      %829 = vmatpush.msra.mxu0 0.0
      %830 = vmatpush.msra.mxu0 0.0
      %831 = vmatpush.msra.mxu0 %v438
      %832 = vmatpush.msra.mxu0 %v437
      %833 = vmatpush.msra.mxu0 %v436
      %834 = vmatpush.msra.mxu0 %v435
      %835 = vmatmul.f32.gmra.mxu0 %v721
      %v836 = vpop.f32.mrf.mxu0
      %v837 = vadd.f32 %v651, %v836
      %838 = vmatmul.f32.gmra.mxu0 %v724
      %v839 = vpop.f32.mrf.mxu0
      %v840 = vadd.f32 %v654, %v839
      %841 = vmatmul.f32.gmra.mxu0 %v727
      %v842 = vpop.f32.mrf.mxu0
      %v843 = vadd.f32 %v657, %v842
      %844 = vmatmul.f32.gmra.mxu0 %v730
      %v845 = vpop.f32.mrf.mxu0
      %v846 = vadd.f32 %v660, %v845
      %847 = vdwg.mxu0
      %848 = vmatpush.msra.mxu0 0.0
      %849 = vmatpush.msra.mxu0 0.0
      %850 = vmatpush.msra.mxu0 0.0
      %851 = vmatpush.msra.mxu0 0.0
      %852 = vmatpush.msra.mxu0 0.0
      %853 = vmatpush.msra.mxu0 0.0
      %854 = vmatpush.msra.mxu0 0.0
      %855 = vmatpush.msra.mxu0 0.0
      %856 = vmatpush.msra.mxu0 0.0
      %857 = vmatpush.msra.mxu0 0.0
      %858 = vmatpush.msra.mxu0 0.0
      %859 = vmatpush.msra.mxu0 0.0
      %860 = vmatpush.msra.mxu0 %v434
      %861 = vmatpush.msra.mxu0 %v433
      %862 = vmatpush.msra.mxu0 %v432
      %863 = vmatpush.msra.mxu0 %v431
      %864 = vmatmul.f32.gmra.mxu0 %v721
      %v865 = vpop.f32.mrf.mxu0
      %v866 = vadd.f32 %v680, %v865
      %867 = vmatmul.f32.gmra.mxu0 %v724
      %v868 = vpop.f32.mrf.mxu0
      %v869 = vadd.f32 %v683, %v868
      %870 = vmatmul.f32.gmra.mxu0 %v727
      %v871 = vpop.f32.mrf.mxu0
      %v872 = vadd.f32 %v686, %v871
      %873 = vmatmul.f32.gmra.mxu0 %v730
      %v874 = vpop.f32.mrf.mxu0
      %v875 = vadd.f32 %v689, %v874
      %876 = vdwg.mxu0
      %877 = vmatpush.msra.mxu0 0.0
      %878 = vmatpush.msra.mxu0 0.0
      %879 = vmatpush.msra.mxu0 0.0
      %880 = vmatpush.msra.mxu0 0.0
      %881 = vmatpush.msra.mxu0 0.0
      %882 = vmatpush.msra.mxu0 0.0
      %883 = vmatpush.msra.mxu0 0.0
      %884 = vmatpush.msra.mxu0 0.0
      %885 = vmatpush.msra.mxu0 0.0
      %886 = vmatpush.msra.mxu0 0.0
      %887 = vmatpush.msra.mxu0 0.0
      %888 = vmatpush.msra.mxu0 0.0
      %889 = vmatpush.msra.mxu0 %v430
      %890 = vmatpush.msra.mxu0 %v429
      %891 = vmatpush.msra.mxu0 %v428
      %892 = vmatpush.msra.mxu0 %v427
      %893 = vmatmul.f32.gmra.mxu0 %v721
      %v894 = vpop.f32.mrf.mxu0
      %v895 = vadd.f32 %v709, %v894
      %896 = vmatmul.f32.gmra.mxu0 %v724
      %v897 = vpop.f32.mrf.mxu0
      %v898 = vadd.f32 %v712, %v897
      %899 = vmatmul.f32.gmra.mxu0 %v727
      %v900 = vpop.f32.mrf.mxu0
      %v901 = vadd.f32 %v715, %v900
      %902 = vmatmul.f32.gmra.mxu0 %v730
      %v903 = vpop.f32.mrf.mxu0
      %v904 = vadd.f32 %v718, %v903
      %905 = vdwg.mxu0
      %906 = vrot.lane.b32.xlu0 %v338, 17
      %v907 = vpop.permute.xlu0 %906
      %908 = vrot.lane.b32.xlu0 %v344, 17
      %v909 = vpop.permute.xlu0 %908
      %910 = vrot.lane.b32.xlu0 %v350, 17
      %v911 = vpop.permute.xlu0 %910
      %912 = vrot.lane.b32.xlu0 %v356, 17
      %v913 = vpop.permute.xlu0 %912
      %914 = vrot.lane.b32.xlu0 %v339, 17
      %v915 = vpop.permute.xlu0 %914
      %916 = vrot.lane.b32.xlu0 %v345, 17
      %v917 = vpop.permute.xlu0 %916
      %918 = vrot.lane.b32.xlu0 %v351, 17
      %v919 = vpop.permute.xlu0 %918
      %920 = vrot.lane.b32.xlu0 %v357, 17
      %v921 = vpop.permute.xlu0 %920
      %922 = vrot.lane.b32.xlu0 %v340, 17
      %v923 = vpop.permute.xlu0 %922
      %924 = vrot.lane.b32.xlu0 %v346, 17
      %v925 = vpop.permute.xlu0 %924
      %926 = vrot.lane.b32.xlu0 %v352, 17
      %v927 = vpop.permute.xlu0 %926
      %928 = vrot.lane.b32.xlu0 %v358, 17
      %v929 = vpop.permute.xlu0 %928
      %930 = vrot.lane.b32.xlu0 %v341, 17
      %v931 = vpop.permute.xlu0 %930
      %932 = vrot.lane.b32.xlu0 %v347, 17
      %v933 = vpop.permute.xlu0 %932
      %934 = vrot.lane.b32.xlu0 %v353, 17
      %v935 = vpop.permute.xlu0 %934
      %936 = vrot.lane.b32.xlu0 %v359, 17
      %v937 = vpop.permute.xlu0 %936
      %938 = vrot.lane.b32.xlu0 %v342, 17
      %v939 = vpop.permute.xlu0 %938
      %940 = vrot.lane.b32.xlu0 %v348, 17
      %v941 = vpop.permute.xlu0 %940
      %942 = vrot.lane.b32.xlu0 %v354, 17
      %v943 = vpop.permute.xlu0 %942
      %944 = vrot.lane.b32.xlu0 %v360, 17
      %v945 = vpop.permute.xlu0 %944
      %946 = vrot.lane.b32.xlu0 %v343, 17
      %v947 = vpop.permute.xlu0 %946
      %948 = vrot.lane.b32.xlu0 %v349, 17
      %v949 = vpop.permute.xlu0 %948
      %950 = vrot.lane.b32.xlu0 %v355, 17
      %v951 = vpop.permute.xlu0 %950
      %952 = vrot.lane.b32.xlu0 %v361, 17
      %v953 = vpop.permute.xlu0 %952
      %vm954 = vcmp.lt.s32.totalorder %v425, 17
      %v955 = vsel %vm954, %v939, %v947
      %v956 = vsel %vm954, %v941, %v949
      %v957 = vsel %vm954, %v943, %v951
      %v958 = vsel %vm954, %v945, %v953
      %v959 = vsel %vm954, %v931, %v939
      %v960 = vsel %vm954, %v933, %v941
      %v961 = vsel %vm954, %v935, %v943
      %v962 = vsel %vm954, %v937, %v945
      %v963 = vsel %vm954, %v923, %v931
      %v964 = vsel %vm954, %v925, %v933
      %v965 = vsel %vm954, %v927, %v935
      %v966 = vsel %vm954, %v929, %v937
      %v967 = vsel %vm954, %v915, %v923
      %v968 = vsel %vm954, %v917, %v925
      %v969 = vsel %vm954, %v919, %v927
      %v970 = vsel %vm954, %v921, %v929
      %v971 = vsel %vm954, %v907, %v915
      %v972 = vsel %vm954, %v909, %v917
      %v973 = vsel %vm954, %v911, %v919
      %v974 = vsel %vm954, %v913, %v921
      %v975 = vsel %vm954, %v947, %v907
      %v976 = vsel %vm954, %v949, %v909
      %v977 = vsel %vm954, %v951, %v911
      %v978 = vsel %vm954, %v953, %v913
      %s979 = scalar_lea.vmem %s209, 64
      %v980 = vld [vmem:[%s979] sm:$0xff]
      %v981 = vld [vmem:[%s979 + $0x8] sm:$0xff]
      %v982 = vld [vmem:[%s979 + $0x10] sm:$0xff]
      %v983 = vld [vmem:[%s979 + $0x18] sm:$0xff]
      %v985 = vsel %vm533, %v980, 0
      %v988 = vsel %vm533, %v981, 0
      %v991 = vsel %vm533, %v982, 0
      %v994 = vsel %vm533, %v983, 0
      %996 = vmatpush.msra.mxu0 0.0
      %997 = vmatpush.msra.mxu0 0.0
      %998 = vmatpush.msra.mxu0 0.0
      %999 = vmatpush.msra.mxu0 0.0
      %1000 = vmatpush.msra.mxu0 0.0
      %1001 = vmatpush.msra.mxu0 0.0
      %1002 = vmatpush.msra.mxu0 0.0
      %1003 = vmatpush.msra.mxu0 0.0
      %1004 = vmatpush.msra.mxu0 0.0
      %1005 = vmatpush.msra.mxu0 0.0
      %1006 = vmatpush.msra.mxu0 0.0
      %1007 = vmatpush.msra.mxu0 0.0
      %1008 = vmatpush.msra.mxu0 %v978
      %1009 = vmatpush.msra.mxu0 %v977
      %1010 = vmatpush.msra.mxu0 %v976
      %1011 = vmatpush.msra.mxu0 %v975
      %1012 = vmatmul.f32.gmra.mxu0 %v985
      %v1013 = vpop.f32.mrf.mxu0
      %v1014 = vadd.f32 0.0, %v1013
      %1015 = vmatmul.f32.gmra.mxu0 %v988
      %v1016 = vpop.f32.mrf.mxu0
      %v1017 = vadd.f32 0.0, %v1016
      %1018 = vmatmul.f32.gmra.mxu0 %v991
      %v1019 = vpop.f32.mrf.mxu0
      %v1020 = vadd.f32 0.0, %v1019
      %1021 = vmatmul.f32.gmra.mxu0 %v994
      %v1022 = vpop.f32.mrf.mxu0
      %v1023 = vadd.f32 0.0, %v1022
      %1024 = vdwg.mxu0
      %1025 = vmatpush.msra.mxu0 0.0
      %1026 = vmatpush.msra.mxu0 0.0
      %1027 = vmatpush.msra.mxu0 0.0
      %1028 = vmatpush.msra.mxu0 0.0
      %1029 = vmatpush.msra.mxu0 0.0
      %1030 = vmatpush.msra.mxu0 0.0
      %1031 = vmatpush.msra.mxu0 0.0
      %1032 = vmatpush.msra.mxu0 0.0
      %1033 = vmatpush.msra.mxu0 0.0
      %1034 = vmatpush.msra.mxu0 0.0
      %1035 = vmatpush.msra.mxu0 0.0
      %1036 = vmatpush.msra.mxu0 0.0
      %1037 = vmatpush.msra.mxu0 %v974
      %1038 = vmatpush.msra.mxu0 %v973
      %1039 = vmatpush.msra.mxu0 %v972
      %1040 = vmatpush.msra.mxu0 %v971
      %1041 = vmatmul.f32.gmra.mxu0 %v985
      %v1042 = vpop.f32.mrf.mxu0
      %v1043 = vadd.f32 0.0, %v1042
      %1044 = vmatmul.f32.gmra.mxu0 %v988
      %v1045 = vpop.f32.mrf.mxu0
      %v1046 = vadd.f32 0.0, %v1045
      %1047 = vmatmul.f32.gmra.mxu0 %v991
      %v1048 = vpop.f32.mrf.mxu0
      %v1049 = vadd.f32 0.0, %v1048
      %1050 = vmatmul.f32.gmra.mxu0 %v994
      %v1051 = vpop.f32.mrf.mxu0
      %v1052 = vadd.f32 0.0, %v1051
      %1053 = vdwg.mxu0
      %1054 = vmatpush.msra.mxu0 0.0
      %1055 = vmatpush.msra.mxu0 0.0
      %1056 = vmatpush.msra.mxu0 0.0
      %1057 = vmatpush.msra.mxu0 0.0
      %1058 = vmatpush.msra.mxu0 0.0
      %1059 = vmatpush.msra.mxu0 0.0
      %1060 = vmatpush.msra.mxu0 0.0
      %1061 = vmatpush.msra.mxu0 0.0
      %1062 = vmatpush.msra.mxu0 0.0
      %1063 = vmatpush.msra.mxu0 0.0
      %1064 = vmatpush.msra.mxu0 0.0
      %1065 = vmatpush.msra.mxu0 0.0
      %1066 = vmatpush.msra.mxu0 %v970
      %1067 = vmatpush.msra.mxu0 %v969
      %1068 = vmatpush.msra.mxu0 %v968
      %1069 = vmatpush.msra.mxu0 %v967
      %1070 = vmatmul.f32.gmra.mxu0 %v985
      %v1071 = vpop.f32.mrf.mxu0
      %v1072 = vadd.f32 0.0, %v1071
      %1073 = vmatmul.f32.gmra.mxu0 %v988
      %v1074 = vpop.f32.mrf.mxu0
      %v1075 = vadd.f32 0.0, %v1074
      %1076 = vmatmul.f32.gmra.mxu0 %v991
      %v1077 = vpop.f32.mrf.mxu0
      %v1078 = vadd.f32 0.0, %v1077
      %1079 = vmatmul.f32.gmra.mxu0 %v994
      %v1080 = vpop.f32.mrf.mxu0
      %v1081 = vadd.f32 0.0, %v1080
      %1082 = vdwg.mxu0
      %1083 = vmatpush.msra.mxu0 0.0
      %1084 = vmatpush.msra.mxu0 0.0
      %1085 = vmatpush.msra.mxu0 0.0
      %1086 = vmatpush.msra.mxu0 0.0
      %1087 = vmatpush.msra.mxu0 0.0
      %1088 = vmatpush.msra.mxu0 0.0
      %1089 = vmatpush.msra.mxu0 0.0
      %1090 = vmatpush.msra.mxu0 0.0
      %1091 = vmatpush.msra.mxu0 0.0
      %1092 = vmatpush.msra.mxu0 0.0
      %1093 = vmatpush.msra.mxu0 0.0
      %1094 = vmatpush.msra.mxu0 0.0
      %1095 = vmatpush.msra.mxu0 %v966
      %1096 = vmatpush.msra.mxu0 %v965
      %1097 = vmatpush.msra.mxu0 %v964
      %1098 = vmatpush.msra.mxu0 %v963
      %1099 = vmatmul.f32.gmra.mxu0 %v985
      %v1100 = vpop.f32.mrf.mxu0
      %v1101 = vadd.f32 0.0, %v1100
      %1102 = vmatmul.f32.gmra.mxu0 %v988
      %v1103 = vpop.f32.mrf.mxu0
      %v1104 = vadd.f32 0.0, %v1103
      %1105 = vmatmul.f32.gmra.mxu0 %v991
      %v1106 = vpop.f32.mrf.mxu0
      %v1107 = vadd.f32 0.0, %v1106
      %1108 = vmatmul.f32.gmra.mxu0 %v994
      %v1109 = vpop.f32.mrf.mxu0
      %v1110 = vadd.f32 0.0, %v1109
      %1111 = vdwg.mxu0
      %1112 = vmatpush.msra.mxu0 0.0
      %1113 = vmatpush.msra.mxu0 0.0
      %1114 = vmatpush.msra.mxu0 0.0
      %1115 = vmatpush.msra.mxu0 0.0
      %1116 = vmatpush.msra.mxu0 0.0
      %1117 = vmatpush.msra.mxu0 0.0
      %1118 = vmatpush.msra.mxu0 0.0
      %1119 = vmatpush.msra.mxu0 0.0
      %1120 = vmatpush.msra.mxu0 0.0
      %1121 = vmatpush.msra.mxu0 0.0
      %1122 = vmatpush.msra.mxu0 0.0
      %1123 = vmatpush.msra.mxu0 0.0
      %1124 = vmatpush.msra.mxu0 %v962
      %1125 = vmatpush.msra.mxu0 %v961
      %1126 = vmatpush.msra.mxu0 %v960
      %1127 = vmatpush.msra.mxu0 %v959
      %1128 = vmatmul.f32.gmra.mxu0 %v985
      %v1129 = vpop.f32.mrf.mxu0
      %v1130 = vadd.f32 0.0, %v1129
      %1131 = vmatmul.f32.gmra.mxu0 %v988
      %v1132 = vpop.f32.mrf.mxu0
      %v1133 = vadd.f32 0.0, %v1132
      %1134 = vmatmul.f32.gmra.mxu0 %v991
      %v1135 = vpop.f32.mrf.mxu0
      %v1136 = vadd.f32 0.0, %v1135
      %1137 = vmatmul.f32.gmra.mxu0 %v994
      %v1138 = vpop.f32.mrf.mxu0
      %v1139 = vadd.f32 0.0, %v1138
      %1140 = vdwg.mxu0
      %1141 = vmatpush.msra.mxu0 0.0
      %1142 = vmatpush.msra.mxu0 0.0
      %1143 = vmatpush.msra.mxu0 0.0
      %1144 = vmatpush.msra.mxu0 0.0
      %1145 = vmatpush.msra.mxu0 0.0
      %1146 = vmatpush.msra.mxu0 0.0
      %1147 = vmatpush.msra.mxu0 0.0
      %1148 = vmatpush.msra.mxu0 0.0
      %1149 = vmatpush.msra.mxu0 0.0
      %1150 = vmatpush.msra.mxu0 0.0
      %1151 = vmatpush.msra.mxu0 0.0
      %1152 = vmatpush.msra.mxu0 0.0
      %1153 = vmatpush.msra.mxu0 %v958
      %1154 = vmatpush.msra.mxu0 %v957
      %1155 = vmatpush.msra.mxu0 %v956
      %1156 = vmatpush.msra.mxu0 %v955
      %1157 = vmatmul.f32.gmra.mxu0 %v985
      %v1158 = vpop.f32.mrf.mxu0
      %v1159 = vadd.f32 0.0, %v1158
      %1160 = vmatmul.f32.gmra.mxu0 %v988
      %v1161 = vpop.f32.mrf.mxu0
      %v1162 = vadd.f32 0.0, %v1161
      %1163 = vmatmul.f32.gmra.mxu0 %v991
      %v1164 = vpop.f32.mrf.mxu0
      %v1165 = vadd.f32 0.0, %v1164
      %1166 = vmatmul.f32.gmra.mxu0 %v994
      %v1167 = vpop.f32.mrf.mxu0
      %v1168 = vadd.f32 0.0, %v1167
      %1169 = vdwg.mxu0
      %v1170 = vadd.f32 %v750, %v1014
      %v1171 = vadd.f32 %v779, %v1043
      %v1172 = vadd.f32 %v808, %v1072
      %v1173 = vadd.f32 %v837, %v1101
      %v1174 = vadd.f32 %v866, %v1130
      %v1175 = vadd.f32 %v895, %v1159
      %v1176 = vadd.f32 %v753, %v1017
      %v1177 = vadd.f32 %v782, %v1046
      %v1178 = vadd.f32 %v811, %v1075
      %v1179 = vadd.f32 %v840, %v1104
      %v1180 = vadd.f32 %v869, %v1133
      %v1181 = vadd.f32 %v898, %v1162
      %v1182 = vadd.f32 %v756, %v1020
      %v1183 = vadd.f32 %v785, %v1049
      %v1184 = vadd.f32 %v814, %v1078
      %v1185 = vadd.f32 %v843, %v1107
      %v1186 = vadd.f32 %v872, %v1136
      %v1187 = vadd.f32 %v901, %v1165
      %v1188 = vadd.f32 %v759, %v1023
      %v1189 = vadd.f32 %v788, %v1052
      %v1190 = vadd.f32 %v817, %v1081
      %v1191 = vadd.f32 %v846, %v1110
      %v1192 = vadd.f32 %v875, %v1139
      %v1193 = vadd.f32 %v904, %v1168
      %1194 = vrot.lane.b32.xlu0 %v338, 1
      %v1195 = vpop.permute.xlu0 %1194
      %1196 = vrot.lane.b32.xlu0 %v344, 1
      %v1197 = vpop.permute.xlu0 %1196
      %1198 = vrot.lane.b32.xlu0 %v350, 1
      %v1199 = vpop.permute.xlu0 %1198
      %1200 = vrot.lane.b32.xlu0 %v356, 1
      %v1201 = vpop.permute.xlu0 %1200
      %1202 = vrot.lane.b32.xlu0 %v339, 1
      %v1203 = vpop.permute.xlu0 %1202
      %1204 = vrot.lane.b32.xlu0 %v345, 1
      %v1205 = vpop.permute.xlu0 %1204
      %1206 = vrot.lane.b32.xlu0 %v351, 1
      %v1207 = vpop.permute.xlu0 %1206
      %1208 = vrot.lane.b32.xlu0 %v357, 1
      %v1209 = vpop.permute.xlu0 %1208
      %1210 = vrot.lane.b32.xlu0 %v340, 1
      %v1211 = vpop.permute.xlu0 %1210
      %1212 = vrot.lane.b32.xlu0 %v346, 1
      %v1213 = vpop.permute.xlu0 %1212
      %1214 = vrot.lane.b32.xlu0 %v352, 1
      %v1215 = vpop.permute.xlu0 %1214
      %1216 = vrot.lane.b32.xlu0 %v358, 1
      %v1217 = vpop.permute.xlu0 %1216
      %1218 = vrot.lane.b32.xlu0 %v341, 1
      %v1219 = vpop.permute.xlu0 %1218
      %1220 = vrot.lane.b32.xlu0 %v347, 1
      %v1221 = vpop.permute.xlu0 %1220
      %1222 = vrot.lane.b32.xlu0 %v353, 1
      %v1223 = vpop.permute.xlu0 %1222
      %1224 = vrot.lane.b32.xlu0 %v359, 1
      %v1225 = vpop.permute.xlu0 %1224
      %1226 = vrot.lane.b32.xlu0 %v342, 1
      %v1227 = vpop.permute.xlu0 %1226
      %1228 = vrot.lane.b32.xlu0 %v348, 1
      %v1229 = vpop.permute.xlu0 %1228
      %1230 = vrot.lane.b32.xlu0 %v354, 1
      %v1231 = vpop.permute.xlu0 %1230
      %1232 = vrot.lane.b32.xlu0 %v360, 1
      %v1233 = vpop.permute.xlu0 %1232
      %1234 = vrot.lane.b32.xlu0 %v343, 1
      %v1235 = vpop.permute.xlu0 %1234
      %1236 = vrot.lane.b32.xlu0 %v349, 1
      %v1237 = vpop.permute.xlu0 %1236
      %1238 = vrot.lane.b32.xlu0 %v355, 1
      %v1239 = vpop.permute.xlu0 %1238
      %1240 = vrot.lane.b32.xlu0 %v361, 1
      %v1241 = vpop.permute.xlu0 %1240
      %vm1242 = vcmp.lt.s32.totalorder %v425, 1
      %v1243 = vsel %vm1242, %v1227, %v1235
      %v1244 = vsel %vm1242, %v1229, %v1237
      %v1245 = vsel %vm1242, %v1231, %v1239
      %v1246 = vsel %vm1242, %v1233, %v1241
      %v1247 = vsel %vm1242, %v1219, %v1227
      %v1248 = vsel %vm1242, %v1221, %v1229
      %v1249 = vsel %vm1242, %v1223, %v1231
      %v1250 = vsel %vm1242, %v1225, %v1233
      %v1251 = vsel %vm1242, %v1211, %v1219
      %v1252 = vsel %vm1242, %v1213, %v1221
      %v1253 = vsel %vm1242, %v1215, %v1223
      %v1254 = vsel %vm1242, %v1217, %v1225
      %v1255 = vsel %vm1242, %v1203, %v1211
      %v1256 = vsel %vm1242, %v1205, %v1213
      %v1257 = vsel %vm1242, %v1207, %v1215
      %v1258 = vsel %vm1242, %v1209, %v1217
      %v1259 = vsel %vm1242, %v1195, %v1203
      %v1260 = vsel %vm1242, %v1197, %v1205
      %v1261 = vsel %vm1242, %v1199, %v1207
      %v1262 = vsel %vm1242, %v1201, %v1209
      %v1263 = vsel %vm1242, %v1235, %v1195
      %v1264 = vsel %vm1242, %v1237, %v1197
      %v1265 = vsel %vm1242, %v1239, %v1199
      %v1266 = vsel %vm1242, %v1241, %v1201
      %s1267 = scalar_lea.vmem %s209, 96
      %v1268 = vld [vmem:[%s1267] sm:$0xff]
      %v1269 = vld [vmem:[%s1267 + $0x8] sm:$0xff]
      %v1270 = vld [vmem:[%s1267 + $0x10] sm:$0xff]
      %v1271 = vld [vmem:[%s1267 + $0x18] sm:$0xff]
      %v1273 = vsel %vm533, %v1268, 0
      %v1276 = vsel %vm533, %v1269, 0
      %v1279 = vsel %vm533, %v1270, 0
      %v1282 = vsel %vm533, %v1271, 0
      %1284 = vmatpush.msra.mxu0 0.0
      %1285 = vmatpush.msra.mxu0 0.0
      %1286 = vmatpush.msra.mxu0 0.0
      %1287 = vmatpush.msra.mxu0 0.0
      %1288 = vmatpush.msra.mxu0 0.0
      %1289 = vmatpush.msra.mxu0 0.0
      %1290 = vmatpush.msra.mxu0 0.0
      %1291 = vmatpush.msra.mxu0 0.0
      %1292 = vmatpush.msra.mxu0 0.0
      %1293 = vmatpush.msra.mxu0 0.0
      %1294 = vmatpush.msra.mxu0 0.0
      %1295 = vmatpush.msra.mxu0 0.0
      %1296 = vmatpush.msra.mxu0 %v1266
      %1297 = vmatpush.msra.mxu0 %v1265
      %1298 = vmatpush.msra.mxu0 %v1264
      %1299 = vmatpush.msra.mxu0 %v1263
      %1300 = vmatmul.f32.gmra.mxu0 %v1273
      %v1301 = vpop.f32.mrf.mxu0
      %v1302 = vadd.f32 0.0, %v1301
      %1303 = vmatmul.f32.gmra.mxu0 %v1276
      %v1304 = vpop.f32.mrf.mxu0
      %v1305 = vadd.f32 0.0, %v1304
      %1306 = vmatmul.f32.gmra.mxu0 %v1279
      %v1307 = vpop.f32.mrf.mxu0
      %v1308 = vadd.f32 0.0, %v1307
      %1309 = vmatmul.f32.gmra.mxu0 %v1282
      %v1310 = vpop.f32.mrf.mxu0
      %v1311 = vadd.f32 0.0, %v1310
      %1312 = vdwg.mxu0
      %1313 = vmatpush.msra.mxu0 0.0
      %1314 = vmatpush.msra.mxu0 0.0
      %1315 = vmatpush.msra.mxu0 0.0
      %1316 = vmatpush.msra.mxu0 0.0
      %1317 = vmatpush.msra.mxu0 0.0
      %1318 = vmatpush.msra.mxu0 0.0
      %1319 = vmatpush.msra.mxu0 0.0
      %1320 = vmatpush.msra.mxu0 0.0
      %1321 = vmatpush.msra.mxu0 0.0
      %1322 = vmatpush.msra.mxu0 0.0
      %1323 = vmatpush.msra.mxu0 0.0
      %1324 = vmatpush.msra.mxu0 0.0
      %1325 = vmatpush.msra.mxu0 %v1262
      %1326 = vmatpush.msra.mxu0 %v1261
      %1327 = vmatpush.msra.mxu0 %v1260
      %1328 = vmatpush.msra.mxu0 %v1259
      %1329 = vmatmul.f32.gmra.mxu0 %v1273
      %v1330 = vpop.f32.mrf.mxu0
      %v1331 = vadd.f32 0.0, %v1330
      %1332 = vmatmul.f32.gmra.mxu0 %v1276
      %v1333 = vpop.f32.mrf.mxu0
      %v1334 = vadd.f32 0.0, %v1333
      %1335 = vmatmul.f32.gmra.mxu0 %v1279
      %v1336 = vpop.f32.mrf.mxu0
      %v1337 = vadd.f32 0.0, %v1336
      %1338 = vmatmul.f32.gmra.mxu0 %v1282
      %v1339 = vpop.f32.mrf.mxu0
      %v1340 = vadd.f32 0.0, %v1339
      %1341 = vdwg.mxu0
      %1342 = vmatpush.msra.mxu0 0.0
      %1343 = vmatpush.msra.mxu0 0.0
      %1344 = vmatpush.msra.mxu0 0.0
      %1345 = vmatpush.msra.mxu0 0.0
      %1346 = vmatpush.msra.mxu0 0.0
      %1347 = vmatpush.msra.mxu0 0.0
      %1348 = vmatpush.msra.mxu0 0.0
      %1349 = vmatpush.msra.mxu0 0.0
      %1350 = vmatpush.msra.mxu0 0.0
      %1351 = vmatpush.msra.mxu0 0.0
      %1352 = vmatpush.msra.mxu0 0.0
      %1353 = vmatpush.msra.mxu0 0.0
      %1354 = vmatpush.msra.mxu0 %v1258
      %1355 = vmatpush.msra.mxu0 %v1257
      %1356 = vmatpush.msra.mxu0 %v1256
      %1357 = vmatpush.msra.mxu0 %v1255
      %1358 = vmatmul.f32.gmra.mxu0 %v1273
      %v1359 = vpop.f32.mrf.mxu0
      %v1360 = vadd.f32 0.0, %v1359
      %1361 = vmatmul.f32.gmra.mxu0 %v1276
      %v1362 = vpop.f32.mrf.mxu0
      %v1363 = vadd.f32 0.0, %v1362
      %1364 = vmatmul.f32.gmra.mxu0 %v1279
      %v1365 = vpop.f32.mrf.mxu0
      %v1366 = vadd.f32 0.0, %v1365
      %1367 = vmatmul.f32.gmra.mxu0 %v1282
      %v1368 = vpop.f32.mrf.mxu0
      %v1369 = vadd.f32 0.0, %v1368
      %1370 = vdwg.mxu0
      %1371 = vmatpush.msra.mxu0 0.0
      %1372 = vmatpush.msra.mxu0 0.0
      %1373 = vmatpush.msra.mxu0 0.0
      %1374 = vmatpush.msra.mxu0 0.0
      %1375 = vmatpush.msra.mxu0 0.0
      %1376 = vmatpush.msra.mxu0 0.0
      %1377 = vmatpush.msra.mxu0 0.0
      %1378 = vmatpush.msra.mxu0 0.0
      %1379 = vmatpush.msra.mxu0 0.0
      %1380 = vmatpush.msra.mxu0 0.0
      %1381 = vmatpush.msra.mxu0 0.0
      %1382 = vmatpush.msra.mxu0 0.0
      %1383 = vmatpush.msra.mxu0 %v1254
      %1384 = vmatpush.msra.mxu0 %v1253
      %1385 = vmatpush.msra.mxu0 %v1252
      %1386 = vmatpush.msra.mxu0 %v1251
      %1387 = vmatmul.f32.gmra.mxu0 %v1273
      %v1388 = vpop.f32.mrf.mxu0
      %v1389 = vadd.f32 0.0, %v1388
      %1390 = vmatmul.f32.gmra.mxu0 %v1276
      %v1391 = vpop.f32.mrf.mxu0
      %v1392 = vadd.f32 0.0, %v1391
      %1393 = vmatmul.f32.gmra.mxu0 %v1279
      %v1394 = vpop.f32.mrf.mxu0
      %v1395 = vadd.f32 0.0, %v1394
      %1396 = vmatmul.f32.gmra.mxu0 %v1282
      %v1397 = vpop.f32.mrf.mxu0
      %v1398 = vadd.f32 0.0, %v1397
      %1399 = vdwg.mxu0
      %1400 = vmatpush.msra.mxu0 0.0
      %1401 = vmatpush.msra.mxu0 0.0
      %1402 = vmatpush.msra.mxu0 0.0
      %1403 = vmatpush.msra.mxu0 0.0
      %1404 = vmatpush.msra.mxu0 0.0
      %1405 = vmatpush.msra.mxu0 0.0
      %1406 = vmatpush.msra.mxu0 0.0
      %1407 = vmatpush.msra.mxu0 0.0
      %1408 = vmatpush.msra.mxu0 0.0
      %1409 = vmatpush.msra.mxu0 0.0
      %1410 = vmatpush.msra.mxu0 0.0
      %1411 = vmatpush.msra.mxu0 0.0
      %1412 = vmatpush.msra.mxu0 %v1250
      %1413 = vmatpush.msra.mxu0 %v1249
      %1414 = vmatpush.msra.mxu0 %v1248
      %1415 = vmatpush.msra.mxu0 %v1247
      %1416 = vmatmul.f32.gmra.mxu0 %v1273
      %v1417 = vpop.f32.mrf.mxu0
      %v1418 = vadd.f32 0.0, %v1417
      %1419 = vmatmul.f32.gmra.mxu0 %v1276
      %v1420 = vpop.f32.mrf.mxu0
      %v1421 = vadd.f32 0.0, %v1420
      %1422 = vmatmul.f32.gmra.mxu0 %v1279
      %v1423 = vpop.f32.mrf.mxu0
      %v1424 = vadd.f32 0.0, %v1423
      %1425 = vmatmul.f32.gmra.mxu0 %v1282
      %v1426 = vpop.f32.mrf.mxu0
      %v1427 = vadd.f32 0.0, %v1426
      %1428 = vdwg.mxu0
      %1429 = vmatpush.msra.mxu0 0.0
      %1430 = vmatpush.msra.mxu0 0.0
      %1431 = vmatpush.msra.mxu0 0.0
      %1432 = vmatpush.msra.mxu0 0.0
      %1433 = vmatpush.msra.mxu0 0.0
      %1434 = vmatpush.msra.mxu0 0.0
      %1435 = vmatpush.msra.mxu0 0.0
      %1436 = vmatpush.msra.mxu0 0.0
      %1437 = vmatpush.msra.mxu0 0.0
      %1438 = vmatpush.msra.mxu0 0.0
      %1439 = vmatpush.msra.mxu0 0.0
      %1440 = vmatpush.msra.mxu0 0.0
      %1441 = vmatpush.msra.mxu0 %v1246
      %1442 = vmatpush.msra.mxu0 %v1245
      %1443 = vmatpush.msra.mxu0 %v1244
      %1444 = vmatpush.msra.mxu0 %v1243
      %1445 = vmatmul.f32.gmra.mxu0 %v1273
      %v1446 = vpop.f32.mrf.mxu0
      %v1447 = vadd.f32 0.0, %v1446
      %1448 = vmatmul.f32.gmra.mxu0 %v1276
      %v1449 = vpop.f32.mrf.mxu0
      %v1450 = vadd.f32 0.0, %v1449
      %1451 = vmatmul.f32.gmra.mxu0 %v1279
      %v1452 = vpop.f32.mrf.mxu0
      %v1453 = vadd.f32 0.0, %v1452
      %1454 = vmatmul.f32.gmra.mxu0 %v1282
      %v1455 = vpop.f32.mrf.mxu0
      %v1456 = vadd.f32 0.0, %v1455
      %1457 = vdwg.mxu0
      %v1458 = vadd.f32 %v1170, %v1302
      %v1459 = vadd.f32 %v1171, %v1331
      %v1460 = vadd.f32 %v1172, %v1360
      %v1461 = vadd.f32 %v1173, %v1389
      %v1462 = vadd.f32 %v1174, %v1418
      %v1463 = vadd.f32 %v1175, %v1447
      %v1464 = vadd.f32 %v1176, %v1305
      %v1465 = vadd.f32 %v1177, %v1334
      %v1466 = vadd.f32 %v1178, %v1363
      %v1467 = vadd.f32 %v1179, %v1392
      %v1468 = vadd.f32 %v1180, %v1421
      %v1469 = vadd.f32 %v1181, %v1450
      %v1470 = vadd.f32 %v1182, %v1308
      %v1471 = vadd.f32 %v1183, %v1337
      %v1472 = vadd.f32 %v1184, %v1366
      %v1473 = vadd.f32 %v1185, %v1395
      %v1474 = vadd.f32 %v1186, %v1424
      %v1475 = vadd.f32 %v1187, %v1453
      %v1476 = vadd.f32 %v1188, %v1311
      %v1477 = vadd.f32 %v1189, %v1340
      %v1478 = vadd.f32 %v1190, %v1369
      %v1479 = vadd.f32 %v1191, %v1398
      %v1480 = vadd.f32 %v1192, %v1427
      %v1481 = vadd.f32 %v1193, %v1456
      %s1482 = scalar_lea.vmem %s209, 128
      %v1483 = vld [vmem:[%s1482] sm:$0xff]
      %v1484 = vld [vmem:[%s1482 + $0x8] sm:$0xff]
      %v1485 = vld [vmem:[%s1482 + $0x10] sm:$0xff]
      %v1486 = vld [vmem:[%s1482 + $0x18] sm:$0xff]
      %v1488 = vsel %vm533, %v1483, 0
      %v1491 = vsel %vm533, %v1484, 0
      %v1494 = vsel %vm533, %v1485, 0
      %v1497 = vsel %vm533, %v1486, 0
      %1499 = vmatpush.msra.mxu0 0.0
      %1500 = vmatpush.msra.mxu0 0.0
      %1501 = vmatpush.msra.mxu0 0.0
      %1502 = vmatpush.msra.mxu0 0.0
      %1503 = vmatpush.msra.mxu0 0.0
      %1504 = vmatpush.msra.mxu0 0.0
      %1505 = vmatpush.msra.mxu0 0.0
      %1506 = vmatpush.msra.mxu0 0.0
      %1507 = vmatpush.msra.mxu0 0.0
      %1508 = vmatpush.msra.mxu0 0.0
      %1509 = vmatpush.msra.mxu0 0.0
      %1510 = vmatpush.msra.mxu0 0.0
      %1511 = vmatpush.msra.mxu0 %v356
      %1512 = vmatpush.msra.mxu0 %v350
      %1513 = vmatpush.msra.mxu0 %v344
      %1514 = vmatpush.msra.mxu0 %v338
      %1515 = vmatmul.f32.gmra.mxu0 %v1488
      %v1516 = vpop.f32.mrf.mxu0
      %v1517 = vadd.f32 0.0, %v1516
      %1518 = vmatmul.f32.gmra.mxu0 %v1491
      %v1519 = vpop.f32.mrf.mxu0
      %v1520 = vadd.f32 0.0, %v1519
      %1521 = vmatmul.f32.gmra.mxu0 %v1494
      %v1522 = vpop.f32.mrf.mxu0
      %v1523 = vadd.f32 0.0, %v1522
      %1524 = vmatmul.f32.gmra.mxu0 %v1497
      %v1525 = vpop.f32.mrf.mxu0
      %v1526 = vadd.f32 0.0, %v1525
      %1527 = vdwg.mxu0
      %1528 = vmatpush.msra.mxu0 0.0
      %1529 = vmatpush.msra.mxu0 0.0
      %1530 = vmatpush.msra.mxu0 0.0
      %1531 = vmatpush.msra.mxu0 0.0
      %1532 = vmatpush.msra.mxu0 0.0
      %1533 = vmatpush.msra.mxu0 0.0
      %1534 = vmatpush.msra.mxu0 0.0
      %1535 = vmatpush.msra.mxu0 0.0
      %1536 = vmatpush.msra.mxu0 0.0
      %1537 = vmatpush.msra.mxu0 0.0
      %1538 = vmatpush.msra.mxu0 0.0
      %1539 = vmatpush.msra.mxu0 0.0
      %1540 = vmatpush.msra.mxu0 %v357
      %1541 = vmatpush.msra.mxu0 %v351
      %1542 = vmatpush.msra.mxu0 %v345
      %1543 = vmatpush.msra.mxu0 %v339
      %1544 = vmatmul.f32.gmra.mxu0 %v1488
      %v1545 = vpop.f32.mrf.mxu0
      %v1546 = vadd.f32 0.0, %v1545
      %1547 = vmatmul.f32.gmra.mxu0 %v1491
      %v1548 = vpop.f32.mrf.mxu0
      %v1549 = vadd.f32 0.0, %v1548
      %1550 = vmatmul.f32.gmra.mxu0 %v1494
      %v1551 = vpop.f32.mrf.mxu0
      %v1552 = vadd.f32 0.0, %v1551
      %1553 = vmatmul.f32.gmra.mxu0 %v1497
      %v1554 = vpop.f32.mrf.mxu0
      %v1555 = vadd.f32 0.0, %v1554
      %1556 = vdwg.mxu0
      %1557 = vmatpush.msra.mxu0 0.0
      %1558 = vmatpush.msra.mxu0 0.0
      %1559 = vmatpush.msra.mxu0 0.0
      %1560 = vmatpush.msra.mxu0 0.0
      %1561 = vmatpush.msra.mxu0 0.0
      %1562 = vmatpush.msra.mxu0 0.0
      %1563 = vmatpush.msra.mxu0 0.0
      %1564 = vmatpush.msra.mxu0 0.0
      %1565 = vmatpush.msra.mxu0 0.0
      %1566 = vmatpush.msra.mxu0 0.0
      %1567 = vmatpush.msra.mxu0 0.0
      %1568 = vmatpush.msra.mxu0 0.0
      %1569 = vmatpush.msra.mxu0 %v358
      %1570 = vmatpush.msra.mxu0 %v352
      %1571 = vmatpush.msra.mxu0 %v346
      %1572 = vmatpush.msra.mxu0 %v340
      %1573 = vmatmul.f32.gmra.mxu0 %v1488
      %v1574 = vpop.f32.mrf.mxu0
      %v1575 = vadd.f32 0.0, %v1574
      %1576 = vmatmul.f32.gmra.mxu0 %v1491
      %v1577 = vpop.f32.mrf.mxu0
      %v1578 = vadd.f32 0.0, %v1577
      %1579 = vmatmul.f32.gmra.mxu0 %v1494
      %v1580 = vpop.f32.mrf.mxu0
      %v1581 = vadd.f32 0.0, %v1580
      %1582 = vmatmul.f32.gmra.mxu0 %v1497
      %v1583 = vpop.f32.mrf.mxu0
      %v1584 = vadd.f32 0.0, %v1583
      %1585 = vdwg.mxu0
      %1586 = vmatpush.msra.mxu0 0.0
      %1587 = vmatpush.msra.mxu0 0.0
      %1588 = vmatpush.msra.mxu0 0.0
      %1589 = vmatpush.msra.mxu0 0.0
      %1590 = vmatpush.msra.mxu0 0.0
      %1591 = vmatpush.msra.mxu0 0.0
      %1592 = vmatpush.msra.mxu0 0.0
      %1593 = vmatpush.msra.mxu0 0.0
      %1594 = vmatpush.msra.mxu0 0.0
      %1595 = vmatpush.msra.mxu0 0.0
      %1596 = vmatpush.msra.mxu0 0.0
      %1597 = vmatpush.msra.mxu0 0.0
      %1598 = vmatpush.msra.mxu0 %v359
      %1599 = vmatpush.msra.mxu0 %v353
      %1600 = vmatpush.msra.mxu0 %v347
      %1601 = vmatpush.msra.mxu0 %v341
      %1602 = vmatmul.f32.gmra.mxu0 %v1488
      %v1603 = vpop.f32.mrf.mxu0
      %v1604 = vadd.f32 0.0, %v1603
      %1605 = vmatmul.f32.gmra.mxu0 %v1491
      %v1606 = vpop.f32.mrf.mxu0
      %v1607 = vadd.f32 0.0, %v1606
      %1608 = vmatmul.f32.gmra.mxu0 %v1494
      %v1609 = vpop.f32.mrf.mxu0
      %v1610 = vadd.f32 0.0, %v1609
      %1611 = vmatmul.f32.gmra.mxu0 %v1497
      %v1612 = vpop.f32.mrf.mxu0
      %v1613 = vadd.f32 0.0, %v1612
      %1614 = vdwg.mxu0
      %1615 = vmatpush.msra.mxu0 0.0
      %1616 = vmatpush.msra.mxu0 0.0
      %1617 = vmatpush.msra.mxu0 0.0
      %1618 = vmatpush.msra.mxu0 0.0
      %1619 = vmatpush.msra.mxu0 0.0
      %1620 = vmatpush.msra.mxu0 0.0
      %1621 = vmatpush.msra.mxu0 0.0
      %1622 = vmatpush.msra.mxu0 0.0
      %1623 = vmatpush.msra.mxu0 0.0
      %1624 = vmatpush.msra.mxu0 0.0
      %1625 = vmatpush.msra.mxu0 0.0
      %1626 = vmatpush.msra.mxu0 0.0
      %1627 = vmatpush.msra.mxu0 %v360
      %1628 = vmatpush.msra.mxu0 %v354
      %1629 = vmatpush.msra.mxu0 %v348
      %1630 = vmatpush.msra.mxu0 %v342
      %1631 = vmatmul.f32.gmra.mxu0 %v1488
      %v1632 = vpop.f32.mrf.mxu0
      %v1633 = vadd.f32 0.0, %v1632
      %1634 = vmatmul.f32.gmra.mxu0 %v1491
      %v1635 = vpop.f32.mrf.mxu0
      %v1636 = vadd.f32 0.0, %v1635
      %1637 = vmatmul.f32.gmra.mxu0 %v1494
      %v1638 = vpop.f32.mrf.mxu0
      %v1639 = vadd.f32 0.0, %v1638
      %1640 = vmatmul.f32.gmra.mxu0 %v1497
      %v1641 = vpop.f32.mrf.mxu0
      %v1642 = vadd.f32 0.0, %v1641
      %1643 = vdwg.mxu0
      %1644 = vmatpush.msra.mxu0 0.0
      %1645 = vmatpush.msra.mxu0 0.0
      %1646 = vmatpush.msra.mxu0 0.0
      %1647 = vmatpush.msra.mxu0 0.0
      %1648 = vmatpush.msra.mxu0 0.0
      %1649 = vmatpush.msra.mxu0 0.0
      %1650 = vmatpush.msra.mxu0 0.0
      %1651 = vmatpush.msra.mxu0 0.0
      %1652 = vmatpush.msra.mxu0 0.0
      %1653 = vmatpush.msra.mxu0 0.0
      %1654 = vmatpush.msra.mxu0 0.0
      %1655 = vmatpush.msra.mxu0 0.0
      %1656 = vmatpush.msra.mxu0 %v361
      %1657 = vmatpush.msra.mxu0 %v355
      %1658 = vmatpush.msra.mxu0 %v349
      %1659 = vmatpush.msra.mxu0 %v343
      %1660 = vmatmul.f32.gmra.mxu0 %v1488
      %v1661 = vpop.f32.mrf.mxu0
      %v1662 = vadd.f32 0.0, %v1661
      %1663 = vmatmul.f32.gmra.mxu0 %v1491
      %v1664 = vpop.f32.mrf.mxu0
      %v1665 = vadd.f32 0.0, %v1664
      %1666 = vmatmul.f32.gmra.mxu0 %v1494
      %v1667 = vpop.f32.mrf.mxu0
      %v1668 = vadd.f32 0.0, %v1667
      %1669 = vmatmul.f32.gmra.mxu0 %v1497
      %v1670 = vpop.f32.mrf.mxu0
      %v1671 = vadd.f32 0.0, %v1670
      %1672 = vdwg.mxu0
      %v1673 = vadd.f32 %v1458, %v1517
      %v1674 = vadd.f32 %v1459, %v1546
      %v1675 = vadd.f32 %v1460, %v1575
      %v1676 = vadd.f32 %v1461, %v1604
      %v1677 = vadd.f32 %v1462, %v1633
      %v1678 = vadd.f32 %v1463, %v1662
      %v1679 = vadd.f32 %v1464, %v1520
      %v1680 = vadd.f32 %v1465, %v1549
      %v1681 = vadd.f32 %v1466, %v1578
      %v1682 = vadd.f32 %v1467, %v1607
      %v1683 = vadd.f32 %v1468, %v1636
      %v1684 = vadd.f32 %v1469, %v1665
      %v1685 = vadd.f32 %v1470, %v1523
      %v1686 = vadd.f32 %v1471, %v1552
      %v1687 = vadd.f32 %v1472, %v1581
      %v1688 = vadd.f32 %v1473, %v1610
      %v1689 = vadd.f32 %v1474, %v1639
      %v1690 = vadd.f32 %v1475, %v1668
      %v1691 = vadd.f32 %v1476, %v1526
      %v1692 = vadd.f32 %v1477, %v1555
      %v1693 = vadd.f32 %v1478, %v1584
      %v1694 = vadd.f32 %v1479, %v1613
      %v1695 = vadd.f32 %v1480, %v1642
      %v1696 = vadd.f32 %v1481, %v1671
      %1697 = vrot.lane.b32.xlu0 %v338, 127
      %v1698 = vpop.permute.xlu0 %1697
      %1699 = vrot.lane.b32.xlu0 %v344, 127
      %v1700 = vpop.permute.xlu0 %1699
      %1701 = vrot.lane.b32.xlu0 %v350, 127
      %v1702 = vpop.permute.xlu0 %1701
      %1703 = vrot.lane.b32.xlu0 %v356, 127
      %v1704 = vpop.permute.xlu0 %1703
      %1705 = vrot.lane.b32.xlu0 %v339, 127
      %v1706 = vpop.permute.xlu0 %1705
      %1707 = vrot.lane.b32.xlu0 %v345, 127
      %v1708 = vpop.permute.xlu0 %1707
      %1709 = vrot.lane.b32.xlu0 %v351, 127
      %v1710 = vpop.permute.xlu0 %1709
      %1711 = vrot.lane.b32.xlu0 %v357, 127
      %v1712 = vpop.permute.xlu0 %1711
      %1713 = vrot.lane.b32.xlu0 %v340, 127
      %v1714 = vpop.permute.xlu0 %1713
      %1715 = vrot.lane.b32.xlu0 %v346, 127
      %v1716 = vpop.permute.xlu0 %1715
      %1717 = vrot.lane.b32.xlu0 %v352, 127
      %v1718 = vpop.permute.xlu0 %1717
      %1719 = vrot.lane.b32.xlu0 %v358, 127
      %v1720 = vpop.permute.xlu0 %1719
      %1721 = vrot.lane.b32.xlu0 %v341, 127
      %v1722 = vpop.permute.xlu0 %1721
      %1723 = vrot.lane.b32.xlu0 %v347, 127
      %v1724 = vpop.permute.xlu0 %1723
      %1725 = vrot.lane.b32.xlu0 %v353, 127
      %v1726 = vpop.permute.xlu0 %1725
      %1727 = vrot.lane.b32.xlu0 %v359, 127
      %v1728 = vpop.permute.xlu0 %1727
      %1729 = vrot.lane.b32.xlu0 %v342, 127
      %v1730 = vpop.permute.xlu0 %1729
      %1731 = vrot.lane.b32.xlu0 %v348, 127
      %v1732 = vpop.permute.xlu0 %1731
      %1733 = vrot.lane.b32.xlu0 %v354, 127
      %v1734 = vpop.permute.xlu0 %1733
      %1735 = vrot.lane.b32.xlu0 %v360, 127
      %v1736 = vpop.permute.xlu0 %1735
      %1737 = vrot.lane.b32.xlu0 %v343, 127
      %v1738 = vpop.permute.xlu0 %1737
      %1739 = vrot.lane.b32.xlu0 %v349, 127
      %v1740 = vpop.permute.xlu0 %1739
      %1741 = vrot.lane.b32.xlu0 %v355, 127
      %v1742 = vpop.permute.xlu0 %1741
      %1743 = vrot.lane.b32.xlu0 %v361, 127
      %v1744 = vpop.permute.xlu0 %1743
      %vm1745 = vcmp.lt.s32.totalorder %v425, 127
      %v1746 = vsel %vm1745, %v1730, %v1738
      %v1747 = vsel %vm1745, %v1732, %v1740
      %v1748 = vsel %vm1745, %v1734, %v1742
      %v1749 = vsel %vm1745, %v1736, %v1744
      %v1750 = vsel %vm1745, %v1722, %v1730
      %v1751 = vsel %vm1745, %v1724, %v1732
      %v1752 = vsel %vm1745, %v1726, %v1734
      %v1753 = vsel %vm1745, %v1728, %v1736
      %v1754 = vsel %vm1745, %v1714, %v1722
      %v1755 = vsel %vm1745, %v1716, %v1724
      %v1756 = vsel %vm1745, %v1718, %v1726
      %v1757 = vsel %vm1745, %v1720, %v1728
      %v1758 = vsel %vm1745, %v1706, %v1714
      %v1759 = vsel %vm1745, %v1708, %v1716
      %v1760 = vsel %vm1745, %v1710, %v1718
      %v1761 = vsel %vm1745, %v1712, %v1720
      %v1762 = vsel %vm1745, %v1698, %v1706
      %v1763 = vsel %vm1745, %v1700, %v1708
      %v1764 = vsel %vm1745, %v1702, %v1710
      %v1765 = vsel %vm1745, %v1704, %v1712
      %v1766 = vsel %vm1745, %v1738, %v1698
      %v1767 = vsel %vm1745, %v1740, %v1700
      %v1768 = vsel %vm1745, %v1742, %v1702
      %v1769 = vsel %vm1745, %v1744, %v1704
      %s1770 = scalar_lea.vmem %s209, 160
      %v1771 = vld [vmem:[%s1770] sm:$0xff]
      %v1772 = vld [vmem:[%s1770 + $0x8] sm:$0xff]
      %v1773 = vld [vmem:[%s1770 + $0x10] sm:$0xff]
      %v1774 = vld [vmem:[%s1770 + $0x18] sm:$0xff]
      %v1776 = vsel %vm533, %v1771, 0
      %v1779 = vsel %vm533, %v1772, 0
      %v1782 = vsel %vm533, %v1773, 0
      %v1785 = vsel %vm533, %v1774, 0
      %1787 = vmatpush.msra.mxu0 0.0
      %1788 = vmatpush.msra.mxu0 0.0
      %1789 = vmatpush.msra.mxu0 0.0
      %1790 = vmatpush.msra.mxu0 0.0
      %1791 = vmatpush.msra.mxu0 0.0
      %1792 = vmatpush.msra.mxu0 0.0
      %1793 = vmatpush.msra.mxu0 0.0
      %1794 = vmatpush.msra.mxu0 0.0
      %1795 = vmatpush.msra.mxu0 0.0
      %1796 = vmatpush.msra.mxu0 0.0
      %1797 = vmatpush.msra.mxu0 0.0
      %1798 = vmatpush.msra.mxu0 0.0
      %1799 = vmatpush.msra.mxu0 %v1765
      %1800 = vmatpush.msra.mxu0 %v1764
      %1801 = vmatpush.msra.mxu0 %v1763
      %1802 = vmatpush.msra.mxu0 %v1762
      %1803 = vmatmul.f32.gmra.mxu0 %v1776
      %v1804 = vpop.f32.mrf.mxu0
      %v1805 = vadd.f32 0.0, %v1804
      %1806 = vmatmul.f32.gmra.mxu0 %v1779
      %v1807 = vpop.f32.mrf.mxu0
      %v1808 = vadd.f32 0.0, %v1807
      %1809 = vmatmul.f32.gmra.mxu0 %v1782
      %v1810 = vpop.f32.mrf.mxu0
      %v1811 = vadd.f32 0.0, %v1810
      %1812 = vmatmul.f32.gmra.mxu0 %v1785
      %v1813 = vpop.f32.mrf.mxu0
      %v1814 = vadd.f32 0.0, %v1813
      %1815 = vdwg.mxu0
      %1816 = vmatpush.msra.mxu0 0.0
      %1817 = vmatpush.msra.mxu0 0.0
      %1818 = vmatpush.msra.mxu0 0.0
      %1819 = vmatpush.msra.mxu0 0.0
      %1820 = vmatpush.msra.mxu0 0.0
      %1821 = vmatpush.msra.mxu0 0.0
      %1822 = vmatpush.msra.mxu0 0.0
      %1823 = vmatpush.msra.mxu0 0.0
      %1824 = vmatpush.msra.mxu0 0.0
      %1825 = vmatpush.msra.mxu0 0.0
      %1826 = vmatpush.msra.mxu0 0.0
      %1827 = vmatpush.msra.mxu0 0.0
      %1828 = vmatpush.msra.mxu0 %v1761
      %1829 = vmatpush.msra.mxu0 %v1760
      %1830 = vmatpush.msra.mxu0 %v1759
      %1831 = vmatpush.msra.mxu0 %v1758
      %1832 = vmatmul.f32.gmra.mxu0 %v1776
      %v1833 = vpop.f32.mrf.mxu0
      %v1834 = vadd.f32 0.0, %v1833
      %1835 = vmatmul.f32.gmra.mxu0 %v1779
      %v1836 = vpop.f32.mrf.mxu0
      %v1837 = vadd.f32 0.0, %v1836
      %1838 = vmatmul.f32.gmra.mxu0 %v1782
      %v1839 = vpop.f32.mrf.mxu0
      %v1840 = vadd.f32 0.0, %v1839
      %1841 = vmatmul.f32.gmra.mxu0 %v1785
      %v1842 = vpop.f32.mrf.mxu0
      %v1843 = vadd.f32 0.0, %v1842
      %1844 = vdwg.mxu0
      %1845 = vmatpush.msra.mxu0 0.0
      %1846 = vmatpush.msra.mxu0 0.0
      %1847 = vmatpush.msra.mxu0 0.0
      %1848 = vmatpush.msra.mxu0 0.0
      %1849 = vmatpush.msra.mxu0 0.0
      %1850 = vmatpush.msra.mxu0 0.0
      %1851 = vmatpush.msra.mxu0 0.0
      %1852 = vmatpush.msra.mxu0 0.0
      %1853 = vmatpush.msra.mxu0 0.0
      %1854 = vmatpush.msra.mxu0 0.0
      %1855 = vmatpush.msra.mxu0 0.0
      %1856 = vmatpush.msra.mxu0 0.0
      %1857 = vmatpush.msra.mxu0 %v1757
      %1858 = vmatpush.msra.mxu0 %v1756
      %1859 = vmatpush.msra.mxu0 %v1755
      %1860 = vmatpush.msra.mxu0 %v1754
      %1861 = vmatmul.f32.gmra.mxu0 %v1776
      %v1862 = vpop.f32.mrf.mxu0
      %v1863 = vadd.f32 0.0, %v1862
      %1864 = vmatmul.f32.gmra.mxu0 %v1779
      %v1865 = vpop.f32.mrf.mxu0
      %v1866 = vadd.f32 0.0, %v1865
      %1867 = vmatmul.f32.gmra.mxu0 %v1782
      %v1868 = vpop.f32.mrf.mxu0
      %v1869 = vadd.f32 0.0, %v1868
      %1870 = vmatmul.f32.gmra.mxu0 %v1785
      %v1871 = vpop.f32.mrf.mxu0
      %v1872 = vadd.f32 0.0, %v1871
      %1873 = vdwg.mxu0
      %1874 = vmatpush.msra.mxu0 0.0
      %1875 = vmatpush.msra.mxu0 0.0
      %1876 = vmatpush.msra.mxu0 0.0
      %1877 = vmatpush.msra.mxu0 0.0
      %1878 = vmatpush.msra.mxu0 0.0
      %1879 = vmatpush.msra.mxu0 0.0
      %1880 = vmatpush.msra.mxu0 0.0
      %1881 = vmatpush.msra.mxu0 0.0
      %1882 = vmatpush.msra.mxu0 0.0
      %1883 = vmatpush.msra.mxu0 0.0
      %1884 = vmatpush.msra.mxu0 0.0
      %1885 = vmatpush.msra.mxu0 0.0
      %1886 = vmatpush.msra.mxu0 %v1753
      %1887 = vmatpush.msra.mxu0 %v1752
      %1888 = vmatpush.msra.mxu0 %v1751
      %1889 = vmatpush.msra.mxu0 %v1750
      %1890 = vmatmul.f32.gmra.mxu0 %v1776
      %v1891 = vpop.f32.mrf.mxu0
      %v1892 = vadd.f32 0.0, %v1891
      %1893 = vmatmul.f32.gmra.mxu0 %v1779
      %v1894 = vpop.f32.mrf.mxu0
      %v1895 = vadd.f32 0.0, %v1894
      %1896 = vmatmul.f32.gmra.mxu0 %v1782
      %v1897 = vpop.f32.mrf.mxu0
      %v1898 = vadd.f32 0.0, %v1897
      %1899 = vmatmul.f32.gmra.mxu0 %v1785
      %v1900 = vpop.f32.mrf.mxu0
      %v1901 = vadd.f32 0.0, %v1900
      %1902 = vdwg.mxu0
      %1903 = vmatpush.msra.mxu0 0.0
      %1904 = vmatpush.msra.mxu0 0.0
      %1905 = vmatpush.msra.mxu0 0.0
      %1906 = vmatpush.msra.mxu0 0.0
      %1907 = vmatpush.msra.mxu0 0.0
      %1908 = vmatpush.msra.mxu0 0.0
      %1909 = vmatpush.msra.mxu0 0.0
      %1910 = vmatpush.msra.mxu0 0.0
      %1911 = vmatpush.msra.mxu0 0.0
      %1912 = vmatpush.msra.mxu0 0.0
      %1913 = vmatpush.msra.mxu0 0.0
      %1914 = vmatpush.msra.mxu0 0.0
      %1915 = vmatpush.msra.mxu0 %v1749
      %1916 = vmatpush.msra.mxu0 %v1748
      %1917 = vmatpush.msra.mxu0 %v1747
      %1918 = vmatpush.msra.mxu0 %v1746
      %1919 = vmatmul.f32.gmra.mxu0 %v1776
      %v1920 = vpop.f32.mrf.mxu0
      %v1921 = vadd.f32 0.0, %v1920
      %1922 = vmatmul.f32.gmra.mxu0 %v1779
      %v1923 = vpop.f32.mrf.mxu0
      %v1924 = vadd.f32 0.0, %v1923
      %1925 = vmatmul.f32.gmra.mxu0 %v1782
      %v1926 = vpop.f32.mrf.mxu0
      %v1927 = vadd.f32 0.0, %v1926
      %1928 = vmatmul.f32.gmra.mxu0 %v1785
      %v1929 = vpop.f32.mrf.mxu0
      %v1930 = vadd.f32 0.0, %v1929
      %1931 = vdwg.mxu0
      %1932 = vmatpush.msra.mxu0 0.0
      %1933 = vmatpush.msra.mxu0 0.0
      %1934 = vmatpush.msra.mxu0 0.0
      %1935 = vmatpush.msra.mxu0 0.0
      %1936 = vmatpush.msra.mxu0 0.0
      %1937 = vmatpush.msra.mxu0 0.0
      %1938 = vmatpush.msra.mxu0 0.0
      %1939 = vmatpush.msra.mxu0 0.0
      %1940 = vmatpush.msra.mxu0 0.0
      %1941 = vmatpush.msra.mxu0 0.0
      %1942 = vmatpush.msra.mxu0 0.0
      %1943 = vmatpush.msra.mxu0 0.0
      %1944 = vmatpush.msra.mxu0 %v1769
      %1945 = vmatpush.msra.mxu0 %v1768
      %1946 = vmatpush.msra.mxu0 %v1767
      %1947 = vmatpush.msra.mxu0 %v1766
      %1948 = vmatmul.f32.gmra.mxu0 %v1776
      %v1949 = vpop.f32.mrf.mxu0
      %v1950 = vadd.f32 0.0, %v1949
      %1951 = vmatmul.f32.gmra.mxu0 %v1779
      %v1952 = vpop.f32.mrf.mxu0
      %v1953 = vadd.f32 0.0, %v1952
      %1954 = vmatmul.f32.gmra.mxu0 %v1782
      %v1955 = vpop.f32.mrf.mxu0
      %v1956 = vadd.f32 0.0, %v1955
      %1957 = vmatmul.f32.gmra.mxu0 %v1785
      %v1958 = vpop.f32.mrf.mxu0
      %v1959 = vadd.f32 0.0, %v1958
      %1960 = vdwg.mxu0
      %v1961 = vadd.f32 %v1673, %v1805
      %v1962 = vadd.f32 %v1674, %v1834
      %v1963 = vadd.f32 %v1675, %v1863
      %v1964 = vadd.f32 %v1676, %v1892
      %v1965 = vadd.f32 %v1677, %v1921
      %v1966 = vadd.f32 %v1678, %v1950
      %v1967 = vadd.f32 %v1679, %v1808
      %v1968 = vadd.f32 %v1680, %v1837
      %v1969 = vadd.f32 %v1681, %v1866
      %v1970 = vadd.f32 %v1682, %v1895
      %v1971 = vadd.f32 %v1683, %v1924
      %v1972 = vadd.f32 %v1684, %v1953
      %v1973 = vadd.f32 %v1685, %v1811
      %v1974 = vadd.f32 %v1686, %v1840
      %v1975 = vadd.f32 %v1687, %v1869
      %v1976 = vadd.f32 %v1688, %v1898
      %v1977 = vadd.f32 %v1689, %v1927
      %v1978 = vadd.f32 %v1690, %v1956
      %v1979 = vadd.f32 %v1691, %v1814
      %v1980 = vadd.f32 %v1692, %v1843
      %v1981 = vadd.f32 %v1693, %v1872
      %v1982 = vadd.f32 %v1694, %v1901
      %v1983 = vadd.f32 %v1695, %v1930
      %v1984 = vadd.f32 %v1696, %v1959
      %1985 = vrot.lane.b32.xlu0 %v338, 111
      %v1986 = vpop.permute.xlu0 %1985
      %1987 = vrot.lane.b32.xlu0 %v344, 111
      %v1988 = vpop.permute.xlu0 %1987
      %1989 = vrot.lane.b32.xlu0 %v350, 111
      %v1990 = vpop.permute.xlu0 %1989
      %1991 = vrot.lane.b32.xlu0 %v356, 111
      %v1992 = vpop.permute.xlu0 %1991
      %1993 = vrot.lane.b32.xlu0 %v339, 111
      %v1994 = vpop.permute.xlu0 %1993
      %1995 = vrot.lane.b32.xlu0 %v345, 111
      %v1996 = vpop.permute.xlu0 %1995
      %1997 = vrot.lane.b32.xlu0 %v351, 111
      %v1998 = vpop.permute.xlu0 %1997
      %1999 = vrot.lane.b32.xlu0 %v357, 111
      %v2000 = vpop.permute.xlu0 %1999
      %2001 = vrot.lane.b32.xlu0 %v340, 111
      %v2002 = vpop.permute.xlu0 %2001
      %2003 = vrot.lane.b32.xlu0 %v346, 111
      %v2004 = vpop.permute.xlu0 %2003
      %2005 = vrot.lane.b32.xlu0 %v352, 111
      %v2006 = vpop.permute.xlu0 %2005
      %2007 = vrot.lane.b32.xlu0 %v358, 111
      %v2008 = vpop.permute.xlu0 %2007
      %2009 = vrot.lane.b32.xlu0 %v341, 111
      %v2010 = vpop.permute.xlu0 %2009
      %2011 = vrot.lane.b32.xlu0 %v347, 111
      %v2012 = vpop.permute.xlu0 %2011
      %2013 = vrot.lane.b32.xlu0 %v353, 111
      %v2014 = vpop.permute.xlu0 %2013
      %2015 = vrot.lane.b32.xlu0 %v359, 111
      %v2016 = vpop.permute.xlu0 %2015
      %2017 = vrot.lane.b32.xlu0 %v342, 111
      %v2018 = vpop.permute.xlu0 %2017
      %2019 = vrot.lane.b32.xlu0 %v348, 111
      %v2020 = vpop.permute.xlu0 %2019
      %2021 = vrot.lane.b32.xlu0 %v354, 111
      %v2022 = vpop.permute.xlu0 %2021
      %2023 = vrot.lane.b32.xlu0 %v360, 111
      %v2024 = vpop.permute.xlu0 %2023
      %2025 = vrot.lane.b32.xlu0 %v343, 111
      %v2026 = vpop.permute.xlu0 %2025
      %2027 = vrot.lane.b32.xlu0 %v349, 111
      %v2028 = vpop.permute.xlu0 %2027
      %2029 = vrot.lane.b32.xlu0 %v355, 111
      %v2030 = vpop.permute.xlu0 %2029
      %2031 = vrot.lane.b32.xlu0 %v361, 111
      %v2032 = vpop.permute.xlu0 %2031
      %vm2033 = vcmp.lt.s32.totalorder %v425, 111
      %v2034 = vsel %vm2033, %v2018, %v2026
      %v2035 = vsel %vm2033, %v2020, %v2028
      %v2036 = vsel %vm2033, %v2022, %v2030
      %v2037 = vsel %vm2033, %v2024, %v2032
      %v2038 = vsel %vm2033, %v2010, %v2018
      %v2039 = vsel %vm2033, %v2012, %v2020
      %v2040 = vsel %vm2033, %v2014, %v2022
      %v2041 = vsel %vm2033, %v2016, %v2024
      %v2042 = vsel %vm2033, %v2002, %v2010
      %v2043 = vsel %vm2033, %v2004, %v2012
      %v2044 = vsel %vm2033, %v2006, %v2014
      %v2045 = vsel %vm2033, %v2008, %v2016
      %v2046 = vsel %vm2033, %v1994, %v2002
      %v2047 = vsel %vm2033, %v1996, %v2004
      %v2048 = vsel %vm2033, %v1998, %v2006
      %v2049 = vsel %vm2033, %v2000, %v2008
      %v2050 = vsel %vm2033, %v1986, %v1994
      %v2051 = vsel %vm2033, %v1988, %v1996
      %v2052 = vsel %vm2033, %v1990, %v1998
      %v2053 = vsel %vm2033, %v1992, %v2000
      %v2054 = vsel %vm2033, %v2026, %v1986
      %v2055 = vsel %vm2033, %v2028, %v1988
      %v2056 = vsel %vm2033, %v2030, %v1990
      %v2057 = vsel %vm2033, %v2032, %v1992
      %s2058 = scalar_lea.vmem %s209, 192
      %v2059 = vld [vmem:[%s2058] sm:$0xff]
      %v2060 = vld [vmem:[%s2058 + $0x8] sm:$0xff]
      %v2061 = vld [vmem:[%s2058 + $0x10] sm:$0xff]
      %v2062 = vld [vmem:[%s2058 + $0x18] sm:$0xff]
      %v2064 = vsel %vm533, %v2059, 0
      %v2067 = vsel %vm533, %v2060, 0
      %v2070 = vsel %vm533, %v2061, 0
      %v2073 = vsel %vm533, %v2062, 0
      %2075 = vmatpush.msra.mxu0 0.0
      %2076 = vmatpush.msra.mxu0 0.0
      %2077 = vmatpush.msra.mxu0 0.0
      %2078 = vmatpush.msra.mxu0 0.0
      %2079 = vmatpush.msra.mxu0 0.0
      %2080 = vmatpush.msra.mxu0 0.0
      %2081 = vmatpush.msra.mxu0 0.0
      %2082 = vmatpush.msra.mxu0 0.0
      %2083 = vmatpush.msra.mxu0 0.0
      %2084 = vmatpush.msra.mxu0 0.0
      %2085 = vmatpush.msra.mxu0 0.0
      %2086 = vmatpush.msra.mxu0 0.0
      %2087 = vmatpush.msra.mxu0 %v2053
      %2088 = vmatpush.msra.mxu0 %v2052
      %2089 = vmatpush.msra.mxu0 %v2051
      %2090 = vmatpush.msra.mxu0 %v2050
      %2091 = vmatmul.f32.gmra.mxu0 %v2064
      %v2092 = vpop.f32.mrf.mxu0
      %v2093 = vadd.f32 0.0, %v2092
      %2094 = vmatmul.f32.gmra.mxu0 %v2067
      %v2095 = vpop.f32.mrf.mxu0
      %v2096 = vadd.f32 0.0, %v2095
      %2097 = vmatmul.f32.gmra.mxu0 %v2070
      %v2098 = vpop.f32.mrf.mxu0
      %v2099 = vadd.f32 0.0, %v2098
      %2100 = vmatmul.f32.gmra.mxu0 %v2073
      %v2101 = vpop.f32.mrf.mxu0
      %v2102 = vadd.f32 0.0, %v2101
      %2103 = vdwg.mxu0
      %2104 = vmatpush.msra.mxu0 0.0
      %2105 = vmatpush.msra.mxu0 0.0
      %2106 = vmatpush.msra.mxu0 0.0
      %2107 = vmatpush.msra.mxu0 0.0
      %2108 = vmatpush.msra.mxu0 0.0
      %2109 = vmatpush.msra.mxu0 0.0
      %2110 = vmatpush.msra.mxu0 0.0
      %2111 = vmatpush.msra.mxu0 0.0
      %2112 = vmatpush.msra.mxu0 0.0
      %2113 = vmatpush.msra.mxu0 0.0
      %2114 = vmatpush.msra.mxu0 0.0
      %2115 = vmatpush.msra.mxu0 0.0
      %2116 = vmatpush.msra.mxu0 %v2049
      %2117 = vmatpush.msra.mxu0 %v2048
      %2118 = vmatpush.msra.mxu0 %v2047
      %2119 = vmatpush.msra.mxu0 %v2046
      %2120 = vmatmul.f32.gmra.mxu0 %v2064
      %v2121 = vpop.f32.mrf.mxu0
      %v2122 = vadd.f32 0.0, %v2121
      %2123 = vmatmul.f32.gmra.mxu0 %v2067
      %v2124 = vpop.f32.mrf.mxu0
      %v2125 = vadd.f32 0.0, %v2124
      %2126 = vmatmul.f32.gmra.mxu0 %v2070
      %v2127 = vpop.f32.mrf.mxu0
      %v2128 = vadd.f32 0.0, %v2127
      %2129 = vmatmul.f32.gmra.mxu0 %v2073
      %v2130 = vpop.f32.mrf.mxu0
      %v2131 = vadd.f32 0.0, %v2130
      %2132 = vdwg.mxu0
      %2133 = vmatpush.msra.mxu0 0.0
      %2134 = vmatpush.msra.mxu0 0.0
      %2135 = vmatpush.msra.mxu0 0.0
      %2136 = vmatpush.msra.mxu0 0.0
      %2137 = vmatpush.msra.mxu0 0.0
      %2138 = vmatpush.msra.mxu0 0.0
      %2139 = vmatpush.msra.mxu0 0.0
      %2140 = vmatpush.msra.mxu0 0.0
      %2141 = vmatpush.msra.mxu0 0.0
      %2142 = vmatpush.msra.mxu0 0.0
      %2143 = vmatpush.msra.mxu0 0.0
      %2144 = vmatpush.msra.mxu0 0.0
      %2145 = vmatpush.msra.mxu0 %v2045
      %2146 = vmatpush.msra.mxu0 %v2044
      %2147 = vmatpush.msra.mxu0 %v2043
      %2148 = vmatpush.msra.mxu0 %v2042
      %2149 = vmatmul.f32.gmra.mxu0 %v2064
      %v2150 = vpop.f32.mrf.mxu0
      %v2151 = vadd.f32 0.0, %v2150
      %2152 = vmatmul.f32.gmra.mxu0 %v2067
      %v2153 = vpop.f32.mrf.mxu0
      %v2154 = vadd.f32 0.0, %v2153
      %2155 = vmatmul.f32.gmra.mxu0 %v2070
      %v2156 = vpop.f32.mrf.mxu0
      %v2157 = vadd.f32 0.0, %v2156
      %2158 = vmatmul.f32.gmra.mxu0 %v2073
      %v2159 = vpop.f32.mrf.mxu0
      %v2160 = vadd.f32 0.0, %v2159
      %2161 = vdwg.mxu0
      %2162 = vmatpush.msra.mxu0 0.0
      %2163 = vmatpush.msra.mxu0 0.0
      %2164 = vmatpush.msra.mxu0 0.0
      %2165 = vmatpush.msra.mxu0 0.0
      %2166 = vmatpush.msra.mxu0 0.0
      %2167 = vmatpush.msra.mxu0 0.0
      %2168 = vmatpush.msra.mxu0 0.0
      %2169 = vmatpush.msra.mxu0 0.0
      %2170 = vmatpush.msra.mxu0 0.0
      %2171 = vmatpush.msra.mxu0 0.0
      %2172 = vmatpush.msra.mxu0 0.0
      %2173 = vmatpush.msra.mxu0 0.0
      %2174 = vmatpush.msra.mxu0 %v2041
      %2175 = vmatpush.msra.mxu0 %v2040
      %2176 = vmatpush.msra.mxu0 %v2039
      %2177 = vmatpush.msra.mxu0 %v2038
      %2178 = vmatmul.f32.gmra.mxu0 %v2064
      %v2179 = vpop.f32.mrf.mxu0
      %v2180 = vadd.f32 0.0, %v2179
      %2181 = vmatmul.f32.gmra.mxu0 %v2067
      %v2182 = vpop.f32.mrf.mxu0
      %v2183 = vadd.f32 0.0, %v2182
      %2184 = vmatmul.f32.gmra.mxu0 %v2070
      %v2185 = vpop.f32.mrf.mxu0
      %v2186 = vadd.f32 0.0, %v2185
      %2187 = vmatmul.f32.gmra.mxu0 %v2073
      %v2188 = vpop.f32.mrf.mxu0
      %v2189 = vadd.f32 0.0, %v2188
      %2190 = vdwg.mxu0
      %2191 = vmatpush.msra.mxu0 0.0
      %2192 = vmatpush.msra.mxu0 0.0
      %2193 = vmatpush.msra.mxu0 0.0
      %2194 = vmatpush.msra.mxu0 0.0
      %2195 = vmatpush.msra.mxu0 0.0
      %2196 = vmatpush.msra.mxu0 0.0
      %2197 = vmatpush.msra.mxu0 0.0
      %2198 = vmatpush.msra.mxu0 0.0
      %2199 = vmatpush.msra.mxu0 0.0
      %2200 = vmatpush.msra.mxu0 0.0
      %2201 = vmatpush.msra.mxu0 0.0
      %2202 = vmatpush.msra.mxu0 0.0
      %2203 = vmatpush.msra.mxu0 %v2037
      %2204 = vmatpush.msra.mxu0 %v2036
      %2205 = vmatpush.msra.mxu0 %v2035
      %2206 = vmatpush.msra.mxu0 %v2034
      %2207 = vmatmul.f32.gmra.mxu0 %v2064
      %v2208 = vpop.f32.mrf.mxu0
      %v2209 = vadd.f32 0.0, %v2208
      %2210 = vmatmul.f32.gmra.mxu0 %v2067
      %v2211 = vpop.f32.mrf.mxu0
      %v2212 = vadd.f32 0.0, %v2211
      %2213 = vmatmul.f32.gmra.mxu0 %v2070
      %v2214 = vpop.f32.mrf.mxu0
      %v2215 = vadd.f32 0.0, %v2214
      %2216 = vmatmul.f32.gmra.mxu0 %v2073
      %v2217 = vpop.f32.mrf.mxu0
      %v2218 = vadd.f32 0.0, %v2217
      %2219 = vdwg.mxu0
      %2220 = vmatpush.msra.mxu0 0.0
      %2221 = vmatpush.msra.mxu0 0.0
      %2222 = vmatpush.msra.mxu0 0.0
      %2223 = vmatpush.msra.mxu0 0.0
      %2224 = vmatpush.msra.mxu0 0.0
      %2225 = vmatpush.msra.mxu0 0.0
      %2226 = vmatpush.msra.mxu0 0.0
      %2227 = vmatpush.msra.mxu0 0.0
      %2228 = vmatpush.msra.mxu0 0.0
      %2229 = vmatpush.msra.mxu0 0.0
      %2230 = vmatpush.msra.mxu0 0.0
      %2231 = vmatpush.msra.mxu0 0.0
      %2232 = vmatpush.msra.mxu0 %v2057
      %2233 = vmatpush.msra.mxu0 %v2056
      %2234 = vmatpush.msra.mxu0 %v2055
      %2235 = vmatpush.msra.mxu0 %v2054
      %2236 = vmatmul.f32.gmra.mxu0 %v2064
      %v2237 = vpop.f32.mrf.mxu0
      %v2238 = vadd.f32 0.0, %v2237
      %2239 = vmatmul.f32.gmra.mxu0 %v2067
      %v2240 = vpop.f32.mrf.mxu0
      %v2241 = vadd.f32 0.0, %v2240
      %2242 = vmatmul.f32.gmra.mxu0 %v2070
      %v2243 = vpop.f32.mrf.mxu0
      %v2244 = vadd.f32 0.0, %v2243
      %2245 = vmatmul.f32.gmra.mxu0 %v2073
      %v2246 = vpop.f32.mrf.mxu0
      %v2247 = vadd.f32 0.0, %v2246
      %2248 = vdwg.mxu0
      %v2249 = vadd.f32 %v1961, %v2093
      %v2250 = vadd.f32 %v1962, %v2122
      %v2251 = vadd.f32 %v1963, %v2151
      %v2252 = vadd.f32 %v1964, %v2180
      %v2253 = vadd.f32 %v1965, %v2209
      %v2254 = vadd.f32 %v1966, %v2238
      %v2255 = vadd.f32 %v1967, %v2096
      %v2256 = vadd.f32 %v1968, %v2125
      %v2257 = vadd.f32 %v1969, %v2154
      %v2258 = vadd.f32 %v1970, %v2183
      %v2259 = vadd.f32 %v1971, %v2212
      %v2260 = vadd.f32 %v1972, %v2241
      %v2261 = vadd.f32 %v1973, %v2099
      %v2262 = vadd.f32 %v1974, %v2128
      %v2263 = vadd.f32 %v1975, %v2157
      %v2264 = vadd.f32 %v1976, %v2186
      %v2265 = vadd.f32 %v1977, %v2215
      %v2266 = vadd.f32 %v1978, %v2244
      %v2267 = vadd.f32 %v1979, %v2102
      %v2268 = vadd.f32 %v1980, %v2131
      %v2269 = vadd.f32 %v1981, %v2160
      %v2270 = vadd.f32 %v1982, %v2189
      %v2271 = vadd.f32 %v1983, %v2218
      %v2272 = vadd.f32 %v1984, %v2247
      %2273 = vrot.lane.b32.xlu0 %v338, 110
      %v2274 = vpop.permute.xlu0 %2273
      %2275 = vrot.lane.b32.xlu0 %v344, 110
      %v2276 = vpop.permute.xlu0 %2275
      %2277 = vrot.lane.b32.xlu0 %v350, 110
      %v2278 = vpop.permute.xlu0 %2277
      %2279 = vrot.lane.b32.xlu0 %v356, 110
      %v2280 = vpop.permute.xlu0 %2279
      %2281 = vrot.lane.b32.xlu0 %v339, 110
      %v2282 = vpop.permute.xlu0 %2281
      %2283 = vrot.lane.b32.xlu0 %v345, 110
      %v2284 = vpop.permute.xlu0 %2283
      %2285 = vrot.lane.b32.xlu0 %v351, 110
      %v2286 = vpop.permute.xlu0 %2285
      %2287 = vrot.lane.b32.xlu0 %v357, 110
      %v2288 = vpop.permute.xlu0 %2287
      %2289 = vrot.lane.b32.xlu0 %v340, 110
      %v2290 = vpop.permute.xlu0 %2289
      %2291 = vrot.lane.b32.xlu0 %v346, 110
      %v2292 = vpop.permute.xlu0 %2291
      %2293 = vrot.lane.b32.xlu0 %v352, 110
      %v2294 = vpop.permute.xlu0 %2293
      %2295 = vrot.lane.b32.xlu0 %v358, 110
      %v2296 = vpop.permute.xlu0 %2295
      %2297 = vrot.lane.b32.xlu0 %v341, 110
      %v2298 = vpop.permute.xlu0 %2297
      %2299 = vrot.lane.b32.xlu0 %v347, 110
      %v2300 = vpop.permute.xlu0 %2299
      %2301 = vrot.lane.b32.xlu0 %v353, 110
      %v2302 = vpop.permute.xlu0 %2301
      %2303 = vrot.lane.b32.xlu0 %v359, 110
      %v2304 = vpop.permute.xlu0 %2303
      %2305 = vrot.lane.b32.xlu0 %v342, 110
      %v2306 = vpop.permute.xlu0 %2305
      %2307 = vrot.lane.b32.xlu0 %v348, 110
      %v2308 = vpop.permute.xlu0 %2307
      %2309 = vrot.lane.b32.xlu0 %v354, 110
      %v2310 = vpop.permute.xlu0 %2309
      %2311 = vrot.lane.b32.xlu0 %v360, 110
      %v2312 = vpop.permute.xlu0 %2311
      %2313 = vrot.lane.b32.xlu0 %v343, 110
      %v2314 = vpop.permute.xlu0 %2313
      %2315 = vrot.lane.b32.xlu0 %v349, 110
      %v2316 = vpop.permute.xlu0 %2315
      %2317 = vrot.lane.b32.xlu0 %v355, 110
      %v2318 = vpop.permute.xlu0 %2317
      %2319 = vrot.lane.b32.xlu0 %v361, 110
      %v2320 = vpop.permute.xlu0 %2319
      %vm2321 = vcmp.lt.s32.totalorder %v425, 110
      %v2322 = vsel %vm2321, %v2306, %v2314
      %v2323 = vsel %vm2321, %v2308, %v2316
      %v2324 = vsel %vm2321, %v2310, %v2318
      %v2325 = vsel %vm2321, %v2312, %v2320
      %v2326 = vsel %vm2321, %v2298, %v2306
      %v2327 = vsel %vm2321, %v2300, %v2308
      %v2328 = vsel %vm2321, %v2302, %v2310
      %v2329 = vsel %vm2321, %v2304, %v2312
      %v2330 = vsel %vm2321, %v2290, %v2298
      %v2331 = vsel %vm2321, %v2292, %v2300
      %v2332 = vsel %vm2321, %v2294, %v2302
      %v2333 = vsel %vm2321, %v2296, %v2304
      %v2334 = vsel %vm2321, %v2282, %v2290
      %v2335 = vsel %vm2321, %v2284, %v2292
      %v2336 = vsel %vm2321, %v2286, %v2294
      %v2337 = vsel %vm2321, %v2288, %v2296
      %v2338 = vsel %vm2321, %v2274, %v2282
      %v2339 = vsel %vm2321, %v2276, %v2284
      %v2340 = vsel %vm2321, %v2278, %v2286
      %v2341 = vsel %vm2321, %v2280, %v2288
      %v2342 = vsel %vm2321, %v2314, %v2274
      %v2343 = vsel %vm2321, %v2316, %v2276
      %v2344 = vsel %vm2321, %v2318, %v2278
      %v2345 = vsel %vm2321, %v2320, %v2280
      %s2346 = scalar_lea.vmem %s209, 224
      %v2347 = vld [vmem:[%s2346] sm:$0xff]
      %v2348 = vld [vmem:[%s2346 + $0x8] sm:$0xff]
      %v2349 = vld [vmem:[%s2346 + $0x10] sm:$0xff]
      %v2350 = vld [vmem:[%s2346 + $0x18] sm:$0xff]
      %v2352 = vsel %vm533, %v2347, 0
      %v2355 = vsel %vm533, %v2348, 0
      %v2358 = vsel %vm533, %v2349, 0
      %v2361 = vsel %vm533, %v2350, 0
      %2363 = vmatpush.msra.mxu0 0.0
      %2364 = vmatpush.msra.mxu0 0.0
      %2365 = vmatpush.msra.mxu0 0.0
      %2366 = vmatpush.msra.mxu0 0.0
      %2367 = vmatpush.msra.mxu0 0.0
      %2368 = vmatpush.msra.mxu0 0.0
      %2369 = vmatpush.msra.mxu0 0.0
      %2370 = vmatpush.msra.mxu0 0.0
      %2371 = vmatpush.msra.mxu0 0.0
      %2372 = vmatpush.msra.mxu0 0.0
      %2373 = vmatpush.msra.mxu0 0.0
      %2374 = vmatpush.msra.mxu0 0.0
      %2375 = vmatpush.msra.mxu0 %v2341
      %2376 = vmatpush.msra.mxu0 %v2340
      %2377 = vmatpush.msra.mxu0 %v2339
      %2378 = vmatpush.msra.mxu0 %v2338
      %2379 = vmatmul.f32.gmra.mxu0 %v2352
      %v2380 = vpop.f32.mrf.mxu0
      %v2381 = vadd.f32 0.0, %v2380
      %2382 = vmatmul.f32.gmra.mxu0 %v2355
      %v2383 = vpop.f32.mrf.mxu0
      %v2384 = vadd.f32 0.0, %v2383
      %2385 = vmatmul.f32.gmra.mxu0 %v2358
      %v2386 = vpop.f32.mrf.mxu0
      %v2387 = vadd.f32 0.0, %v2386
      %2388 = vmatmul.f32.gmra.mxu0 %v2361
      %v2389 = vpop.f32.mrf.mxu0
      %v2390 = vadd.f32 0.0, %v2389
      %2391 = vdwg.mxu0
      %2392 = vmatpush.msra.mxu0 0.0
      %2393 = vmatpush.msra.mxu0 0.0
      %2394 = vmatpush.msra.mxu0 0.0
      %2395 = vmatpush.msra.mxu0 0.0
      %2396 = vmatpush.msra.mxu0 0.0
      %2397 = vmatpush.msra.mxu0 0.0
      %2398 = vmatpush.msra.mxu0 0.0
      %2399 = vmatpush.msra.mxu0 0.0
      %2400 = vmatpush.msra.mxu0 0.0
      %2401 = vmatpush.msra.mxu0 0.0
      %2402 = vmatpush.msra.mxu0 0.0
      %2403 = vmatpush.msra.mxu0 0.0
      %2404 = vmatpush.msra.mxu0 %v2337
      %2405 = vmatpush.msra.mxu0 %v2336
      %2406 = vmatpush.msra.mxu0 %v2335
      %2407 = vmatpush.msra.mxu0 %v2334
      %2408 = vmatmul.f32.gmra.mxu0 %v2352
      %v2409 = vpop.f32.mrf.mxu0
      %v2410 = vadd.f32 0.0, %v2409
      %2411 = vmatmul.f32.gmra.mxu0 %v2355
      %v2412 = vpop.f32.mrf.mxu0
      %v2413 = vadd.f32 0.0, %v2412
      %2414 = vmatmul.f32.gmra.mxu0 %v2358
      %v2415 = vpop.f32.mrf.mxu0
      %v2416 = vadd.f32 0.0, %v2415
      %2417 = vmatmul.f32.gmra.mxu0 %v2361
      %v2418 = vpop.f32.mrf.mxu0
      %v2419 = vadd.f32 0.0, %v2418
      %2420 = vdwg.mxu0
      %2421 = vmatpush.msra.mxu0 0.0
      %2422 = vmatpush.msra.mxu0 0.0
      %2423 = vmatpush.msra.mxu0 0.0
      %2424 = vmatpush.msra.mxu0 0.0
      %2425 = vmatpush.msra.mxu0 0.0
      %2426 = vmatpush.msra.mxu0 0.0
      %2427 = vmatpush.msra.mxu0 0.0
      %2428 = vmatpush.msra.mxu0 0.0
      %2429 = vmatpush.msra.mxu0 0.0
      %2430 = vmatpush.msra.mxu0 0.0
      %2431 = vmatpush.msra.mxu0 0.0
      %2432 = vmatpush.msra.mxu0 0.0
      %2433 = vmatpush.msra.mxu0 %v2333
      %2434 = vmatpush.msra.mxu0 %v2332
      %2435 = vmatpush.msra.mxu0 %v2331
      %2436 = vmatpush.msra.mxu0 %v2330
      %2437 = vmatmul.f32.gmra.mxu0 %v2352
      %v2438 = vpop.f32.mrf.mxu0
      %v2439 = vadd.f32 0.0, %v2438
      %2440 = vmatmul.f32.gmra.mxu0 %v2355
      %v2441 = vpop.f32.mrf.mxu0
      %v2442 = vadd.f32 0.0, %v2441
      %2443 = vmatmul.f32.gmra.mxu0 %v2358
      %v2444 = vpop.f32.mrf.mxu0
      %v2445 = vadd.f32 0.0, %v2444
      %2446 = vmatmul.f32.gmra.mxu0 %v2361
      %v2447 = vpop.f32.mrf.mxu0
      %v2448 = vadd.f32 0.0, %v2447
      %2449 = vdwg.mxu0
      %2450 = vmatpush.msra.mxu0 0.0
      %2451 = vmatpush.msra.mxu0 0.0
      %2452 = vmatpush.msra.mxu0 0.0
      %2453 = vmatpush.msra.mxu0 0.0
      %2454 = vmatpush.msra.mxu0 0.0
      %2455 = vmatpush.msra.mxu0 0.0
      %2456 = vmatpush.msra.mxu0 0.0
      %2457 = vmatpush.msra.mxu0 0.0
      %2458 = vmatpush.msra.mxu0 0.0
      %2459 = vmatpush.msra.mxu0 0.0
      %2460 = vmatpush.msra.mxu0 0.0
      %2461 = vmatpush.msra.mxu0 0.0
      %2462 = vmatpush.msra.mxu0 %v2329
      %2463 = vmatpush.msra.mxu0 %v2328
      %2464 = vmatpush.msra.mxu0 %v2327
      %2465 = vmatpush.msra.mxu0 %v2326
      %2466 = vmatmul.f32.gmra.mxu0 %v2352
      %v2467 = vpop.f32.mrf.mxu0
      %v2468 = vadd.f32 0.0, %v2467
      %2469 = vmatmul.f32.gmra.mxu0 %v2355
      %v2470 = vpop.f32.mrf.mxu0
      %v2471 = vadd.f32 0.0, %v2470
      %2472 = vmatmul.f32.gmra.mxu0 %v2358
      %v2473 = vpop.f32.mrf.mxu0
      %v2474 = vadd.f32 0.0, %v2473
      %2475 = vmatmul.f32.gmra.mxu0 %v2361
      %v2476 = vpop.f32.mrf.mxu0
      %v2477 = vadd.f32 0.0, %v2476
      %2478 = vdwg.mxu0
      %2479 = vmatpush.msra.mxu0 0.0
      %2480 = vmatpush.msra.mxu0 0.0
      %2481 = vmatpush.msra.mxu0 0.0
      %2482 = vmatpush.msra.mxu0 0.0
      %2483 = vmatpush.msra.mxu0 0.0
      %2484 = vmatpush.msra.mxu0 0.0
      %2485 = vmatpush.msra.mxu0 0.0
      %2486 = vmatpush.msra.mxu0 0.0
      %2487 = vmatpush.msra.mxu0 0.0
      %2488 = vmatpush.msra.mxu0 0.0
      %2489 = vmatpush.msra.mxu0 0.0
      %2490 = vmatpush.msra.mxu0 0.0
      %2491 = vmatpush.msra.mxu0 %v2325
      %2492 = vmatpush.msra.mxu0 %v2324
      %2493 = vmatpush.msra.mxu0 %v2323
      %2494 = vmatpush.msra.mxu0 %v2322
      %2495 = vmatmul.f32.gmra.mxu0 %v2352
      %v2496 = vpop.f32.mrf.mxu0
      %v2497 = vadd.f32 0.0, %v2496
      %2498 = vmatmul.f32.gmra.mxu0 %v2355
      %v2499 = vpop.f32.mrf.mxu0
      %v2500 = vadd.f32 0.0, %v2499
      %2501 = vmatmul.f32.gmra.mxu0 %v2358
      %v2502 = vpop.f32.mrf.mxu0
      %v2503 = vadd.f32 0.0, %v2502
      %2504 = vmatmul.f32.gmra.mxu0 %v2361
      %v2505 = vpop.f32.mrf.mxu0
      %v2506 = vadd.f32 0.0, %v2505
      %2507 = vdwg.mxu0
      %2508 = vmatpush.msra.mxu0 0.0
      %2509 = vmatpush.msra.mxu0 0.0
      %2510 = vmatpush.msra.mxu0 0.0
      %2511 = vmatpush.msra.mxu0 0.0
      %2512 = vmatpush.msra.mxu0 0.0
      %2513 = vmatpush.msra.mxu0 0.0
      %2514 = vmatpush.msra.mxu0 0.0
      %2515 = vmatpush.msra.mxu0 0.0
      %2516 = vmatpush.msra.mxu0 0.0
      %2517 = vmatpush.msra.mxu0 0.0
      %2518 = vmatpush.msra.mxu0 0.0
      %2519 = vmatpush.msra.mxu0 0.0
      %2520 = vmatpush.msra.mxu0 %v2345
      %2521 = vmatpush.msra.mxu0 %v2344
      %2522 = vmatpush.msra.mxu0 %v2343
      %2523 = vmatpush.msra.mxu0 %v2342
      %2524 = vmatmul.f32.gmra.mxu0 %v2352
      %v2525 = vpop.f32.mrf.mxu0
      %v2526 = vadd.f32 0.0, %v2525
      %2527 = vmatmul.f32.gmra.mxu0 %v2355
      %v2528 = vpop.f32.mrf.mxu0
      %v2529 = vadd.f32 0.0, %v2528
      %2530 = vmatmul.f32.gmra.mxu0 %v2358
      %v2531 = vpop.f32.mrf.mxu0
      %v2532 = vadd.f32 0.0, %v2531
      %2533 = vmatmul.f32.gmra.mxu0 %v2361
      %v2534 = vpop.f32.mrf.mxu0
      %v2535 = vadd.f32 0.0, %v2534
      %2536 = vdwg.mxu0
      %v2537 = vadd.f32 %v2249, %v2381
      %v2538 = vadd.f32 %v2250, %v2410
      %v2539 = vadd.f32 %v2251, %v2439
      %v2540 = vadd.f32 %v2252, %v2468
      %v2541 = vadd.f32 %v2253, %v2497
      %v2542 = vadd.f32 %v2254, %v2526
      %v2543 = vadd.f32 %v2255, %v2384
      %v2544 = vadd.f32 %v2256, %v2413
      %v2545 = vadd.f32 %v2257, %v2442
      %v2546 = vadd.f32 %v2258, %v2471
      %v2547 = vadd.f32 %v2259, %v2500
      %v2548 = vadd.f32 %v2260, %v2529
      %v2549 = vadd.f32 %v2261, %v2387
      %v2550 = vadd.f32 %v2262, %v2416
      %v2551 = vadd.f32 %v2263, %v2445
      %v2552 = vadd.f32 %v2264, %v2474
      %v2553 = vadd.f32 %v2265, %v2503
      %v2554 = vadd.f32 %v2266, %v2532
      %v2555 = vadd.f32 %v2267, %v2390
      %v2556 = vadd.f32 %v2268, %v2419
      %v2557 = vadd.f32 %v2269, %v2448
      %v2558 = vadd.f32 %v2270, %v2477
      %v2559 = vadd.f32 %v2271, %v2506
      %v2560 = vadd.f32 %v2272, %v2535
      %2561 = vrot.lane.b32.xlu0 %v338, 109
      %v2562 = vpop.permute.xlu0 %2561
      %2563 = vrot.lane.b32.xlu0 %v344, 109
      %v2564 = vpop.permute.xlu0 %2563
      %2565 = vrot.lane.b32.xlu0 %v350, 109
      %v2566 = vpop.permute.xlu0 %2565
      %2567 = vrot.lane.b32.xlu0 %v356, 109
      %v2568 = vpop.permute.xlu0 %2567
      %2569 = vrot.lane.b32.xlu0 %v339, 109
      %v2570 = vpop.permute.xlu0 %2569
      %2571 = vrot.lane.b32.xlu0 %v345, 109
      %v2572 = vpop.permute.xlu0 %2571
      %2573 = vrot.lane.b32.xlu0 %v351, 109
      %v2574 = vpop.permute.xlu0 %2573
      %2575 = vrot.lane.b32.xlu0 %v357, 109
      %v2576 = vpop.permute.xlu0 %2575
      %2577 = vrot.lane.b32.xlu0 %v340, 109
      %v2578 = vpop.permute.xlu0 %2577
      %2579 = vrot.lane.b32.xlu0 %v346, 109
      %v2580 = vpop.permute.xlu0 %2579
      %2581 = vrot.lane.b32.xlu0 %v352, 109
      %v2582 = vpop.permute.xlu0 %2581
      %2583 = vrot.lane.b32.xlu0 %v358, 109
      %v2584 = vpop.permute.xlu0 %2583
      %2585 = vrot.lane.b32.xlu0 %v341, 109
      %v2586 = vpop.permute.xlu0 %2585
      %2587 = vrot.lane.b32.xlu0 %v347, 109
      %v2588 = vpop.permute.xlu0 %2587
      %2589 = vrot.lane.b32.xlu0 %v353, 109
      %v2590 = vpop.permute.xlu0 %2589
      %2591 = vrot.lane.b32.xlu0 %v359, 109
      %v2592 = vpop.permute.xlu0 %2591
      %2593 = vrot.lane.b32.xlu0 %v342, 109
      %v2594 = vpop.permute.xlu0 %2593
      %2595 = vrot.lane.b32.xlu0 %v348, 109
      %v2596 = vpop.permute.xlu0 %2595
      %2597 = vrot.lane.b32.xlu0 %v354, 109
      %v2598 = vpop.permute.xlu0 %2597
      %2599 = vrot.lane.b32.xlu0 %v360, 109
      %v2600 = vpop.permute.xlu0 %2599
      %2601 = vrot.lane.b32.xlu0 %v343, 109
      %v2602 = vpop.permute.xlu0 %2601
      %2603 = vrot.lane.b32.xlu0 %v349, 109
      %v2604 = vpop.permute.xlu0 %2603
      %2605 = vrot.lane.b32.xlu0 %v355, 109
      %v2606 = vpop.permute.xlu0 %2605
      %2607 = vrot.lane.b32.xlu0 %v361, 109
      %v2608 = vpop.permute.xlu0 %2607
      %vm2609 = vcmp.lt.s32.totalorder %v425, 109
      %v2610 = vsel %vm2609, %v2594, %v2602
      %v2611 = vsel %vm2609, %v2596, %v2604
      %v2612 = vsel %vm2609, %v2598, %v2606
      %v2613 = vsel %vm2609, %v2600, %v2608
      %v2614 = vsel %vm2609, %v2586, %v2594
      %v2615 = vsel %vm2609, %v2588, %v2596
      %v2616 = vsel %vm2609, %v2590, %v2598
      %v2617 = vsel %vm2609, %v2592, %v2600
      %v2618 = vsel %vm2609, %v2578, %v2586
      %v2619 = vsel %vm2609, %v2580, %v2588
      %v2620 = vsel %vm2609, %v2582, %v2590
      %v2621 = vsel %vm2609, %v2584, %v2592
      %v2622 = vsel %vm2609, %v2570, %v2578
      %v2623 = vsel %vm2609, %v2572, %v2580
      %v2624 = vsel %vm2609, %v2574, %v2582
      %v2625 = vsel %vm2609, %v2576, %v2584
      %v2626 = vsel %vm2609, %v2562, %v2570
      %v2627 = vsel %vm2609, %v2564, %v2572
      %v2628 = vsel %vm2609, %v2566, %v2574
      %v2629 = vsel %vm2609, %v2568, %v2576
      %v2630 = vsel %vm2609, %v2602, %v2562
      %v2631 = vsel %vm2609, %v2604, %v2564
      %v2632 = vsel %vm2609, %v2606, %v2566
      %v2633 = vsel %vm2609, %v2608, %v2568
      %s2634 = scalar_lea.vmem %s209, 256
      %v2635 = vld [vmem:[%s2634] sm:$0xff]
      %v2636 = vld [vmem:[%s2634 + $0x8] sm:$0xff]
      %v2637 = vld [vmem:[%s2634 + $0x10] sm:$0xff]
      %v2638 = vld [vmem:[%s2634 + $0x18] sm:$0xff]
      %v2640 = vsel %vm533, %v2635, 0
      %v2643 = vsel %vm533, %v2636, 0
      %v2646 = vsel %vm533, %v2637, 0
      %v2649 = vsel %vm533, %v2638, 0
      %2651 = vmatpush.msra.mxu0 0.0
      %2652 = vmatpush.msra.mxu0 0.0
      %2653 = vmatpush.msra.mxu0 0.0
      %2654 = vmatpush.msra.mxu0 0.0
      %2655 = vmatpush.msra.mxu0 0.0
      %2656 = vmatpush.msra.mxu0 0.0
      %2657 = vmatpush.msra.mxu0 0.0
      %2658 = vmatpush.msra.mxu0 0.0
      %2659 = vmatpush.msra.mxu0 0.0
      %2660 = vmatpush.msra.mxu0 0.0
      %2661 = vmatpush.msra.mxu0 0.0
      %2662 = vmatpush.msra.mxu0 0.0
      %2663 = vmatpush.msra.mxu0 %v2629
      %2664 = vmatpush.msra.mxu0 %v2628
      %2665 = vmatpush.msra.mxu0 %v2627
      %2666 = vmatpush.msra.mxu0 %v2626
      %2667 = vmatmul.f32.gmra.mxu0 %v2640
      %v2668 = vpop.f32.mrf.mxu0
      %v2669 = vadd.f32 0.0, %v2668
      %2670 = vmatmul.f32.gmra.mxu0 %v2643
      %v2671 = vpop.f32.mrf.mxu0
      %v2672 = vadd.f32 0.0, %v2671
      %2673 = vmatmul.f32.gmra.mxu0 %v2646
      %v2674 = vpop.f32.mrf.mxu0
      %v2675 = vadd.f32 0.0, %v2674
      %2676 = vmatmul.f32.gmra.mxu0 %v2649
      %v2677 = vpop.f32.mrf.mxu0
      %v2678 = vadd.f32 0.0, %v2677
      %2679 = vdwg.mxu0
      %2680 = vmatpush.msra.mxu0 0.0
      %2681 = vmatpush.msra.mxu0 0.0
      %2682 = vmatpush.msra.mxu0 0.0
      %2683 = vmatpush.msra.mxu0 0.0
      %2684 = vmatpush.msra.mxu0 0.0
      %2685 = vmatpush.msra.mxu0 0.0
      %2686 = vmatpush.msra.mxu0 0.0
      %2687 = vmatpush.msra.mxu0 0.0
      %2688 = vmatpush.msra.mxu0 0.0
      %2689 = vmatpush.msra.mxu0 0.0
      %2690 = vmatpush.msra.mxu0 0.0
      %2691 = vmatpush.msra.mxu0 0.0
      %2692 = vmatpush.msra.mxu0 %v2625
      %2693 = vmatpush.msra.mxu0 %v2624
      %2694 = vmatpush.msra.mxu0 %v2623
      %2695 = vmatpush.msra.mxu0 %v2622
      %2696 = vmatmul.f32.gmra.mxu0 %v2640
      %v2697 = vpop.f32.mrf.mxu0
      %v2698 = vadd.f32 0.0, %v2697
      %2699 = vmatmul.f32.gmra.mxu0 %v2643
      %v2700 = vpop.f32.mrf.mxu0
      %v2701 = vadd.f32 0.0, %v2700
      %2702 = vmatmul.f32.gmra.mxu0 %v2646
      %v2703 = vpop.f32.mrf.mxu0
      %v2704 = vadd.f32 0.0, %v2703
      %2705 = vmatmul.f32.gmra.mxu0 %v2649
      %v2706 = vpop.f32.mrf.mxu0
      %v2707 = vadd.f32 0.0, %v2706
      %2708 = vdwg.mxu0
      %2709 = vmatpush.msra.mxu0 0.0
      %2710 = vmatpush.msra.mxu0 0.0
      %2711 = vmatpush.msra.mxu0 0.0
      %2712 = vmatpush.msra.mxu0 0.0
      %2713 = vmatpush.msra.mxu0 0.0
      %2714 = vmatpush.msra.mxu0 0.0
      %2715 = vmatpush.msra.mxu0 0.0
      %2716 = vmatpush.msra.mxu0 0.0
      %2717 = vmatpush.msra.mxu0 0.0
      %2718 = vmatpush.msra.mxu0 0.0
      %2719 = vmatpush.msra.mxu0 0.0
      %2720 = vmatpush.msra.mxu0 0.0
      %2721 = vmatpush.msra.mxu0 %v2621
      %2722 = vmatpush.msra.mxu0 %v2620
      %2723 = vmatpush.msra.mxu0 %v2619
      %2724 = vmatpush.msra.mxu0 %v2618
      %2725 = vmatmul.f32.gmra.mxu0 %v2640
      %v2726 = vpop.f32.mrf.mxu0
      %v2727 = vadd.f32 0.0, %v2726
      %2728 = vmatmul.f32.gmra.mxu0 %v2643
      %v2729 = vpop.f32.mrf.mxu0
      %v2730 = vadd.f32 0.0, %v2729
      %2731 = vmatmul.f32.gmra.mxu0 %v2646
      %v2732 = vpop.f32.mrf.mxu0
      %v2733 = vadd.f32 0.0, %v2732
      %2734 = vmatmul.f32.gmra.mxu0 %v2649
      %v2735 = vpop.f32.mrf.mxu0
      %v2736 = vadd.f32 0.0, %v2735
      %2737 = vdwg.mxu0
      %2738 = vmatpush.msra.mxu0 0.0
      %2739 = vmatpush.msra.mxu0 0.0
      %2740 = vmatpush.msra.mxu0 0.0
      %2741 = vmatpush.msra.mxu0 0.0
      %2742 = vmatpush.msra.mxu0 0.0
      %2743 = vmatpush.msra.mxu0 0.0
      %2744 = vmatpush.msra.mxu0 0.0
      %2745 = vmatpush.msra.mxu0 0.0
      %2746 = vmatpush.msra.mxu0 0.0
      %2747 = vmatpush.msra.mxu0 0.0
      %2748 = vmatpush.msra.mxu0 0.0
      %2749 = vmatpush.msra.mxu0 0.0
      %2750 = vmatpush.msra.mxu0 %v2617
      %2751 = vmatpush.msra.mxu0 %v2616
      %2752 = vmatpush.msra.mxu0 %v2615
      %2753 = vmatpush.msra.mxu0 %v2614
      %2754 = vmatmul.f32.gmra.mxu0 %v2640
      %v2755 = vpop.f32.mrf.mxu0
      %v2756 = vadd.f32 0.0, %v2755
      %2757 = vmatmul.f32.gmra.mxu0 %v2643
      %v2758 = vpop.f32.mrf.mxu0
      %v2759 = vadd.f32 0.0, %v2758
      %2760 = vmatmul.f32.gmra.mxu0 %v2646
      %v2761 = vpop.f32.mrf.mxu0
      %v2762 = vadd.f32 0.0, %v2761
      %2763 = vmatmul.f32.gmra.mxu0 %v2649
      %v2764 = vpop.f32.mrf.mxu0
      %v2765 = vadd.f32 0.0, %v2764
      %2766 = vdwg.mxu0
      %2767 = vmatpush.msra.mxu0 0.0
      %2768 = vmatpush.msra.mxu0 0.0
      %2769 = vmatpush.msra.mxu0 0.0
      %2770 = vmatpush.msra.mxu0 0.0
      %2771 = vmatpush.msra.mxu0 0.0
      %2772 = vmatpush.msra.mxu0 0.0
      %2773 = vmatpush.msra.mxu0 0.0
      %2774 = vmatpush.msra.mxu0 0.0
      %2775 = vmatpush.msra.mxu0 0.0
      %2776 = vmatpush.msra.mxu0 0.0
      %2777 = vmatpush.msra.mxu0 0.0
      %2778 = vmatpush.msra.mxu0 0.0
      %2779 = vmatpush.msra.mxu0 %v2613
      %2780 = vmatpush.msra.mxu0 %v2612
      %2781 = vmatpush.msra.mxu0 %v2611
      %2782 = vmatpush.msra.mxu0 %v2610
      %2783 = vmatmul.f32.gmra.mxu0 %v2640
      %v2784 = vpop.f32.mrf.mxu0
      %v2785 = vadd.f32 0.0, %v2784
      %2786 = vmatmul.f32.gmra.mxu0 %v2643
      %v2787 = vpop.f32.mrf.mxu0
      %v2788 = vadd.f32 0.0, %v2787
      %2789 = vmatmul.f32.gmra.mxu0 %v2646
      %v2790 = vpop.f32.mrf.mxu0
      %v2791 = vadd.f32 0.0, %v2790
      %2792 = vmatmul.f32.gmra.mxu0 %v2649
      %v2793 = vpop.f32.mrf.mxu0
      %v2794 = vadd.f32 0.0, %v2793
      %2795 = vdwg.mxu0
      %2796 = vmatpush.msra.mxu0 0.0
      %2797 = vmatpush.msra.mxu0 0.0
      %2798 = vmatpush.msra.mxu0 0.0
      %2799 = vmatpush.msra.mxu0 0.0
      %2800 = vmatpush.msra.mxu0 0.0
      %2801 = vmatpush.msra.mxu0 0.0
      %2802 = vmatpush.msra.mxu0 0.0
      %2803 = vmatpush.msra.mxu0 0.0
      %2804 = vmatpush.msra.mxu0 0.0
      %2805 = vmatpush.msra.mxu0 0.0
      %2806 = vmatpush.msra.mxu0 0.0
      %2807 = vmatpush.msra.mxu0 0.0
      %2808 = vmatpush.msra.mxu0 %v2633
      %2809 = vmatpush.msra.mxu0 %v2632
      %2810 = vmatpush.msra.mxu0 %v2631
      %2811 = vmatpush.msra.mxu0 %v2630
      %2812 = vmatmul.f32.gmra.mxu0 %v2640
      %v2813 = vpop.f32.mrf.mxu0
      %v2814 = vadd.f32 0.0, %v2813
      %2815 = vmatmul.f32.gmra.mxu0 %v2643
      %v2816 = vpop.f32.mrf.mxu0
      %v2817 = vadd.f32 0.0, %v2816
      %2818 = vmatmul.f32.gmra.mxu0 %v2646
      %v2819 = vpop.f32.mrf.mxu0
      %v2820 = vadd.f32 0.0, %v2819
      %2821 = vmatmul.f32.gmra.mxu0 %v2649
      %v2822 = vpop.f32.mrf.mxu0
      %v2823 = vadd.f32 0.0, %v2822
      %2824 = vdwg.mxu0
      %v2825 = vadd.f32 %v2537, %v2669
      %v2826 = vadd.f32 %v2538, %v2698
      %v2827 = vadd.f32 %v2539, %v2727
      %v2828 = vadd.f32 %v2540, %v2756
      %v2829 = vadd.f32 %v2541, %v2785
      %v2830 = vadd.f32 %v2542, %v2814
      %v2831 = vadd.f32 %v2543, %v2672
      %v2832 = vadd.f32 %v2544, %v2701
      %v2833 = vadd.f32 %v2545, %v2730
      %v2834 = vadd.f32 %v2546, %v2759
      %v2835 = vadd.f32 %v2547, %v2788
      %v2836 = vadd.f32 %v2548, %v2817
      %v2837 = vadd.f32 %v2549, %v2675
      %v2838 = vadd.f32 %v2550, %v2704
      %v2839 = vadd.f32 %v2551, %v2733
      %v2840 = vadd.f32 %v2552, %v2762
      %v2841 = vadd.f32 %v2553, %v2791
      %v2842 = vadd.f32 %v2554, %v2820
      %v2843 = vadd.f32 %v2555, %v2678
      %v2844 = vadd.f32 %v2556, %v2707
      %v2845 = vadd.f32 %v2557, %v2736
      %v2846 = vadd.f32 %v2558, %v2765
      %v2847 = vadd.f32 %v2559, %v2794
      %v2848 = vadd.f32 %v2560, %v2823
      %p2849 = scmp.lt.s32.totalorder %s16, 7
      // Predicated region
      $region49: #{forward.1} parent=39 // pred_check
        %p2850 = pneg %p2849
      $region50: #{forward.1} parent=39 // pred_check_branch
        %2852 = sbr.rel (%p2850) target = $region52
      $region51: #{forward.1} parent=39 // pred_region
        %v2853 = vmul.f32 %v2825, %v364
        %v2854 = vmul.f32 %v2826, %v365
        %v2855 = vmul.f32 %v2827, %v366
        %v2856 = vmul.f32 %v2828, %v367
        %v2857 = vmul.f32 %v2829, %v368
        %v2858 = vmul.f32 %v2830, %v369
        %v2859 = vmul.f32 %v2831, %v364
        %v2860 = vmul.f32 %v2832, %v365
        %v2861 = vmul.f32 %v2833, %v366
        %v2862 = vmul.f32 %v2834, %v367
        %v2863 = vmul.f32 %v2835, %v368
        %v2864 = vmul.f32 %v2836, %v369
        %v2865 = vmul.f32 %v2837, %v364
        %v2866 = vmul.f32 %v2838, %v365
        %v2867 = vmul.f32 %v2839, %v366
        %v2868 = vmul.f32 %v2840, %v367
        %v2869 = vmul.f32 %v2841, %v368
        %v2870 = vmul.f32 %v2842, %v369
        %v2871 = vmul.f32 %v2843, %v364
        %v2872 = vmul.f32 %v2844, %v365
        %v2873 = vmul.f32 %v2845, %v366
        %v2874 = vmul.f32 %v2846, %v367
        %v2875 = vmul.f32 %v2847, %v368
        %v2876 = vmul.f32 %v2848, %v369
        %2877 = vst [vmem:[#allocation2] sm:$0xff] %v2853
        %2878 = vst [vmem:[#allocation2 + $0x8] sm:$0xff] %v2854
        %2879 = vst [vmem:[#allocation2 + $0x10] sm:$0xff] %v2855
        %2880 = vst [vmem:[#allocation2 + $0x18] sm:$0xff] %v2856
        %2881 = vst [vmem:[#allocation2 + $0x20] sm:$0xff] %v2857
        %2882 = vst [vmem:[#allocation2 + $0x28] sm:$0xff] %v2858
        %2883 = vst [vmem:[#allocation2 + $0x30] sm:$0xff] %v2859
        %2884 = vst [vmem:[#allocation2 + $0x38] sm:$0xff] %v2860
        %2885 = vst [vmem:[#allocation2 + $0x40] sm:$0xff] %v2861
        %2886 = vst [vmem:[#allocation2 + $0x48] sm:$0xff] %v2862
        %2887 = vst [vmem:[#allocation2 + $0x50] sm:$0xff] %v2863
        %2888 = vst [vmem:[#allocation2 + $0x58] sm:$0xff] %v2864
        %2889 = vst [vmem:[#allocation2 + $0x60] sm:$0xff] %v2865
        %2890 = vst [vmem:[#allocation2 + $0x68] sm:$0xff] %v2866
        %2891 = vst [vmem:[#allocation2 + $0x70] sm:$0xff] %v2867
        %2892 = vst [vmem:[#allocation2 + $0x78] sm:$0xff] %v2868
        %2893 = vst [vmem:[#allocation2 + $0x80] sm:$0xff] %v2869
        %2894 = vst [vmem:[#allocation2 + $0x88] sm:$0xff] %v2870
        %2895 = vst [vmem:[#allocation2 + $0x90] sm:$0xff] %v2871
        %2896 = vst [vmem:[#allocation2 + $0x98] sm:$0xff] %v2872
        %2897 = vst [vmem:[#allocation2 + $0xa0] sm:$0xff] %v2873
        %2898 = vst [vmem:[#allocation2 + $0xa8] sm:$0xff] %v2874
        %2899 = vst [vmem:[#allocation2 + $0xb0] sm:$0xff] %v2875
        %2900 = vst [vmem:[#allocation2 + $0xb8] sm:$0xff] %v2876
      $region52: #{forward.1} parent=39 // pred_fallthru
        _
      %p2901 = scmp.eq.s32.totalorder %s16, 7
      // Predicated region
      $region53: #{forward.1} parent=39 // pred_check
        %p2902 = pneg %p2901
      $region54: #{forward.1} parent=39 // pred_check_branch
        %2904 = sbr.rel (%p2902) target = $region56
      $region55: #{forward.1} parent=39 // pred_region
        %v2905 = vmul.f32 %v2825, %v364
        %v2906 = vmul.f32 %v2826, %v365
        %v2907 = vmul.f32 %v2827, %v366
        %v2908 = vmul.f32 %v2828, %v367
        %v2909 = vmul.f32 %v2829, %v368
        %v2910 = vmul.f32 %v2830, %v369
        %v2911 = vmul.f32 %v2831, %v364
        %v2912 = vmul.f32 %v2832, %v365
        %v2913 = vmul.f32 %v2833, %v366
        %v2914 = vmul.f32 %v2834, %v367
        %v2915 = vmul.f32 %v2835, %v368
        %v2916 = vmul.f32 %v2836, %v369
        %v2917 = vmul.f32 %v2837, %v364
        %v2918 = vmul.f32 %v2838, %v365
        %v2919 = vmul.f32 %v2839, %v366
        %v2920 = vmul.f32 %v2840, %v367
        %v2921 = vmul.f32 %v2841, %v368
        %v2922 = vmul.f32 %v2842, %v369
        %v2923 = vmul.f32 %v2843, %v364
        %v2924 = vmul.f32 %v2844, %v365
        %v2925 = vmul.f32 %v2845, %v366
        %v2926 = vmul.f32 %v2846, %v367
        %v2927 = vmul.f32 %v2847, %v368
        %v2928 = vmul.f32 %v2848, %v369
        %v2929 = vadd.f32 %v2905, %v2906
        %v2930 = vadd.f32 %v2929, %v2907
        %v2931 = vadd.f32 %v2930, %v2908
        %v2932 = vadd.f32 %v2931, %v2909
        %v2933 = vadd.f32 %v2932, %v2910
        %2934 = vadd.xlane.f32.xlu0 %v2933
        %v2935 = vpop.xlane.xlu0 %2934
        %v2936 = vadd.f32 %v2911, %v2912
        %v2937 = vadd.f32 %v2936, %v2913
        %v2938 = vadd.f32 %v2937, %v2914
        %v2939 = vadd.f32 %v2938, %v2915
        %v2940 = vadd.f32 %v2939, %v2916
        %2941 = vadd.xlane.f32.xlu0 %v2940
        %v2942 = vpop.xlane.xlu0 %2941
        %v2943 = vadd.f32 %v2917, %v2918
        %v2944 = vadd.f32 %v2943, %v2919
        %v2945 = vadd.f32 %v2944, %v2920
        %v2946 = vadd.f32 %v2945, %v2921
        %v2947 = vadd.f32 %v2946, %v2922
        %2948 = vadd.xlane.f32.xlu0 %v2947
        %v2949 = vpop.xlane.xlu0 %2948
        %v2950 = vadd.f32 %v2923, %v2924
        %v2951 = vadd.f32 %v2950, %v2925
        %v2952 = vadd.f32 %v2951, %v2926
        %v2953 = vadd.f32 %v2952, %v2927
        %v2954 = vadd.f32 %v2953, %v2928
        %2955 = vadd.xlane.f32.xlu0 %v2954
        %v2956 = vpop.xlane.xlu0 %2955
        %v2957 = vmul.f32 %v2935, 0.001953125
        %v2958 = vmul.f32 %v2942, 0.001953125
        %v2959 = vmul.f32 %v2949, 0.001953125
        %v2960 = vmul.f32 %v2956, 0.001953125
        %v2961 = vsub.f32 %v2825, %v2957
        %v2962 = vsub.f32 %v2826, %v2957
        %v2963 = vsub.f32 %v2827, %v2957
        %v2964 = vsub.f32 %v2828, %v2957
        %v2965 = vsub.f32 %v2829, %v2957
        %v2966 = vsub.f32 %v2830, %v2957
        %v2967 = vsub.f32 %v2831, %v2958
        %v2968 = vsub.f32 %v2832, %v2958
        %v2969 = vsub.f32 %v2833, %v2958
        %v2970 = vsub.f32 %v2834, %v2958
        %v2971 = vsub.f32 %v2835, %v2958
        %v2972 = vsub.f32 %v2836, %v2958
        %v2973 = vsub.f32 %v2837, %v2959
        %v2974 = vsub.f32 %v2838, %v2959
        %v2975 = vsub.f32 %v2839, %v2959
        %v2976 = vsub.f32 %v2840, %v2959
        %v2977 = vsub.f32 %v2841, %v2959
        %v2978 = vsub.f32 %v2842, %v2959
        %v2979 = vsub.f32 %v2843, %v2960
        %v2980 = vsub.f32 %v2844, %v2960
        %v2981 = vsub.f32 %v2845, %v2960
        %v2982 = vsub.f32 %v2846, %v2960
        %v2983 = vsub.f32 %v2847, %v2960
        %v2984 = vsub.f32 %v2848, %v2960
        %v2985 = vmul.f32 %v2961, %v364
        %v2986 = vmul.f32 %v2962, %v365
        %v2987 = vmul.f32 %v2963, %v366
        %v2988 = vmul.f32 %v2964, %v367
        %v2989 = vmul.f32 %v2965, %v368
        %v2990 = vmul.f32 %v2966, %v369
        %v2991 = vmul.f32 %v2967, %v364
        %v2992 = vmul.f32 %v2968, %v365
        %v2993 = vmul.f32 %v2969, %v366
        %v2994 = vmul.f32 %v2970, %v367
        %v2995 = vmul.f32 %v2971, %v368
        %v2996 = vmul.f32 %v2972, %v369
        %v2997 = vmul.f32 %v2973, %v364
        %v2998 = vmul.f32 %v2974, %v365
        %v2999 = vmul.f32 %v2975, %v366
        %v3000 = vmul.f32 %v2976, %v367
        %v3001 = vmul.f32 %v2977, %v368
        %v3002 = vmul.f32 %v2978, %v369
        %v3003 = vmul.f32 %v2979, %v364
        %v3004 = vmul.f32 %v2980, %v365
        %v3005 = vmul.f32 %v2981, %v366
        %v3006 = vmul.f32 %v2982, %v367
        %v3007 = vmul.f32 %v2983, %v368
        %v3008 = vmul.f32 %v2984, %v369
        %v3009 = vmul.f32 %v2985, %v2985
        %v3010 = vmul.f32 %v2986, %v2986
        %v3011 = vmul.f32 %v2987, %v2987
        %v3012 = vmul.f32 %v2988, %v2988
        %v3013 = vmul.f32 %v2989, %v2989
        %v3014 = vmul.f32 %v2990, %v2990
        %v3015 = vmul.f32 %v2991, %v2991
        %v3016 = vmul.f32 %v2992, %v2992
        %v3017 = vmul.f32 %v2993, %v2993
        %v3018 = vmul.f32 %v2994, %v2994
        %v3019 = vmul.f32 %v2995, %v2995
        %v3020 = vmul.f32 %v2996, %v2996
        %v3021 = vmul.f32 %v2997, %v2997
        %v3022 = vmul.f32 %v2998, %v2998
        %v3023 = vmul.f32 %v2999, %v2999
        %v3024 = vmul.f32 %v3000, %v3000
        %v3025 = vmul.f32 %v3001, %v3001
        %v3026 = vmul.f32 %v3002, %v3002
        %v3027 = vmul.f32 %v3003, %v3003
        %v3028 = vmul.f32 %v3004, %v3004
        %v3029 = vmul.f32 %v3005, %v3005
        %v3030 = vmul.f32 %v3006, %v3006
        %v3031 = vmul.f32 %v3007, %v3007
        %v3032 = vmul.f32 %v3008, %v3008
        %v3033 = vadd.f32 %v3009, %v3010
        %v3034 = vadd.f32 %v3033, %v3011
        %v3035 = vadd.f32 %v3034, %v3012
        %v3036 = vadd.f32 %v3035, %v3013
        %v3037 = vadd.f32 %v3036, %v3014
        %3038 = vadd.xlane.f32.xlu0 %v3037
        %v3039 = vpop.xlane.xlu0 %3038
        %v3040 = vadd.f32 %v3015, %v3016
        %v3041 = vadd.f32 %v3040, %v3017
        %v3042 = vadd.f32 %v3041, %v3018
        %v3043 = vadd.f32 %v3042, %v3019
        %v3044 = vadd.f32 %v3043, %v3020
        %3045 = vadd.xlane.f32.xlu0 %v3044
        %v3046 = vpop.xlane.xlu0 %3045
        %v3047 = vadd.f32 %v3021, %v3022
        %v3048 = vadd.f32 %v3047, %v3023
        %v3049 = vadd.f32 %v3048, %v3024
        %v3050 = vadd.f32 %v3049, %v3025
        %v3051 = vadd.f32 %v3050, %v3026
        %3052 = vadd.xlane.f32.xlu0 %v3051
        %v3053 = vpop.xlane.xlu0 %3052
        %v3054 = vadd.f32 %v3027, %v3028
        %v3055 = vadd.f32 %v3054, %v3029
        %v3056 = vadd.f32 %v3055, %v3030
        %v3057 = vadd.f32 %v3056, %v3031
        %v3058 = vadd.f32 %v3057, %v3032
        %3059 = vadd.xlane.f32.xlu0 %v3058
        %v3060 = vpop.xlane.xlu0 %3059
        %v3061 = vmul.f32 %v3039, 0.001953125
        %v3062 = vmul.f32 %v3046, 0.001953125
        %v3063 = vmul.f32 %v3053, 0.001953125
        %v3064 = vmul.f32 %v3060, 0.001953125
        %v3065 = vadd.f32 %v3061, 1e-05
        %v3066 = vadd.f32 %v3062, 1e-05
        %v3067 = vadd.f32 %v3063, 1e-05
        %v3068 = vadd.f32 %v3064, 1e-05
        %v3069 = vrsqrt.pop %v3065
        %v3070 = vmul.f32 %v3069, %v3065
        %v3071 = vmul.f32 %v3070, %v3069
        %v3072 = vmul.f32 0.5, %v3071
        %v3073 = vsub.f32 1.5, %v3072
        %v3074 = vmul.f32 %v3069, %v3073
        %vm3075 = vweird.f32 %v3065
        %vm3076 = vweird.f32 %v3069
        %vm3077 = vmor %vm3075, %vm3076
        %v3078 = vsel %vm3077, %v3069, %v3074
        %v3079 = vrsqrt.pop %v3066
        %v3080 = vmul.f32 %v3079, %v3066
        %v3081 = vmul.f32 %v3080, %v3079
        %v3082 = vmul.f32 0.5, %v3081
        %v3083 = vsub.f32 1.5, %v3082
        %v3084 = vmul.f32 %v3079, %v3083
        %vm3085 = vweird.f32 %v3066
        %vm3086 = vweird.f32 %v3079
        %vm3087 = vmor %vm3085, %vm3086
        %v3088 = vsel %vm3087, %v3079, %v3084
        %v3089 = vrsqrt.pop %v3067
        %v3090 = vmul.f32 %v3089, %v3067
        %v3091 = vmul.f32 %v3090, %v3089
        %v3092 = vmul.f32 0.5, %v3091
        %v3093 = vsub.f32 1.5, %v3092
        %v3094 = vmul.f32 %v3089, %v3093
        %vm3095 = vweird.f32 %v3067
        %vm3096 = vweird.f32 %v3089
        %vm3097 = vmor %vm3095, %vm3096
        %v3098 = vsel %vm3097, %v3089, %v3094
        %v3099 = vrsqrt.pop %v3068
        %v3100 = vmul.f32 %v3099, %v3068
        %v3101 = vmul.f32 %v3100, %v3099
        %v3102 = vmul.f32 0.5, %v3101
        %v3103 = vsub.f32 1.5, %v3102
        %v3104 = vmul.f32 %v3099, %v3103
        %vm3105 = vweird.f32 %v3068
        %vm3106 = vweird.f32 %v3099
        %vm3107 = vmor %vm3105, %vm3106
        %v3108 = vsel %vm3107, %v3099, %v3104
        %v3109 = vmul.f32 %v2985, %v3078
        %v3110 = vmul.f32 %v2986, %v3078
        %v3111 = vmul.f32 %v2987, %v3078
        %v3112 = vmul.f32 %v2988, %v3078
        %v3113 = vmul.f32 %v2989, %v3078
        %v3114 = vmul.f32 %v2990, %v3078
        %v3115 = vmul.f32 %v2991, %v3088
        %v3116 = vmul.f32 %v2992, %v3088
        %v3117 = vmul.f32 %v2993, %v3088
        %v3118 = vmul.f32 %v2994, %v3088
        %v3119 = vmul.f32 %v2995, %v3088
        %v3120 = vmul.f32 %v2996, %v3088
        %v3121 = vmul.f32 %v2997, %v3098
        %v3122 = vmul.f32 %v2998, %v3098
        %v3123 = vmul.f32 %v2999, %v3098
        %v3124 = vmul.f32 %v3000, %v3098
        %v3125 = vmul.f32 %v3001, %v3098
        %v3126 = vmul.f32 %v3002, %v3098
        %v3127 = vmul.f32 %v3003, %v3108
        %v3128 = vmul.f32 %v3004, %v3108
        %v3129 = vmul.f32 %v3005, %v3108
        %v3130 = vmul.f32 %v3006, %v3108
        %v3131 = vmul.f32 %v3007, %v3108
        %v3132 = vmul.f32 %v3008, %v3108
        %v3133 = vld [vmem:[%s2] sm:$0xff]
        %v3134 = vld [vmem:[%s2 + $0x8] sm:$0xff]
        %v3135 = vld [vmem:[%s2 + $0x10] sm:$0xff]
        %v3136 = vld [vmem:[%s2 + $0x18] sm:$0xff]
        %3138 = vset.pattern.permute.xlu0 0
        %3139 = vperm.xlu0 %3138, %v3133
        %v3140 = vpop.permute.xlu0 %3139
        %3143 = vset.pattern.permute.xlu0 0
        %3144 = vperm.xlu0 %3143, %v3134
        %v3145 = vpop.permute.xlu0 %3144
        %3148 = vset.pattern.permute.xlu0 0
        %3149 = vperm.xlu0 %3148, %v3135
        %v3150 = vpop.permute.xlu0 %3149
        %3153 = vset.pattern.permute.xlu0 0
        %3154 = vperm.xlu0 %3153, %v3136
        %v3155 = vpop.permute.xlu0 %3154
        %v3157 = vmul.f32 %v3109, %v3140
        %v3158 = vmul.f32 %v3110, %v3140
        %v3159 = vmul.f32 %v3111, %v3140
        %v3160 = vmul.f32 %v3112, %v3140
        %v3161 = vmul.f32 %v3113, %v3140
        %v3162 = vmul.f32 %v3114, %v3140
        %v3163 = vmul.f32 %v3115, %v3145
        %v3164 = vmul.f32 %v3116, %v3145
        %v3165 = vmul.f32 %v3117, %v3145
        %v3166 = vmul.f32 %v3118, %v3145
        %v3167 = vmul.f32 %v3119, %v3145
        %v3168 = vmul.f32 %v3120, %v3145
        %v3169 = vmul.f32 %v3121, %v3150
        %v3170 = vmul.f32 %v3122, %v3150
        %v3171 = vmul.f32 %v3123, %v3150
        %v3172 = vmul.f32 %v3124, %v3150
        %v3173 = vmul.f32 %v3125, %v3150
        %v3174 = vmul.f32 %v3126, %v3150
        %v3175 = vmul.f32 %v3127, %v3155
        %v3176 = vmul.f32 %v3128, %v3155
        %v3177 = vmul.f32 %v3129, %v3155
        %v3178 = vmul.f32 %v3130, %v3155
        %v3179 = vmul.f32 %v3131, %v3155
        %v3180 = vmul.f32 %v3132, %v3155
        %v3181 = vld [vmem:[%s3] sm:$0xff]
        %v3182 = vld [vmem:[%s3 + $0x8] sm:$0xff]
        %v3183 = vld [vmem:[%s3 + $0x10] sm:$0xff]
        %v3184 = vld [vmem:[%s3 + $0x18] sm:$0xff]
        %3186 = vset.pattern.permute.xlu0 0
        %3187 = vperm.xlu0 %3186, %v3181
        %v3188 = vpop.permute.xlu0 %3187
        %3191 = vset.pattern.permute.xlu0 0
        %3192 = vperm.xlu0 %3191, %v3182
        %v3193 = vpop.permute.xlu0 %3192
        %3196 = vset.pattern.permute.xlu0 0
        %3197 = vperm.xlu0 %3196, %v3183
        %v3198 = vpop.permute.xlu0 %3197
        %3201 = vset.pattern.permute.xlu0 0
        %3202 = vperm.xlu0 %3201, %v3184
        %v3203 = vpop.permute.xlu0 %3202
        %v3205 = vadd.f32 %v3157, %v3188
        %v3206 = vadd.f32 %v3158, %v3188
        %v3207 = vadd.f32 %v3159, %v3188
        %v3208 = vadd.f32 %v3160, %v3188
        %v3209 = vadd.f32 %v3161, %v3188
        %v3210 = vadd.f32 %v3162, %v3188
        %v3211 = vadd.f32 %v3163, %v3193
        %v3212 = vadd.f32 %v3164, %v3193
        %v3213 = vadd.f32 %v3165, %v3193
        %v3214 = vadd.f32 %v3166, %v3193
        %v3215 = vadd.f32 %v3167, %v3193
        %v3216 = vadd.f32 %v3168, %v3193
        %v3217 = vadd.f32 %v3169, %v3198
        %v3218 = vadd.f32 %v3170, %v3198
        %v3219 = vadd.f32 %v3171, %v3198
        %v3220 = vadd.f32 %v3172, %v3198
        %v3221 = vadd.f32 %v3173, %v3198
        %v3222 = vadd.f32 %v3174, %v3198
        %v3223 = vadd.f32 %v3175, %v3203
        %v3224 = vadd.f32 %v3176, %v3203
        %v3225 = vadd.f32 %v3177, %v3203
        %v3226 = vadd.f32 %v3178, %v3203
        %v3227 = vadd.f32 %v3179, %v3203
        %v3228 = vadd.f32 %v3180, %v3203
        %v3229 = vmul.f32 %v3205, %v364
        %v3230 = vmul.f32 %v3206, %v365
        %v3231 = vmul.f32 %v3207, %v366
        %v3232 = vmul.f32 %v3208, %v367
        %v3233 = vmul.f32 %v3209, %v368
        %v3234 = vmul.f32 %v3210, %v369
        %v3235 = vmul.f32 %v3211, %v364
        %v3236 = vmul.f32 %v3212, %v365
        %v3237 = vmul.f32 %v3213, %v366
        %v3238 = vmul.f32 %v3214, %v367
        %v3239 = vmul.f32 %v3215, %v368
        %v3240 = vmul.f32 %v3216, %v369
        %v3241 = vmul.f32 %v3217, %v364
        %v3242 = vmul.f32 %v3218, %v365
        %v3243 = vmul.f32 %v3219, %v366
        %v3244 = vmul.f32 %v3220, %v367
        %v3245 = vmul.f32 %v3221, %v368
        %v3246 = vmul.f32 %v3222, %v369
        %v3247 = vmul.f32 %v3223, %v364
        %v3248 = vmul.f32 %v3224, %v365
        %v3249 = vmul.f32 %v3225, %v366
        %v3250 = vmul.f32 %v3226, %v367
        %v3251 = vmul.f32 %v3227, %v368
        %v3252 = vmul.f32 %v3228, %v369
        %3253 = vst [vmem:[#allocation2] sm:$0xff] %v3229
        %3254 = vst [vmem:[#allocation2 + $0x8] sm:$0xff] %v3230
        %3255 = vst [vmem:[#allocation2 + $0x10] sm:$0xff] %v3231
        %3256 = vst [vmem:[#allocation2 + $0x18] sm:$0xff] %v3232
        %3257 = vst [vmem:[#allocation2 + $0x20] sm:$0xff] %v3233
        %3258 = vst [vmem:[#allocation2 + $0x28] sm:$0xff] %v3234
        %3259 = vst [vmem:[#allocation2 + $0x30] sm:$0xff] %v3235
        %3260 = vst [vmem:[#allocation2 + $0x38] sm:$0xff] %v3236
        %3261 = vst [vmem:[#allocation2 + $0x40] sm:$0xff] %v3237
        %3262 = vst [vmem:[#allocation2 + $0x48] sm:$0xff] %v3238
        %3263 = vst [vmem:[#allocation2 + $0x50] sm:$0xff] %v3239
        %3264 = vst [vmem:[#allocation2 + $0x58] sm:$0xff] %v3240
        %3265 = vst [vmem:[#allocation2 + $0x60] sm:$0xff] %v3241
        %3266 = vst [vmem:[#allocation2 + $0x68] sm:$0xff] %v3242
        %3267 = vst [vmem:[#allocation2 + $0x70] sm:$0xff] %v3243
        %3268 = vst [vmem:[#allocation2 + $0x78] sm:$0xff] %v3244
        %3269 = vst [vmem:[#allocation2 + $0x80] sm:$0xff] %v3245
        %3270 = vst [vmem:[#allocation2 + $0x88] sm:$0xff] %v3246
        %3271 = vst [vmem:[#allocation2 + $0x90] sm:$0xff] %v3247
        %3272 = vst [vmem:[#allocation2 + $0x98] sm:$0xff] %v3248
        %3273 = vst [vmem:[#allocation2 + $0xa0] sm:$0xff] %v3249
        %3274 = vst [vmem:[#allocation2 + $0xa8] sm:$0xff] %v3250
        %3275 = vst [vmem:[#allocation2 + $0xb0] sm:$0xff] %v3251
        %3276 = vst [vmem:[#allocation2 + $0xb8] sm:$0xff] %v3252
      $region56: #{forward.1} parent=39 // pred_fallthru
        _
      %p3277 = scmp.eq.s32.totalorder %s16, 8
      // Predicated region
      $region57: #{forward.1} parent=39 // pred_check
        %p3278 = pneg %p3277
      $region58: #{forward.1} parent=39 // pred_check_branch
        %3280 = sbr.rel (%p3278) target = $region60
      $region59: #{forward.1} parent=39 // pred_region
        %v3281 = vmul.f32 %v2825, %v364
        %v3282 = vmul.f32 %v2826, %v365
        %v3283 = vmul.f32 %v2827, %v366
        %v3284 = vmul.f32 %v2828, %v367
        %v3285 = vmul.f32 %v2829, %v368
        %v3286 = vmul.f32 %v2830, %v369
        %v3287 = vmul.f32 %v2831, %v364
        %v3288 = vmul.f32 %v2832, %v365
        %v3289 = vmul.f32 %v2833, %v366
        %v3290 = vmul.f32 %v2834, %v367
        %v3291 = vmul.f32 %v2835, %v368
        %v3292 = vmul.f32 %v2836, %v369
        %v3293 = vmul.f32 %v2837, %v364
        %v3294 = vmul.f32 %v2838, %v365
        %v3295 = vmul.f32 %v2839, %v366
        %v3296 = vmul.f32 %v2840, %v367
        %v3297 = vmul.f32 %v2841, %v368
        %v3298 = vmul.f32 %v2842, %v369
        %v3299 = vmul.f32 %v2843, %v364
        %v3300 = vmul.f32 %v2844, %v365
        %v3301 = vmul.f32 %v2845, %v366
        %v3302 = vmul.f32 %v2846, %v367
        %v3303 = vmul.f32 %v2847, %v368
        %v3304 = vmul.f32 %v2848, %v369
        %v3305 = vadd.f32 %v3281, %v3282
        %v3306 = vadd.f32 %v3305, %v3283
        %v3307 = vadd.f32 %v3306, %v3284
        %v3308 = vadd.f32 %v3307, %v3285
        %v3309 = vadd.f32 %v3308, %v3286
        %3310 = vadd.xlane.f32.xlu0 %v3309
        %v3311 = vpop.xlane.xlu0 %3310
        %v3312 = vadd.f32 %v3287, %v3288
        %v3313 = vadd.f32 %v3312, %v3289
        %v3314 = vadd.f32 %v3313, %v3290
        %v3315 = vadd.f32 %v3314, %v3291
        %v3316 = vadd.f32 %v3315, %v3292
        %3317 = vadd.xlane.f32.xlu0 %v3316
        %v3318 = vpop.xlane.xlu0 %3317
        %v3319 = vadd.f32 %v3293, %v3294
        %v3320 = vadd.f32 %v3319, %v3295
        %v3321 = vadd.f32 %v3320, %v3296
        %v3322 = vadd.f32 %v3321, %v3297
        %v3323 = vadd.f32 %v3322, %v3298
        %3324 = vadd.xlane.f32.xlu0 %v3323
        %v3325 = vpop.xlane.xlu0 %3324
        %v3326 = vadd.f32 %v3299, %v3300
        %v3327 = vadd.f32 %v3326, %v3301
        %v3328 = vadd.f32 %v3327, %v3302
        %v3329 = vadd.f32 %v3328, %v3303
        %v3330 = vadd.f32 %v3329, %v3304
        %3331 = vadd.xlane.f32.xlu0 %v3330
        %v3332 = vpop.xlane.xlu0 %3331
        %v3333 = vmul.f32 %v3311, 0.001953125
        %v3334 = vmul.f32 %v3318, 0.001953125
        %v3335 = vmul.f32 %v3325, 0.001953125
        %v3336 = vmul.f32 %v3332, 0.001953125
        %v3337 = vsub.f32 %v2825, %v3333
        %v3338 = vsub.f32 %v2826, %v3333
        %v3339 = vsub.f32 %v2827, %v3333
        %v3340 = vsub.f32 %v2828, %v3333
        %v3341 = vsub.f32 %v2829, %v3333
        %v3342 = vsub.f32 %v2830, %v3333
        %v3343 = vsub.f32 %v2831, %v3334
        %v3344 = vsub.f32 %v2832, %v3334
        %v3345 = vsub.f32 %v2833, %v3334
        %v3346 = vsub.f32 %v2834, %v3334
        %v3347 = vsub.f32 %v2835, %v3334
        %v3348 = vsub.f32 %v2836, %v3334
        %v3349 = vsub.f32 %v2837, %v3335
        %v3350 = vsub.f32 %v2838, %v3335
        %v3351 = vsub.f32 %v2839, %v3335
        %v3352 = vsub.f32 %v2840, %v3335
        %v3353 = vsub.f32 %v2841, %v3335
        %v3354 = vsub.f32 %v2842, %v3335
        %v3355 = vsub.f32 %v2843, %v3336
        %v3356 = vsub.f32 %v2844, %v3336
        %v3357 = vsub.f32 %v2845, %v3336
        %v3358 = vsub.f32 %v2846, %v3336
        %v3359 = vsub.f32 %v2847, %v3336
        %v3360 = vsub.f32 %v2848, %v3336
        %v3361 = vmul.f32 %v3337, %v364
        %v3362 = vmul.f32 %v3338, %v365
        %v3363 = vmul.f32 %v3339, %v366
        %v3364 = vmul.f32 %v3340, %v367
        %v3365 = vmul.f32 %v3341, %v368
        %v3366 = vmul.f32 %v3342, %v369
        %v3367 = vmul.f32 %v3343, %v364
        %v3368 = vmul.f32 %v3344, %v365
        %v3369 = vmul.f32 %v3345, %v366
        %v3370 = vmul.f32 %v3346, %v367
        %v3371 = vmul.f32 %v3347, %v368
        %v3372 = vmul.f32 %v3348, %v369
        %v3373 = vmul.f32 %v3349, %v364
        %v3374 = vmul.f32 %v3350, %v365
        %v3375 = vmul.f32 %v3351, %v366
        %v3376 = vmul.f32 %v3352, %v367
        %v3377 = vmul.f32 %v3353, %v368
        %v3378 = vmul.f32 %v3354, %v369
        %v3379 = vmul.f32 %v3355, %v364
        %v3380 = vmul.f32 %v3356, %v365
        %v3381 = vmul.f32 %v3357, %v366
        %v3382 = vmul.f32 %v3358, %v367
        %v3383 = vmul.f32 %v3359, %v368
        %v3384 = vmul.f32 %v3360, %v369
        %v3385 = vmul.f32 %v3361, %v3361
        %v3386 = vmul.f32 %v3362, %v3362
        %v3387 = vmul.f32 %v3363, %v3363
        %v3388 = vmul.f32 %v3364, %v3364
        %v3389 = vmul.f32 %v3365, %v3365
        %v3390 = vmul.f32 %v3366, %v3366
        %v3391 = vmul.f32 %v3367, %v3367
        %v3392 = vmul.f32 %v3368, %v3368
        %v3393 = vmul.f32 %v3369, %v3369
        %v3394 = vmul.f32 %v3370, %v3370
        %v3395 = vmul.f32 %v3371, %v3371
        %v3396 = vmul.f32 %v3372, %v3372
        %v3397 = vmul.f32 %v3373, %v3373
        %v3398 = vmul.f32 %v3374, %v3374
        %v3399 = vmul.f32 %v3375, %v3375
        %v3400 = vmul.f32 %v3376, %v3376
        %v3401 = vmul.f32 %v3377, %v3377
        %v3402 = vmul.f32 %v3378, %v3378
        %v3403 = vmul.f32 %v3379, %v3379
        %v3404 = vmul.f32 %v3380, %v3380
        %v3405 = vmul.f32 %v3381, %v3381
        %v3406 = vmul.f32 %v3382, %v3382
        %v3407 = vmul.f32 %v3383, %v3383
        %v3408 = vmul.f32 %v3384, %v3384
        %v3409 = vadd.f32 %v3385, %v3386
        %v3410 = vadd.f32 %v3409, %v3387
        %v3411 = vadd.f32 %v3410, %v3388
        %v3412 = vadd.f32 %v3411, %v3389
        %v3413 = vadd.f32 %v3412, %v3390
        %3414 = vadd.xlane.f32.xlu0 %v3413
        %v3415 = vpop.xlane.xlu0 %3414
        %v3416 = vadd.f32 %v3391, %v3392
        %v3417 = vadd.f32 %v3416, %v3393
        %v3418 = vadd.f32 %v3417, %v3394
        %v3419 = vadd.f32 %v3418, %v3395
        %v3420 = vadd.f32 %v3419, %v3396
        %3421 = vadd.xlane.f32.xlu0 %v3420
        %v3422 = vpop.xlane.xlu0 %3421
        %v3423 = vadd.f32 %v3397, %v3398
        %v3424 = vadd.f32 %v3423, %v3399
        %v3425 = vadd.f32 %v3424, %v3400
        %v3426 = vadd.f32 %v3425, %v3401
        %v3427 = vadd.f32 %v3426, %v3402
        %3428 = vadd.xlane.f32.xlu0 %v3427
        %v3429 = vpop.xlane.xlu0 %3428
        %v3430 = vadd.f32 %v3403, %v3404
        %v3431 = vadd.f32 %v3430, %v3405
        %v3432 = vadd.f32 %v3431, %v3406
        %v3433 = vadd.f32 %v3432, %v3407
        %v3434 = vadd.f32 %v3433, %v3408
        %3435 = vadd.xlane.f32.xlu0 %v3434
        %v3436 = vpop.xlane.xlu0 %3435
        %v3437 = vmul.f32 %v3415, 0.001953125
        %v3438 = vmul.f32 %v3422, 0.001953125
        %v3439 = vmul.f32 %v3429, 0.001953125
        %v3440 = vmul.f32 %v3436, 0.001953125
        %v3441 = vadd.f32 %v3437, 1e-05
        %v3442 = vadd.f32 %v3438, 1e-05
        %v3443 = vadd.f32 %v3439, 1e-05
        %v3444 = vadd.f32 %v3440, 1e-05
        %v3445 = vrsqrt.pop %v3441
        %v3446 = vmul.f32 %v3445, %v3441
        %v3447 = vmul.f32 %v3446, %v3445
        %v3448 = vmul.f32 0.5, %v3447
        %v3449 = vsub.f32 1.5, %v3448
        %v3450 = vmul.f32 %v3445, %v3449
        %vm3451 = vweird.f32 %v3441
        %vm3452 = vweird.f32 %v3445
        %vm3453 = vmor %vm3451, %vm3452
        %v3454 = vsel %vm3453, %v3445, %v3450
        %v3455 = vrsqrt.pop %v3442
        %v3456 = vmul.f32 %v3455, %v3442
        %v3457 = vmul.f32 %v3456, %v3455
        %v3458 = vmul.f32 0.5, %v3457
        %v3459 = vsub.f32 1.5, %v3458
        %v3460 = vmul.f32 %v3455, %v3459
        %vm3461 = vweird.f32 %v3442
        %vm3462 = vweird.f32 %v3455
        %vm3463 = vmor %vm3461, %vm3462
        %v3464 = vsel %vm3463, %v3455, %v3460
        %v3465 = vrsqrt.pop %v3443
        %v3466 = vmul.f32 %v3465, %v3443
        %v3467 = vmul.f32 %v3466, %v3465
        %v3468 = vmul.f32 0.5, %v3467
        %v3469 = vsub.f32 1.5, %v3468
        %v3470 = vmul.f32 %v3465, %v3469
        %vm3471 = vweird.f32 %v3443
        %vm3472 = vweird.f32 %v3465
        %vm3473 = vmor %vm3471, %vm3472
        %v3474 = vsel %vm3473, %v3465, %v3470
        %v3475 = vrsqrt.pop %v3444
        %v3476 = vmul.f32 %v3475, %v3444
        %v3477 = vmul.f32 %v3476, %v3475
        %v3478 = vmul.f32 0.5, %v3477
        %v3479 = vsub.f32 1.5, %v3478
        %v3480 = vmul.f32 %v3475, %v3479
        %vm3481 = vweird.f32 %v3444
        %vm3482 = vweird.f32 %v3475
        %vm3483 = vmor %vm3481, %vm3482
        %v3484 = vsel %vm3483, %v3475, %v3480
        %v3485 = vmul.f32 %v3361, %v3454
        %v3486 = vmul.f32 %v3362, %v3454
        %v3487 = vmul.f32 %v3363, %v3454
        %v3488 = vmul.f32 %v3364, %v3454
        %v3489 = vmul.f32 %v3365, %v3454
        %v3490 = vmul.f32 %v3366, %v3454
        %v3491 = vmul.f32 %v3367, %v3464
        %v3492 = vmul.f32 %v3368, %v3464
        %v3493 = vmul.f32 %v3369, %v3464
        %v3494 = vmul.f32 %v3370, %v3464
        %v3495 = vmul.f32 %v3371, %v3464
        %v3496 = vmul.f32 %v3372, %v3464
        %v3497 = vmul.f32 %v3373, %v3474
        %v3498 = vmul.f32 %v3374, %v3474
        %v3499 = vmul.f32 %v3375, %v3474
        %v3500 = vmul.f32 %v3376, %v3474
        %v3501 = vmul.f32 %v3377, %v3474
        %v3502 = vmul.f32 %v3378, %v3474
        %v3503 = vmul.f32 %v3379, %v3484
        %v3504 = vmul.f32 %v3380, %v3484
        %v3505 = vmul.f32 %v3381, %v3484
        %v3506 = vmul.f32 %v3382, %v3484
        %v3507 = vmul.f32 %v3383, %v3484
        %v3508 = vmul.f32 %v3384, %v3484
        %s3509 = scalar_lea.vmem %s2, 32
        %v3510 = vld [vmem:[%s3509] sm:$0xff]
        %v3511 = vld [vmem:[%s3509 + $0x8] sm:$0xff]
        %v3512 = vld [vmem:[%s3509 + $0x10] sm:$0xff]
        %v3513 = vld [vmem:[%s3509 + $0x18] sm:$0xff]
        %3515 = vset.pattern.permute.xlu0 0
        %3516 = vperm.xlu0 %3515, %v3510
        %v3517 = vpop.permute.xlu0 %3516
        %3520 = vset.pattern.permute.xlu0 0
        %3521 = vperm.xlu0 %3520, %v3511
        %v3522 = vpop.permute.xlu0 %3521
        %3525 = vset.pattern.permute.xlu0 0
        %3526 = vperm.xlu0 %3525, %v3512
        %v3527 = vpop.permute.xlu0 %3526
        %3530 = vset.pattern.permute.xlu0 0
        %3531 = vperm.xlu0 %3530, %v3513
        %v3532 = vpop.permute.xlu0 %3531
        %v3534 = vmul.f32 %v3485, %v3517
        %v3535 = vmul.f32 %v3486, %v3517
        %v3536 = vmul.f32 %v3487, %v3517
        %v3537 = vmul.f32 %v3488, %v3517
        %v3538 = vmul.f32 %v3489, %v3517
        %v3539 = vmul.f32 %v3490, %v3517
        %v3540 = vmul.f32 %v3491, %v3522
        %v3541 = vmul.f32 %v3492, %v3522
        %v3542 = vmul.f32 %v3493, %v3522
        %v3543 = vmul.f32 %v3494, %v3522
        %v3544 = vmul.f32 %v3495, %v3522
        %v3545 = vmul.f32 %v3496, %v3522
        %v3546 = vmul.f32 %v3497, %v3527
        %v3547 = vmul.f32 %v3498, %v3527
        %v3548 = vmul.f32 %v3499, %v3527
        %v3549 = vmul.f32 %v3500, %v3527
        %v3550 = vmul.f32 %v3501, %v3527
        %v3551 = vmul.f32 %v3502, %v3527
        %v3552 = vmul.f32 %v3503, %v3532
        %v3553 = vmul.f32 %v3504, %v3532
        %v3554 = vmul.f32 %v3505, %v3532
        %v3555 = vmul.f32 %v3506, %v3532
        %v3556 = vmul.f32 %v3507, %v3532
        %v3557 = vmul.f32 %v3508, %v3532
        %s3558 = scalar_lea.vmem %s3, 32
        %v3559 = vld [vmem:[%s3558] sm:$0xff]
        %v3560 = vld [vmem:[%s3558 + $0x8] sm:$0xff]
        %v3561 = vld [vmem:[%s3558 + $0x10] sm:$0xff]
        %v3562 = vld [vmem:[%s3558 + $0x18] sm:$0xff]
        %3564 = vset.pattern.permute.xlu0 0
        %3565 = vperm.xlu0 %3564, %v3559
        %v3566 = vpop.permute.xlu0 %3565
        %3569 = vset.pattern.permute.xlu0 0
        %3570 = vperm.xlu0 %3569, %v3560
        %v3571 = vpop.permute.xlu0 %3570
        %3574 = vset.pattern.permute.xlu0 0
        %3575 = vperm.xlu0 %3574, %v3561
        %v3576 = vpop.permute.xlu0 %3575
        %3579 = vset.pattern.permute.xlu0 0
        %3580 = vperm.xlu0 %3579, %v3562
        %v3581 = vpop.permute.xlu0 %3580
        %v3583 = vadd.f32 %v3534, %v3566
        %v3584 = vadd.f32 %v3535, %v3566
        %v3585 = vadd.f32 %v3536, %v3566
        %v3586 = vadd.f32 %v3537, %v3566
        %v3587 = vadd.f32 %v3538, %v3566
        %v3588 = vadd.f32 %v3539, %v3566
        %v3589 = vadd.f32 %v3540, %v3571
        %v3590 = vadd.f32 %v3541, %v3571
        %v3591 = vadd.f32 %v3542, %v3571
        %v3592 = vadd.f32 %v3543, %v3571
        %v3593 = vadd.f32 %v3544, %v3571
        %v3594 = vadd.f32 %v3545, %v3571
        %v3595 = vadd.f32 %v3546, %v3576
        %v3596 = vadd.f32 %v3547, %v3576
        %v3597 = vadd.f32 %v3548, %v3576
        %v3598 = vadd.f32 %v3549, %v3576
        %v3599 = vadd.f32 %v3550, %v3576
        %v3600 = vadd.f32 %v3551, %v3576
        %v3601 = vadd.f32 %v3552, %v3581
        %v3602 = vadd.f32 %v3553, %v3581
        %v3603 = vadd.f32 %v3554, %v3581
        %v3604 = vadd.f32 %v3555, %v3581
        %v3605 = vadd.f32 %v3556, %v3581
        %v3606 = vadd.f32 %v3557, %v3581
        %v3607 = vmul.f32 %v3583, %v364
        %v3608 = vmul.f32 %v3584, %v365
        %v3609 = vmul.f32 %v3585, %v366
        %v3610 = vmul.f32 %v3586, %v367
        %v3611 = vmul.f32 %v3587, %v368
        %v3612 = vmul.f32 %v3588, %v369
        %v3613 = vmul.f32 %v3589, %v364
        %v3614 = vmul.f32 %v3590, %v365
        %v3615 = vmul.f32 %v3591, %v366
        %v3616 = vmul.f32 %v3592, %v367
        %v3617 = vmul.f32 %v3593, %v368
        %v3618 = vmul.f32 %v3594, %v369
        %v3619 = vmul.f32 %v3595, %v364
        %v3620 = vmul.f32 %v3596, %v365
        %v3621 = vmul.f32 %v3597, %v366
        %v3622 = vmul.f32 %v3598, %v367
        %v3623 = vmul.f32 %v3599, %v368
        %v3624 = vmul.f32 %v3600, %v369
        %v3625 = vmul.f32 %v3601, %v364
        %v3626 = vmul.f32 %v3602, %v365
        %v3627 = vmul.f32 %v3603, %v366
        %v3628 = vmul.f32 %v3604, %v367
        %v3629 = vmul.f32 %v3605, %v368
        %v3630 = vmul.f32 %v3606, %v369
        %3631 = vst [vmem:[#allocation2] sm:$0xff] %v3607
        %3632 = vst [vmem:[#allocation2 + $0x8] sm:$0xff] %v3608
        %3633 = vst [vmem:[#allocation2 + $0x10] sm:$0xff] %v3609
        %3634 = vst [vmem:[#allocation2 + $0x18] sm:$0xff] %v3610
        %3635 = vst [vmem:[#allocation2 + $0x20] sm:$0xff] %v3611
        %3636 = vst [vmem:[#allocation2 + $0x28] sm:$0xff] %v3612
        %3637 = vst [vmem:[#allocation2 + $0x30] sm:$0xff] %v3613
        %3638 = vst [vmem:[#allocation2 + $0x38] sm:$0xff] %v3614
        %3639 = vst [vmem:[#allocation2 + $0x40] sm:$0xff] %v3615
        %3640 = vst [vmem:[#allocation2 + $0x48] sm:$0xff] %v3616
        %3641 = vst [vmem:[#allocation2 + $0x50] sm:$0xff] %v3617
        %3642 = vst [vmem:[#allocation2 + $0x58] sm:$0xff] %v3618
        %3643 = vst [vmem:[#allocation2 + $0x60] sm:$0xff] %v3619
        %3644 = vst [vmem:[#allocation2 + $0x68] sm:$0xff] %v3620
        %3645 = vst [vmem:[#allocation2 + $0x70] sm:$0xff] %v3621
        %3646 = vst [vmem:[#allocation2 + $0x78] sm:$0xff] %v3622
        %3647 = vst [vmem:[#allocation2 + $0x80] sm:$0xff] %v3623
        %3648 = vst [vmem:[#allocation2 + $0x88] sm:$0xff] %v3624
        %3649 = vst [vmem:[#allocation2 + $0x90] sm:$0xff] %v3625
        %3650 = vst [vmem:[#allocation2 + $0x98] sm:$0xff] %v3626
        %3651 = vst [vmem:[#allocation2 + $0xa0] sm:$0xff] %v3627
        %3652 = vst [vmem:[#allocation2 + $0xa8] sm:$0xff] %v3628
        %3653 = vst [vmem:[#allocation2 + $0xb0] sm:$0xff] %v3629
        %3654 = vst [vmem:[#allocation2 + $0xb8] sm:$0xff] %v3630
        %v3655 = vld [vmem:[#allocation2] sm:$0xff]
        %v3656 = vld [vmem:[#allocation2 + $0x30] sm:$0xff]
        %v3657 = vld [vmem:[#allocation2 + $0x60] sm:$0xff]
        %v3658 = vld [vmem:[#allocation2 + $0x90] sm:$0xff]
        %3663 = vrot.lane.b32.xlu0 %v3655, 109
        %v3664 = vpop.permute.xlu0 %3663
        %3665 = vrot.lane.b32.xlu0 %v3656, 109
        %v3666 = vpop.permute.xlu0 %3665
        %3667 = vrot.lane.b32.xlu0 %v3657, 109
        %v3668 = vpop.permute.xlu0 %3667
        %3669 = vrot.lane.b32.xlu0 %v3658, 109
        %v3670 = vpop.permute.xlu0 %3669
        %vm3675 = vcmask 130048
        %3676 = vst.msk [vmem:[%s5] sm:$0xff] %vm3675, %v3664
        %3677 = vst.msk [vmem:[%s5 + $0x20] sm:$0xff] %vm3675, %v3666
        %3678 = vst.msk [vmem:[%s5 + $0x40] sm:$0xff] %vm3675, %v3668
        %3679 = vst.msk [vmem:[%s5 + $0x60] sm:$0xff] %vm3675, %v3670
        %v3680 = vld [vmem:[#allocation2] sm:$0xff]
        %v3681 = vld [vmem:[#allocation2 + $0x30] sm:$0xff]
        %v3682 = vld [vmem:[#allocation2 + $0x60] sm:$0xff]
        %v3683 = vld [vmem:[#allocation2 + $0x90] sm:$0xff]
        %3688 = vrot.lane.b32.xlu0 %v3680, 107
        %v3689 = vpop.permute.xlu0 %3688
        %3690 = vrot.lane.b32.xlu0 %v3681, 107
        %v3691 = vpop.permute.xlu0 %3690
        %3692 = vrot.lane.b32.xlu0 %v3682, 107
        %v3693 = vpop.permute.xlu0 %3692
        %3694 = vrot.lane.b32.xlu0 %v3683, 107
        %v3695 = vpop.permute.xlu0 %3694
        %vm3700 = vcmask 261248
        %3701 = vst.msk [vmem:[%s5] sm:$0xff] %vm3700, %v3689
        %3702 = vst.msk [vmem:[%s5 + $0x20] sm:$0xff] %vm3700, %v3691
        %3703 = vst.msk [vmem:[%s5 + $0x40] sm:$0xff] %vm3700, %v3693
        %3704 = vst.msk [vmem:[%s5 + $0x60] sm:$0xff] %vm3700, %v3695
        %v3705 = vld [vmem:[#allocation2] sm:$0xff]
        %v3706 = vld [vmem:[#allocation2 + $0x30] sm:$0xff]
        %v3707 = vld [vmem:[#allocation2 + $0x60] sm:$0xff]
        %v3708 = vld [vmem:[#allocation2 + $0x90] sm:$0xff]
        %3713 = vrot.lane.b32.xlu0 %v3705, 105
        %v3714 = vpop.permute.xlu0 %3713
        %3715 = vrot.lane.b32.xlu0 %v3706, 105
        %v3716 = vpop.permute.xlu0 %3715
        %3717 = vrot.lane.b32.xlu0 %v3707, 105
        %v3718 = vpop.permute.xlu0 %3717
        %3719 = vrot.lane.b32.xlu0 %v3708, 105
        %v3720 = vpop.permute.xlu0 %3719
        %vm3725 = vcmask 392448
        %3726 = vst.msk [vmem:[%s5] sm:$0xff] %vm3725, %v3714
        %3727 = vst.msk [vmem:[%s5 + $0x20] sm:$0xff] %vm3725, %v3716
        %3728 = vst.msk [vmem:[%s5 + $0x40] sm:$0xff] %vm3725, %v3718
        %3729 = vst.msk [vmem:[%s5 + $0x60] sm:$0xff] %vm3725, %v3720
        %v3730 = vld [vmem:[#allocation2] sm:$0xff]
        %v3731 = vld [vmem:[#allocation2 + $0x30] sm:$0xff]
        %v3732 = vld [vmem:[#allocation2 + $0x60] sm:$0xff]
        %v3733 = vld [vmem:[#allocation2 + $0x90] sm:$0xff]
        %3738 = vrot.lane.b32.xlu0 %v3730, 103
        %v3739 = vpop.permute.xlu0 %3738
        %3740 = vrot.lane.b32.xlu0 %v3731, 103
        %v3741 = vpop.permute.xlu0 %3740
        %3742 = vrot.lane.b32.xlu0 %v3732, 103
        %v3743 = vpop.permute.xlu0 %3742
        %3744 = vrot.lane.b32.xlu0 %v3733, 103
        %v3745 = vpop.permute.xlu0 %3744
        %vm3750 = vcmask 523648
        %3751 = vst.msk [vmem:[%s5] sm:$0xff] %vm3750, %v3739
        %3752 = vst.msk [vmem:[%s5 + $0x20] sm:$0xff] %vm3750, %v3741
        %3753 = vst.msk [vmem:[%s5 + $0x40] sm:$0xff] %vm3750, %v3743
        %3754 = vst.msk [vmem:[%s5 + $0x60] sm:$0xff] %vm3750, %v3745
        %v3755 = vld [vmem:[#allocation2] sm:$0xff]
        %v3756 = vld [vmem:[#allocation2 + $0x30] sm:$0xff]
        %v3757 = vld [vmem:[#allocation2 + $0x60] sm:$0xff]
        %v3758 = vld [vmem:[#allocation2 + $0x90] sm:$0xff]
        %3763 = vrot.lane.b32.xlu0 %v3755, 101
        %v3764 = vpop.permute.xlu0 %3763
        %3765 = vrot.lane.b32.xlu0 %v3756, 101
        %v3766 = vpop.permute.xlu0 %3765
        %3767 = vrot.lane.b32.xlu0 %v3757, 101
        %v3768 = vpop.permute.xlu0 %3767
        %3769 = vrot.lane.b32.xlu0 %v3758, 101
        %v3770 = vpop.permute.xlu0 %3769
        %vm3775 = vcmask 654848
        %3776 = vst.msk [vmem:[%s5] sm:$0xff] %vm3775, %v3764
        %3777 = vst.msk [vmem:[%s5 + $0x20] sm:$0xff] %vm3775, %v3766
        %3778 = vst.msk [vmem:[%s5 + $0x40] sm:$0xff] %vm3775, %v3768
        %3779 = vst.msk [vmem:[%s5 + $0x60] sm:$0xff] %vm3775, %v3770
        %v3780 = vld [vmem:[#allocation2] sm:$0xff]
        %v3781 = vld [vmem:[#allocation2 + $0x30] sm:$0xff]
        %v3782 = vld [vmem:[#allocation2 + $0x60] sm:$0xff]
        %v3783 = vld [vmem:[#allocation2 + $0x90] sm:$0xff]
        %3788 = vrot.lane.b32.xlu0 %v3780, 99
        %v3789 = vpop.permute.xlu0 %3788
        %3790 = vrot.lane.b32.xlu0 %v3781, 99
        %v3791 = vpop.permute.xlu0 %3790
        %3792 = vrot.lane.b32.xlu0 %v3782, 99
        %v3793 = vpop.permute.xlu0 %3792
        %3794 = vrot.lane.b32.xlu0 %v3783, 99
        %v3795 = vpop.permute.xlu0 %3794
        %vm3800 = vcmask 786048
        %3801 = vst.msk [vmem:[%s5] sm:$0xff] %vm3800, %v3789
        %3802 = vst.msk [vmem:[%s5 + $0x20] sm:$0xff] %vm3800, %v3791
        %3803 = vst.msk [vmem:[%s5 + $0x40] sm:$0xff] %vm3800, %v3793
        %3804 = vst.msk [vmem:[%s5 + $0x60] sm:$0xff] %vm3800, %v3795
        %v3805 = vld [vmem:[#allocation2] sm:$0xff]
        %v3806 = vld [vmem:[#allocation2 + $0x8] sm:$0xff]
        %v3807 = vld [vmem:[#allocation2 + $0x30] sm:$0xff]
        %v3808 = vld [vmem:[#allocation2 + $0x38] sm:$0xff]
        %v3809 = vld [vmem:[#allocation2 + $0x60] sm:$0xff]
        %v3810 = vld [vmem:[#allocation2 + $0x68] sm:$0xff]
        %v3811 = vld [vmem:[#allocation2 + $0x90] sm:$0xff]
        %v3812 = vld [vmem:[#allocation2 + $0x98] sm:$0xff]
        %3821 = vrot.lane.b32.xlu0 %v3805, 97
        %v3822 = vpop.permute.xlu0 %3821
        %3823 = vrot.lane.b32.xlu0 %v3806, 97
        %v3824 = vpop.permute.xlu0 %3823
        %3825 = vrot.lane.b32.xlu0 %v3807, 97
        %v3826 = vpop.permute.xlu0 %3825
        %3827 = vrot.lane.b32.xlu0 %v3808, 97
        %v3828 = vpop.permute.xlu0 %3827
        %3829 = vrot.lane.b32.xlu0 %v3809, 97
        %v3830 = vpop.permute.xlu0 %3829
        %3831 = vrot.lane.b32.xlu0 %v3810, 97
        %v3832 = vpop.permute.xlu0 %3831
        %3833 = vrot.lane.b32.xlu0 %v3811, 97
        %v3834 = vpop.permute.xlu0 %3833
        %3835 = vrot.lane.b32.xlu0 %v3812, 97
        %v3836 = vpop.permute.xlu0 %3835
        %vm3837 = vcmask 793600
        %v3838 = vsel %vm3837, %v3822, %v3824
        %v3839 = vsel %vm3837, %v3826, %v3828
        %v3840 = vsel %vm3837, %v3830, %v3832
        %v3841 = vsel %vm3837, %v3834, %v3836
        %vm3846 = vcmask 917248
        %3847 = vst.msk [vmem:[%s5] sm:$0xff] %vm3846, %v3838
        %3848 = vst.msk [vmem:[%s5 + $0x20] sm:$0xff] %vm3846, %v3839
        %3849 = vst.msk [vmem:[%s5 + $0x40] sm:$0xff] %vm3846, %v3840
        %3850 = vst.msk [vmem:[%s5 + $0x60] sm:$0xff] %vm3846, %v3841
        %v3851 = vld [vmem:[#allocation2 + $0x8] sm:$0xff]
        %v3852 = vld [vmem:[#allocation2 + $0x38] sm:$0xff]
        %v3853 = vld [vmem:[#allocation2 + $0x68] sm:$0xff]
        %v3854 = vld [vmem:[#allocation2 + $0x98] sm:$0xff]
        %3859 = vrot.lane.b32.xlu0 %v3851, 95
        %v3860 = vpop.permute.xlu0 %3859
        %3861 = vrot.lane.b32.xlu0 %v3852, 95
        %v3862 = vpop.permute.xlu0 %3861
        %3863 = vrot.lane.b32.xlu0 %v3853, 95
        %v3864 = vpop.permute.xlu0 %3863
        %3865 = vrot.lane.b32.xlu0 %v3854, 95
        %v3866 = vpop.permute.xlu0 %3865
        %vm3871 = vcmask 1048448
        %3872 = vst.msk [vmem:[%s5] sm:$0xff] %vm3871, %v3860
        %3873 = vst.msk [vmem:[%s5 + $0x20] sm:$0xff] %vm3871, %v3862
        %3874 = vst.msk [vmem:[%s5 + $0x40] sm:$0xff] %vm3871, %v3864
        %3875 = vst.msk [vmem:[%s5 + $0x60] sm:$0xff] %vm3871, %v3866
        %v3876 = vld [vmem:[#allocation2 + $0x8] sm:$0xff]
        %v3877 = vld [vmem:[#allocation2 + $0x38] sm:$0xff]
        %v3878 = vld [vmem:[#allocation2 + $0x68] sm:$0xff]
        %v3879 = vld [vmem:[#allocation2 + $0x98] sm:$0xff]
        %3884 = vrot.lane.b32.xlu0 %v3876, 93
        %v3885 = vpop.permute.xlu0 %3884
        %3886 = vrot.lane.b32.xlu0 %v3877, 93
        %v3887 = vpop.permute.xlu0 %3886
        %3888 = vrot.lane.b32.xlu0 %v3878, 93
        %v3889 = vpop.permute.xlu0 %3888
        %3890 = vrot.lane.b32.xlu0 %v3879, 93
        %v3891 = vpop.permute.xlu0 %3890
        %3896 = vst.msk [vmem:[%s5 + $0x8] sm:$0xff] %vm3675, %v3885
        %3897 = vst.msk [vmem:[%s5 + $0x28] sm:$0xff] %vm3675, %v3887
        %3898 = vst.msk [vmem:[%s5 + $0x48] sm:$0xff] %vm3675, %v3889
        %3899 = vst.msk [vmem:[%s5 + $0x68] sm:$0xff] %vm3675, %v3891
        %v3900 = vld [vmem:[#allocation2 + $0x8] sm:$0xff]
        %v3901 = vld [vmem:[#allocation2 + $0x38] sm:$0xff]
        %v3902 = vld [vmem:[#allocation2 + $0x68] sm:$0xff]
        %v3903 = vld [vmem:[#allocation2 + $0x98] sm:$0xff]
        %3908 = vrot.lane.b32.xlu0 %v3900, 91
        %v3909 = vpop.permute.xlu0 %3908
        %3910 = vrot.lane.b32.xlu0 %v3901, 91
        %v3911 = vpop.permute.xlu0 %3910
        %3912 = vrot.lane.b32.xlu0 %v3902, 91
        %v3913 = vpop.permute.xlu0 %3912
        %3914 = vrot.lane.b32.xlu0 %v3903, 91
        %v3915 = vpop.permute.xlu0 %3914
        %3920 = vst.msk [vmem:[%s5 + $0x8] sm:$0xff] %vm3700, %v3909
        %3921 = vst.msk [vmem:[%s5 + $0x28] sm:$0xff] %vm3700, %v3911
        %3922 = vst.msk [vmem:[%s5 + $0x48] sm:$0xff] %vm3700, %v3913
        %3923 = vst.msk [vmem:[%s5 + $0x68] sm:$0xff] %vm3700, %v3915
        %v3924 = vld [vmem:[#allocation2 + $0x8] sm:$0xff]
        %v3925 = vld [vmem:[#allocation2 + $0x38] sm:$0xff]
        %v3926 = vld [vmem:[#allocation2 + $0x68] sm:$0xff]
        %v3927 = vld [vmem:[#allocation2 + $0x98] sm:$0xff]
        %3932 = vrot.lane.b32.xlu0 %v3924, 89
        %v3933 = vpop.permute.xlu0 %3932
        %3934 = vrot.lane.b32.xlu0 %v3925, 89
        %v3935 = vpop.permute.xlu0 %3934
        %3936 = vrot.lane.b32.xlu0 %v3926, 89
        %v3937 = vpop.permute.xlu0 %3936
        %3938 = vrot.lane.b32.xlu0 %v3927, 89
        %v3939 = vpop.permute.xlu0 %3938
        %3944 = vst.msk [vmem:[%s5 + $0x8] sm:$0xff] %vm3725, %v3933
        %3945 = vst.msk [vmem:[%s5 + $0x28] sm:$0xff] %vm3725, %v3935
        %3946 = vst.msk [vmem:[%s5 + $0x48] sm:$0xff] %vm3725, %v3937
        %3947 = vst.msk [vmem:[%s5 + $0x68] sm:$0xff] %vm3725, %v3939
        %v3948 = vld [vmem:[#allocation2 + $0x8] sm:$0xff]
        %v3949 = vld [vmem:[#allocation2 + $0x38] sm:$0xff]
        %v3950 = vld [vmem:[#allocation2 + $0x68] sm:$0xff]
        %v3951 = vld [vmem:[#allocation2 + $0x98] sm:$0xff]
        %3956 = vrot.lane.b32.xlu0 %v3948, 87
        %v3957 = vpop.permute.xlu0 %3956
        %3958 = vrot.lane.b32.xlu0 %v3949, 87
        %v3959 = vpop.permute.xlu0 %3958
        %3960 = vrot.lane.b32.xlu0 %v3950, 87
        %v3961 = vpop.permute.xlu0 %3960
        %3962 = vrot.lane.b32.xlu0 %v3951, 87
        %v3963 = vpop.permute.xlu0 %3962
        %3968 = vst.msk [vmem:[%s5 + $0x8] sm:$0xff] %vm3750, %v3957
        %3969 = vst.msk [vmem:[%s5 + $0x28] sm:$0xff] %vm3750, %v3959
        %3970 = vst.msk [vmem:[%s5 + $0x48] sm:$0xff] %vm3750, %v3961
        %3971 = vst.msk [vmem:[%s5 + $0x68] sm:$0xff] %vm3750, %v3963
        %v3972 = vld [vmem:[#allocation2 + $0x8] sm:$0xff]
        %v3973 = vld [vmem:[#allocation2 + $0x38] sm:$0xff]
        %v3974 = vld [vmem:[#allocation2 + $0x68] sm:$0xff]
        %v3975 = vld [vmem:[#allocation2 + $0x98] sm:$0xff]
        %3980 = vrot.lane.b32.xlu0 %v3972, 85
        %v3981 = vpop.permute.xlu0 %3980
        %3982 = vrot.lane.b32.xlu0 %v3973, 85
        %v3983 = vpop.permute.xlu0 %3982
        %3984 = vrot.lane.b32.xlu0 %v3974, 85
        %v3985 = vpop.permute.xlu0 %3984
        %3986 = vrot.lane.b32.xlu0 %v3975, 85
        %v3987 = vpop.permute.xlu0 %3986
        %3992 = vst.msk [vmem:[%s5 + $0x8] sm:$0xff] %vm3775, %v3981
        %3993 = vst.msk [vmem:[%s5 + $0x28] sm:$0xff] %vm3775, %v3983
        %3994 = vst.msk [vmem:[%s5 + $0x48] sm:$0xff] %vm3775, %v3985
        %3995 = vst.msk [vmem:[%s5 + $0x68] sm:$0xff] %vm3775, %v3987
        %v3996 = vld [vmem:[#allocation2 + $0x8] sm:$0xff]
        %v3997 = vld [vmem:[#allocation2 + $0x10] sm:$0xff]
        %v3998 = vld [vmem:[#allocation2 + $0x38] sm:$0xff]
        %v3999 = vld [vmem:[#allocation2 + $0x40] sm:$0xff]
        %v4000 = vld [vmem:[#allocation2 + $0x68] sm:$0xff]
        %v4001 = vld [vmem:[#allocation2 + $0x70] sm:$0xff]
        %v4002 = vld [vmem:[#allocation2 + $0x98] sm:$0xff]
        %v4003 = vld [vmem:[#allocation2 + $0xa0] sm:$0xff]
        %4012 = vrot.lane.b32.xlu0 %v3996, 83
        %v4013 = vpop.permute.xlu0 %4012
        %4014 = vrot.lane.b32.xlu0 %v3997, 83
        %v4015 = vpop.permute.xlu0 %4014
        %4016 = vrot.lane.b32.xlu0 %v3998, 83
        %v4017 = vpop.permute.xlu0 %4016
        %4018 = vrot.lane.b32.xlu0 %v3999, 83
        %v4019 = vpop.permute.xlu0 %4018
        %4020 = vrot.lane.b32.xlu0 %v4000, 83
        %v4021 = vpop.permute.xlu0 %4020
        %4022 = vrot.lane.b32.xlu0 %v4001, 83
        %v4023 = vpop.permute.xlu0 %4022
        %4024 = vrot.lane.b32.xlu0 %v4002, 83
        %v4025 = vpop.permute.xlu0 %4024
        %4026 = vrot.lane.b32.xlu0 %v4003, 83
        %v4027 = vpop.permute.xlu0 %4026
        %vm4028 = vcmask 678912
        %v4029 = vsel %vm4028, %v4013, %v4015
        %v4030 = vsel %vm4028, %v4017, %v4019
        %v4031 = vsel %vm4028, %v4021, %v4023
        %v4032 = vsel %vm4028, %v4025, %v4027
        %4037 = vst.msk [vmem:[%s5 + $0x8] sm:$0xff] %vm3800, %v4029
        %4038 = vst.msk [vmem:[%s5 + $0x28] sm:$0xff] %vm3800, %v4030
        %4039 = vst.msk [vmem:[%s5 + $0x48] sm:$0xff] %vm3800, %v4031
        %4040 = vst.msk [vmem:[%s5 + $0x68] sm:$0xff] %vm3800, %v4032
        %v4041 = vld [vmem:[#allocation2 + $0x10] sm:$0xff]
        %v4042 = vld [vmem:[#allocation2 + $0x40] sm:$0xff]
        %v4043 = vld [vmem:[#allocation2 + $0x70] sm:$0xff]
        %v4044 = vld [vmem:[#allocation2 + $0xa0] sm:$0xff]
        %4049 = vrot.lane.b32.xlu0 %v4041, 81
        %v4050 = vpop.permute.xlu0 %4049
        %4051 = vrot.lane.b32.xlu0 %v4042, 81
        %v4052 = vpop.permute.xlu0 %4051
        %4053 = vrot.lane.b32.xlu0 %v4043, 81
        %v4054 = vpop.permute.xlu0 %4053
        %4055 = vrot.lane.b32.xlu0 %v4044, 81
        %v4056 = vpop.permute.xlu0 %4055
        %4061 = vst.msk [vmem:[%s5 + $0x8] sm:$0xff] %vm3846, %v4050
        %4062 = vst.msk [vmem:[%s5 + $0x28] sm:$0xff] %vm3846, %v4052
        %4063 = vst.msk [vmem:[%s5 + $0x48] sm:$0xff] %vm3846, %v4054
        %4064 = vst.msk [vmem:[%s5 + $0x68] sm:$0xff] %vm3846, %v4056
        %v4065 = vld [vmem:[#allocation2 + $0x10] sm:$0xff]
        %v4066 = vld [vmem:[#allocation2 + $0x40] sm:$0xff]
        %v4067 = vld [vmem:[#allocation2 + $0x70] sm:$0xff]
        %v4068 = vld [vmem:[#allocation2 + $0xa0] sm:$0xff]
        %4073 = vrot.lane.b32.xlu0 %v4065, 79
        %v4074 = vpop.permute.xlu0 %4073
        %4075 = vrot.lane.b32.xlu0 %v4066, 79
        %v4076 = vpop.permute.xlu0 %4075
        %4077 = vrot.lane.b32.xlu0 %v4067, 79
        %v4078 = vpop.permute.xlu0 %4077
        %4079 = vrot.lane.b32.xlu0 %v4068, 79
        %v4080 = vpop.permute.xlu0 %4079
        %4085 = vst.msk [vmem:[%s5 + $0x8] sm:$0xff] %vm3871, %v4074
        %4086 = vst.msk [vmem:[%s5 + $0x28] sm:$0xff] %vm3871, %v4076
        %4087 = vst.msk [vmem:[%s5 + $0x48] sm:$0xff] %vm3871, %v4078
        %4088 = vst.msk [vmem:[%s5 + $0x68] sm:$0xff] %vm3871, %v4080
        %v4089 = vld [vmem:[#allocation2 + $0x18] sm:$0xff]
        %v4090 = vld [vmem:[#allocation2 + $0x48] sm:$0xff]
        %v4091 = vld [vmem:[#allocation2 + $0x78] sm:$0xff]
        %v4092 = vld [vmem:[#allocation2 + $0xa8] sm:$0xff]
        %4097 = vrot.lane.b32.xlu0 %v4089, 109
        %v4098 = vpop.permute.xlu0 %4097
        %4099 = vrot.lane.b32.xlu0 %v4090, 109
        %v4100 = vpop.permute.xlu0 %4099
        %4101 = vrot.lane.b32.xlu0 %v4091, 109
        %v4102 = vpop.permute.xlu0 %4101
        %4103 = vrot.lane.b32.xlu0 %v4092, 109
        %v4104 = vpop.permute.xlu0 %4103
        %4109 = vst.msk [vmem:[%s5 + $0x10] sm:$0xff] %vm3675, %v4098
        %4110 = vst.msk [vmem:[%s5 + $0x30] sm:$0xff] %vm3675, %v4100
        %4111 = vst.msk [vmem:[%s5 + $0x50] sm:$0xff] %vm3675, %v4102
        %4112 = vst.msk [vmem:[%s5 + $0x70] sm:$0xff] %vm3675, %v4104
        %v4113 = vld [vmem:[#allocation2 + $0x18] sm:$0xff]
        %v4114 = vld [vmem:[#allocation2 + $0x48] sm:$0xff]
        %v4115 = vld [vmem:[#allocation2 + $0x78] sm:$0xff]
        %v4116 = vld [vmem:[#allocation2 + $0xa8] sm:$0xff]
        %4121 = vrot.lane.b32.xlu0 %v4113, 107
        %v4122 = vpop.permute.xlu0 %4121
        %4123 = vrot.lane.b32.xlu0 %v4114, 107
        %v4124 = vpop.permute.xlu0 %4123
        %4125 = vrot.lane.b32.xlu0 %v4115, 107
        %v4126 = vpop.permute.xlu0 %4125
        %4127 = vrot.lane.b32.xlu0 %v4116, 107
        %v4128 = vpop.permute.xlu0 %4127
        %4133 = vst.msk [vmem:[%s5 + $0x10] sm:$0xff] %vm3700, %v4122
        %4134 = vst.msk [vmem:[%s5 + $0x30] sm:$0xff] %vm3700, %v4124
        %4135 = vst.msk [vmem:[%s5 + $0x50] sm:$0xff] %vm3700, %v4126
        %4136 = vst.msk [vmem:[%s5 + $0x70] sm:$0xff] %vm3700, %v4128
        %v4137 = vld [vmem:[#allocation2 + $0x18] sm:$0xff]
        %v4138 = vld [vmem:[#allocation2 + $0x48] sm:$0xff]
        %v4139 = vld [vmem:[#allocation2 + $0x78] sm:$0xff]
        %v4140 = vld [vmem:[#allocation2 + $0xa8] sm:$0xff]
        %4145 = vrot.lane.b32.xlu0 %v4137, 105
        %v4146 = vpop.permute.xlu0 %4145
        %4147 = vrot.lane.b32.xlu0 %v4138, 105
        %v4148 = vpop.permute.xlu0 %4147
        %4149 = vrot.lane.b32.xlu0 %v4139, 105
        %v4150 = vpop.permute.xlu0 %4149
        %4151 = vrot.lane.b32.xlu0 %v4140, 105
        %v4152 = vpop.permute.xlu0 %4151
        %4157 = vst.msk [vmem:[%s5 + $0x10] sm:$0xff] %vm3725, %v4146
        %4158 = vst.msk [vmem:[%s5 + $0x30] sm:$0xff] %vm3725, %v4148
        %4159 = vst.msk [vmem:[%s5 + $0x50] sm:$0xff] %vm3725, %v4150
        %4160 = vst.msk [vmem:[%s5 + $0x70] sm:$0xff] %vm3725, %v4152
        %v4161 = vld [vmem:[#allocation2 + $0x18] sm:$0xff]
        %v4162 = vld [vmem:[#allocation2 + $0x48] sm:$0xff]
        %v4163 = vld [vmem:[#allocation2 + $0x78] sm:$0xff]
        %v4164 = vld [vmem:[#allocation2 + $0xa8] sm:$0xff]
        %4169 = vrot.lane.b32.xlu0 %v4161, 103
        %v4170 = vpop.permute.xlu0 %4169
        %4171 = vrot.lane.b32.xlu0 %v4162, 103
        %v4172 = vpop.permute.xlu0 %4171
        %4173 = vrot.lane.b32.xlu0 %v4163, 103
        %v4174 = vpop.permute.xlu0 %4173
        %4175 = vrot.lane.b32.xlu0 %v4164, 103
        %v4176 = vpop.permute.xlu0 %4175
        %4181 = vst.msk [vmem:[%s5 + $0x10] sm:$0xff] %vm3750, %v4170
        %4182 = vst.msk [vmem:[%s5 + $0x30] sm:$0xff] %vm3750, %v4172
        %4183 = vst.msk [vmem:[%s5 + $0x50] sm:$0xff] %vm3750, %v4174
        %4184 = vst.msk [vmem:[%s5 + $0x70] sm:$0xff] %vm3750, %v4176
        %v4185 = vld [vmem:[#allocation2 + $0x18] sm:$0xff]
        %v4186 = vld [vmem:[#allocation2 + $0x48] sm:$0xff]
        %v4187 = vld [vmem:[#allocation2 + $0x78] sm:$0xff]
        %v4188 = vld [vmem:[#allocation2 + $0xa8] sm:$0xff]
        %4193 = vrot.lane.b32.xlu0 %v4185, 101
        %v4194 = vpop.permute.xlu0 %4193
        %4195 = vrot.lane.b32.xlu0 %v4186, 101
        %v4196 = vpop.permute.xlu0 %4195
        %4197 = vrot.lane.b32.xlu0 %v4187, 101
        %v4198 = vpop.permute.xlu0 %4197
        %4199 = vrot.lane.b32.xlu0 %v4188, 101
        %v4200 = vpop.permute.xlu0 %4199
        %4205 = vst.msk [vmem:[%s5 + $0x10] sm:$0xff] %vm3775, %v4194
        %4206 = vst.msk [vmem:[%s5 + $0x30] sm:$0xff] %vm3775, %v4196
        %4207 = vst.msk [vmem:[%s5 + $0x50] sm:$0xff] %vm3775, %v4198
        %4208 = vst.msk [vmem:[%s5 + $0x70] sm:$0xff] %vm3775, %v4200
        %v4209 = vld [vmem:[#allocation2 + $0x18] sm:$0xff]
        %v4210 = vld [vmem:[#allocation2 + $0x48] sm:$0xff]
        %v4211 = vld [vmem:[#allocation2 + $0x78] sm:$0xff]
        %v4212 = vld [vmem:[#allocation2 + $0xa8] sm:$0xff]
        %4217 = vrot.lane.b32.xlu0 %v4209, 99
        %v4218 = vpop.permute.xlu0 %4217
        %4219 = vrot.lane.b32.xlu0 %v4210, 99
        %v4220 = vpop.permute.xlu0 %4219
        %4221 = vrot.lane.b32.xlu0 %v4211, 99
        %v4222 = vpop.permute.xlu0 %4221
        %4223 = vrot.lane.b32.xlu0 %v4212, 99
        %v4224 = vpop.permute.xlu0 %4223
        %4229 = vst.msk [vmem:[%s5 + $0x10] sm:$0xff] %vm3800, %v4218
        %4230 = vst.msk [vmem:[%s5 + $0x30] sm:$0xff] %vm3800, %v4220
        %4231 = vst.msk [vmem:[%s5 + $0x50] sm:$0xff] %vm3800, %v4222
        %4232 = vst.msk [vmem:[%s5 + $0x70] sm:$0xff] %vm3800, %v4224
        %v4233 = vld [vmem:[#allocation2 + $0x18] sm:$0xff]
        %v4234 = vld [vmem:[#allocation2 + $0x20] sm:$0xff]
        %v4235 = vld [vmem:[#allocation2 + $0x48] sm:$0xff]
        %v4236 = vld [vmem:[#allocation2 + $0x50] sm:$0xff]
        %v4237 = vld [vmem:[#allocation2 + $0x78] sm:$0xff]
        %v4238 = vld [vmem:[#allocation2 + $0x80] sm:$0xff]
        %v4239 = vld [vmem:[#allocation2 + $0xa8] sm:$0xff]
        %v4240 = vld [vmem:[#allocation2 + $0xb0] sm:$0xff]
        %4249 = vrot.lane.b32.xlu0 %v4233, 97
        %v4250 = vpop.permute.xlu0 %4249
        %4251 = vrot.lane.b32.xlu0 %v4234, 97
        %v4252 = vpop.permute.xlu0 %4251
        %4253 = vrot.lane.b32.xlu0 %v4235, 97
        %v4254 = vpop.permute.xlu0 %4253
        %4255 = vrot.lane.b32.xlu0 %v4236, 97
        %v4256 = vpop.permute.xlu0 %4255
        %4257 = vrot.lane.b32.xlu0 %v4237, 97
        %v4258 = vpop.permute.xlu0 %4257
        %4259 = vrot.lane.b32.xlu0 %v4238, 97
        %v4260 = vpop.permute.xlu0 %4259
        %4261 = vrot.lane.b32.xlu0 %v4239, 97
        %v4262 = vpop.permute.xlu0 %4261
        %4263 = vrot.lane.b32.xlu0 %v4240, 97
        %v4264 = vpop.permute.xlu0 %4263
        %v4265 = vsel %vm3837, %v4250, %v4252
        %v4266 = vsel %vm3837, %v4254, %v4256
        %v4267 = vsel %vm3837, %v4258, %v4260
        %v4268 = vsel %vm3837, %v4262, %v4264
        %4273 = vst.msk [vmem:[%s5 + $0x10] sm:$0xff] %vm3846, %v4265
        %4274 = vst.msk [vmem:[%s5 + $0x30] sm:$0xff] %vm3846, %v4266
        %4275 = vst.msk [vmem:[%s5 + $0x50] sm:$0xff] %vm3846, %v4267
        %4276 = vst.msk [vmem:[%s5 + $0x70] sm:$0xff] %vm3846, %v4268
        %v4277 = vld [vmem:[#allocation2 + $0x20] sm:$0xff]
        %v4278 = vld [vmem:[#allocation2 + $0x50] sm:$0xff]
        %v4279 = vld [vmem:[#allocation2 + $0x80] sm:$0xff]
        %v4280 = vld [vmem:[#allocation2 + $0xb0] sm:$0xff]
        %4285 = vrot.lane.b32.xlu0 %v4277, 95
        %v4286 = vpop.permute.xlu0 %4285
        %4287 = vrot.lane.b32.xlu0 %v4278, 95
        %v4288 = vpop.permute.xlu0 %4287
        %4289 = vrot.lane.b32.xlu0 %v4279, 95
        %v4290 = vpop.permute.xlu0 %4289
        %4291 = vrot.lane.b32.xlu0 %v4280, 95
        %v4292 = vpop.permute.xlu0 %4291
        %4297 = vst.msk [vmem:[%s5 + $0x10] sm:$0xff] %vm3871, %v4286
        %4298 = vst.msk [vmem:[%s5 + $0x30] sm:$0xff] %vm3871, %v4288
        %4299 = vst.msk [vmem:[%s5 + $0x50] sm:$0xff] %vm3871, %v4290
        %4300 = vst.msk [vmem:[%s5 + $0x70] sm:$0xff] %vm3871, %v4292
        %v4301 = vld [vmem:[#allocation2 + $0x20] sm:$0xff]
        %v4302 = vld [vmem:[#allocation2 + $0x50] sm:$0xff]
        %v4303 = vld [vmem:[#allocation2 + $0x80] sm:$0xff]
        %v4304 = vld [vmem:[#allocation2 + $0xb0] sm:$0xff]
        %4309 = vrot.lane.b32.xlu0 %v4301, 93
        %v4310 = vpop.permute.xlu0 %4309
        %4311 = vrot.lane.b32.xlu0 %v4302, 93
        %v4312 = vpop.permute.xlu0 %4311
        %4313 = vrot.lane.b32.xlu0 %v4303, 93
        %v4314 = vpop.permute.xlu0 %4313
        %4315 = vrot.lane.b32.xlu0 %v4304, 93
        %v4316 = vpop.permute.xlu0 %4315
        %4321 = vst.msk [vmem:[%s5 + $0x18] sm:$0xff] %vm3675, %v4310
        %4322 = vst.msk [vmem:[%s5 + $0x38] sm:$0xff] %vm3675, %v4312
        %4323 = vst.msk [vmem:[%s5 + $0x58] sm:$0xff] %vm3675, %v4314
        %4324 = vst.msk [vmem:[%s5 + $0x78] sm:$0xff] %vm3675, %v4316
        %v4325 = vld [vmem:[#allocation2 + $0x20] sm:$0xff]
        %v4326 = vld [vmem:[#allocation2 + $0x50] sm:$0xff]
        %v4327 = vld [vmem:[#allocation2 + $0x80] sm:$0xff]
        %v4328 = vld [vmem:[#allocation2 + $0xb0] sm:$0xff]
        %4333 = vrot.lane.b32.xlu0 %v4325, 91
        %v4334 = vpop.permute.xlu0 %4333
        %4335 = vrot.lane.b32.xlu0 %v4326, 91
        %v4336 = vpop.permute.xlu0 %4335
        %4337 = vrot.lane.b32.xlu0 %v4327, 91
        %v4338 = vpop.permute.xlu0 %4337
        %4339 = vrot.lane.b32.xlu0 %v4328, 91
        %v4340 = vpop.permute.xlu0 %4339
        %4345 = vst.msk [vmem:[%s5 + $0x18] sm:$0xff] %vm3700, %v4334
        %4346 = vst.msk [vmem:[%s5 + $0x38] sm:$0xff] %vm3700, %v4336
        %4347 = vst.msk [vmem:[%s5 + $0x58] sm:$0xff] %vm3700, %v4338
        %4348 = vst.msk [vmem:[%s5 + $0x78] sm:$0xff] %vm3700, %v4340
        %v4349 = vld [vmem:[#allocation2 + $0x20] sm:$0xff]
        %v4350 = vld [vmem:[#allocation2 + $0x50] sm:$0xff]
        %v4351 = vld [vmem:[#allocation2 + $0x80] sm:$0xff]
        %v4352 = vld [vmem:[#allocation2 + $0xb0] sm:$0xff]
        %4357 = vrot.lane.b32.xlu0 %v4349, 89
        %v4358 = vpop.permute.xlu0 %4357
        %4359 = vrot.lane.b32.xlu0 %v4350, 89
        %v4360 = vpop.permute.xlu0 %4359
        %4361 = vrot.lane.b32.xlu0 %v4351, 89
        %v4362 = vpop.permute.xlu0 %4361
        %4363 = vrot.lane.b32.xlu0 %v4352, 89
        %v4364 = vpop.permute.xlu0 %4363
        %4369 = vst.msk [vmem:[%s5 + $0x18] sm:$0xff] %vm3725, %v4358
        %4370 = vst.msk [vmem:[%s5 + $0x38] sm:$0xff] %vm3725, %v4360
        %4371 = vst.msk [vmem:[%s5 + $0x58] sm:$0xff] %vm3725, %v4362
        %4372 = vst.msk [vmem:[%s5 + $0x78] sm:$0xff] %vm3725, %v4364
        %v4373 = vld [vmem:[#allocation2 + $0x20] sm:$0xff]
        %v4374 = vld [vmem:[#allocation2 + $0x50] sm:$0xff]
        %v4375 = vld [vmem:[#allocation2 + $0x80] sm:$0xff]
        %v4376 = vld [vmem:[#allocation2 + $0xb0] sm:$0xff]
        %4381 = vrot.lane.b32.xlu0 %v4373, 87
        %v4382 = vpop.permute.xlu0 %4381
        %4383 = vrot.lane.b32.xlu0 %v4374, 87
        %v4384 = vpop.permute.xlu0 %4383
        %4385 = vrot.lane.b32.xlu0 %v4375, 87
        %v4386 = vpop.permute.xlu0 %4385
        %4387 = vrot.lane.b32.xlu0 %v4376, 87
        %v4388 = vpop.permute.xlu0 %4387
        %4393 = vst.msk [vmem:[%s5 + $0x18] sm:$0xff] %vm3750, %v4382
        %4394 = vst.msk [vmem:[%s5 + $0x38] sm:$0xff] %vm3750, %v4384
        %4395 = vst.msk [vmem:[%s5 + $0x58] sm:$0xff] %vm3750, %v4386
        %4396 = vst.msk [vmem:[%s5 + $0x78] sm:$0xff] %vm3750, %v4388
        %v4397 = vld [vmem:[#allocation2 + $0x20] sm:$0xff]
        %v4398 = vld [vmem:[#allocation2 + $0x50] sm:$0xff]
        %v4399 = vld [vmem:[#allocation2 + $0x80] sm:$0xff]
        %v4400 = vld [vmem:[#allocation2 + $0xb0] sm:$0xff]
        %4405 = vrot.lane.b32.xlu0 %v4397, 85
        %v4406 = vpop.permute.xlu0 %4405
        %4407 = vrot.lane.b32.xlu0 %v4398, 85
        %v4408 = vpop.permute.xlu0 %4407
        %4409 = vrot.lane.b32.xlu0 %v4399, 85
        %v4410 = vpop.permute.xlu0 %4409
        %4411 = vrot.lane.b32.xlu0 %v4400, 85
        %v4412 = vpop.permute.xlu0 %4411
        %4417 = vst.msk [vmem:[%s5 + $0x18] sm:$0xff] %vm3775, %v4406
        %4418 = vst.msk [vmem:[%s5 + $0x38] sm:$0xff] %vm3775, %v4408
        %4419 = vst.msk [vmem:[%s5 + $0x58] sm:$0xff] %vm3775, %v4410
        %4420 = vst.msk [vmem:[%s5 + $0x78] sm:$0xff] %vm3775, %v4412
        %v4421 = vld [vmem:[#allocation2 + $0x20] sm:$0xff]
        %v4422 = vld [vmem:[#allocation2 + $0x28] sm:$0xff]
        %v4423 = vld [vmem:[#allocation2 + $0x50] sm:$0xff]
        %v4424 = vld [vmem:[#allocation2 + $0x58] sm:$0xff]
        %v4425 = vld [vmem:[#allocation2 + $0x80] sm:$0xff]
        %v4426 = vld [vmem:[#allocation2 + $0x88] sm:$0xff]
        %v4427 = vld [vmem:[#allocation2 + $0xb0] sm:$0xff]
        %v4428 = vld [vmem:[#allocation2 + $0xb8] sm:$0xff]
        %4437 = vrot.lane.b32.xlu0 %v4421, 83
        %v4438 = vpop.permute.xlu0 %4437
        %4439 = vrot.lane.b32.xlu0 %v4422, 83
        %v4440 = vpop.permute.xlu0 %4439
        %4441 = vrot.lane.b32.xlu0 %v4423, 83
        %v4442 = vpop.permute.xlu0 %4441
        %4443 = vrot.lane.b32.xlu0 %v4424, 83
        %v4444 = vpop.permute.xlu0 %4443
        %4445 = vrot.lane.b32.xlu0 %v4425, 83
        %v4446 = vpop.permute.xlu0 %4445
        %4447 = vrot.lane.b32.xlu0 %v4426, 83
        %v4448 = vpop.permute.xlu0 %4447
        %4449 = vrot.lane.b32.xlu0 %v4427, 83
        %v4450 = vpop.permute.xlu0 %4449
        %4451 = vrot.lane.b32.xlu0 %v4428, 83
        %v4452 = vpop.permute.xlu0 %4451
        %v4453 = vsel %vm4028, %v4438, %v4440
        %v4454 = vsel %vm4028, %v4442, %v4444
        %v4455 = vsel %vm4028, %v4446, %v4448
        %v4456 = vsel %vm4028, %v4450, %v4452
        %4461 = vst.msk [vmem:[%s5 + $0x18] sm:$0xff] %vm3800, %v4453
        %4462 = vst.msk [vmem:[%s5 + $0x38] sm:$0xff] %vm3800, %v4454
        %4463 = vst.msk [vmem:[%s5 + $0x58] sm:$0xff] %vm3800, %v4455
        %4464 = vst.msk [vmem:[%s5 + $0x78] sm:$0xff] %vm3800, %v4456
        %v4465 = vld [vmem:[#allocation2 + $0x28] sm:$0xff]
        %v4466 = vld [vmem:[#allocation2 + $0x58] sm:$0xff]
        %v4467 = vld [vmem:[#allocation2 + $0x88] sm:$0xff]
        %v4468 = vld [vmem:[#allocation2 + $0xb8] sm:$0xff]
        %4473 = vrot.lane.b32.xlu0 %v4465, 81
        %v4474 = vpop.permute.xlu0 %4473
        %4475 = vrot.lane.b32.xlu0 %v4466, 81
        %v4476 = vpop.permute.xlu0 %4475
        %4477 = vrot.lane.b32.xlu0 %v4467, 81
        %v4478 = vpop.permute.xlu0 %4477
        %4479 = vrot.lane.b32.xlu0 %v4468, 81
        %v4480 = vpop.permute.xlu0 %4479
        %4485 = vst.msk [vmem:[%s5 + $0x18] sm:$0xff] %vm3846, %v4474
        %4486 = vst.msk [vmem:[%s5 + $0x38] sm:$0xff] %vm3846, %v4476
        %4487 = vst.msk [vmem:[%s5 + $0x58] sm:$0xff] %vm3846, %v4478
        %4488 = vst.msk [vmem:[%s5 + $0x78] sm:$0xff] %vm3846, %v4480
        %v4489 = vld [vmem:[#allocation2 + $0x28] sm:$0xff]
        %v4490 = vld [vmem:[#allocation2 + $0x58] sm:$0xff]
        %v4491 = vld [vmem:[#allocation2 + $0x88] sm:$0xff]
        %v4492 = vld [vmem:[#allocation2 + $0xb8] sm:$0xff]
        %4497 = vrot.lane.b32.xlu0 %v4489, 79
        %v4498 = vpop.permute.xlu0 %4497
        %4499 = vrot.lane.b32.xlu0 %v4490, 79
        %v4500 = vpop.permute.xlu0 %4499
        %4501 = vrot.lane.b32.xlu0 %v4491, 79
        %v4502 = vpop.permute.xlu0 %4501
        %4503 = vrot.lane.b32.xlu0 %v4492, 79
        %v4504 = vpop.permute.xlu0 %4503
        %4509 = vst.msk [vmem:[%s5 + $0x18] sm:$0xff] %vm3871, %v4498
        %4510 = vst.msk [vmem:[%s5 + $0x38] sm:$0xff] %vm3871, %v4500
        %4511 = vst.msk [vmem:[%s5 + $0x58] sm:$0xff] %vm3871, %v4502
        %4512 = vst.msk [vmem:[%s5 + $0x78] sm:$0xff] %vm3871, %v4504
      $region60: #{forward.1} parent=39 // pred_fallthru
        _
      // Predicated region
      $region61: #{forward.1} parent=39 // pred_check
        %p4513 = pneg %p139
      $region62: #{forward.1} parent=39 // pred_check_branch
        %4515 = sbr.rel (%p4513) target = $region64
      $region63: #{forward.1} parent=39 // pred_region
        _
      $region64: #{forward.1} parent=39 // pred_fallthru
        _
      // Predicated region
      $region65: #{forward.1} parent=39 // pred_check
        %p4516 = pneg %p139
      $region66: #{forward.1} parent=39 // pred_check_branch
        %4518 = sbr.rel (%p4516) target = $region68
      $region67: #{forward.1} parent=39 // pred_region
        _
      $region68: #{forward.1} parent=39 // pred_fallthru
        _
    $region40: #{forward.1} parent=5 // pred_fallthru
      _
    %p4519 = scmp.le.s32.totalorder 2, %s11
    // Predicated region
    $region69: #{forward.1} parent=5 // pred_check
      %p4520 = pneg %p4519
    $region70: #{forward.1} parent=5 // pred_check_branch
      %4522 = sbr.rel (%p4520) target = $region72
    $region71: #{forward.1} parent=5 // pred_region
      %s4523 = ssub.s32 %s11, 2
    $region72: #{forward.1} parent=5 // pred_fallthru
      _
  $region6: #{forward.1} parent=0 // loop_footer
    %s15 = sadd.s32 1, %s11
  $region7: #{forward.1} parent=0 // loop_footer_branch
    %10 = sbr.rel target = $region3
  $region8: #{forward.1} parent=0 // loop_exit
    _

</llo_original>
